<compile_context>
chip_gen: v6e
topology: v6e:2x2x1
jax: 0.10.0
libtpu: 0.0.40
codegen_flags: <defaults>
</compile_context>

<pallas_src>
import functools
import numpy as np
import jax
import jax.numpy as jnp
from jax.experimental import pallas as pl
from jax.experimental.pallas import tpu as pltpu


# ----------------------------- Pallas kernel -------------------------------
def fused_encoder_kernel(x_ref, bias_ref,
                         wq_ref, wk_ref, wv_ref, wo_ref,
                         ln1g_ref, ln1b_ref,
                         w1_ref, b1_ref, w2_ref, b2_ref,
                         ln2g_ref, ln2b_ref,
                         out_ref, act_ref,
                         *, n_head, d_k, d_v, bt, L, E):
    layer = pl.program_id(1)

    # first layer for this batch tile: load activations into the VMEM carrier
    @pl.when(layer == 0)
    def _():
        act_ref[...] = x_ref[...].reshape(bt * L, E)

    x2d = act_ref[...]                                   # (bt*L, E) f32
    bias = bias_ref[...]                                 # (bt, 1, L) additive mask

    mm_dtype = wq_ref.dtype                              # bf16 on v6e/v7x at scale
    xm = x2d.astype(mm_dtype)

    # ---- multi-head self attention (per-head weight planes, no lane slicing)
    proj = jnp.zeros((bt * L, E), jnp.float32)
    for h in range(n_head):                              # static unroll over heads
        qh = jnp.dot(xm, wq_ref[0, h], preferred_element_type=jnp.float32)  # (M, dk) scale folded in
        kh = jnp.dot(xm, wk_ref[0, h], preferred_element_type=jnp.float32)  # (M, dk)
        vh = jnp.dot(xm, wv_ref[0, h], preferred_element_type=jnp.float32)  # (M, dv)
        q3 = qh.reshape(bt, L, d_k)
        k3 = kh.reshape(bt, L, d_k)
        v3 = vh.reshape(bt, L, d_v)
        # scores: contraction over d_k, batched over the batch tile
        # (transpose folded into the dot_general -- no explicit k.T)
        s = jnp.einsum('bqd,bkd->bqk', q3, k3,
                       preferred_element_type=jnp.float32)      # (bt, L, L)
        s = s + bias                                            # -1e9 on PAD keys
        m = jnp.max(s, axis=-1, keepdims=True)
        e = jnp.exp(s - m)
        p = e * pl.reciprocal(jnp.sum(e, axis=-1, keepdims=True), approx=True)
        o3 = jnp.einsum('bqk,bkd->bqd', p, v3,
                        preferred_element_type=jnp.float32)     # (bt, L, dv)
        # accumulate the output projection head-by-head (no concat / repack)
        proj = proj + jnp.dot(o3.reshape(bt * L, d_v).astype(mm_dtype),
                              wo_ref[0, h],
                              preferred_element_type=jnp.float32)

    y = proj + x2d                                       # residual
    mu = jnp.mean(y, axis=-1, keepdims=True)             # LayerNorm(eps=1e-6)
    var = jnp.mean((y - mu) ** 2, axis=-1, keepdims=True)
    y = (y - mu) * jax.lax.rsqrt(var + 1e-6) * ln1g_ref[0] + ln1b_ref[0]

    # ---- positionwise feed forward
    h1 = jnp.dot(y.astype(mm_dtype), w1_ref[0],
                 preferred_element_type=jnp.float32) + b1_ref[0]
    h1 = jnp.maximum(h1, 0.0)
    h2 = jnp.dot(h1.astype(mm_dtype), w2_ref[0],
                 preferred_element_type=jnp.float32) + b2_ref[0]
    z = h2 + y                                           # residual
    mu2 = jnp.mean(z, axis=-1, keepdims=True)
    var2 = jnp.mean((z - mu2) ** 2, axis=-1, keepdims=True)
    z = (z - mu2) * jax.lax.rsqrt(var2 + 1e-6) * ln2g_ref[0] + ln2b_ref[0]

    act_ref[...] = z                                     # carry to next layer

    @pl.when(layer == pl.num_programs(1) - 1)
    def _():
        out_ref[...] = z.reshape(bt, L, E)


# -------------------------- parameter preparation ---------------------------
def stack_layer_params(layers, *, n_head, d_k, d_v, matmul_dtype=jnp.float32):
    """Stack per-layer params with a leading layer axis; split heads into
    per-head weight planes; fold 1/sqrt(d_k) into Wq."""
    E = layers[0]["wq"].shape[0]
    scale = 1.0 / (d_k ** 0.5)

    def stk(fn):
        return jnp.stack([fn(p) for p in layers], axis=0)

    cast = lambda a: a.astype(matmul_dtype)
    return {
        "wq": stk(lambda p: cast((p["wq"] * scale)
                                 .reshape(E, n_head, d_k).transpose(1, 0, 2))),
        "wk": stk(lambda p: cast(p["wk"].reshape(E, n_head, d_k).transpose(1, 0, 2))),
        "wv": stk(lambda p: cast(p["wv"].reshape(E, n_head, d_v).transpose(1, 0, 2))),
        "wo": stk(lambda p: cast(p["wo"].reshape(n_head, d_v, E))),
        "ln1_g": stk(lambda p: p["ln1_g"]),
        "ln1_b": stk(lambda p: p["ln1_b"]),
        "w1": stk(lambda p: cast(p["w1"])),
        "b1": stk(lambda p: p["b1"]),
        "w2": stk(lambda p: cast(p["w2"])),
        "b2": stk(lambda p: p["b2"]),
        "ln2_g": stk(lambda p: p["ln2_g"]),
        "ln2_b": stk(lambda p: p["ln2_b"]),
    }


# ------------------------------- wrapper ------------------------------------
def transformer_encoder_pallas(tokens, emb_table, pos_table, stacked,
                               *, n_head, d_k, d_v, batch_tile=None):
    B, L = tokens.shape
    E = emb_table.shape[1]
    n_layers = stacked["wq"].shape[0]
    bt = B if batch_tile is None else batch_tile
    assert B % bt == 0

    # embedding gather + positional encoding: glue outside the kernel
    x = (emb_table[tokens] + pos_table[None, :L, :]).astype(jnp.float32)
    # additive attention-mask bias: 0 for real tokens, -1e9 for PAD (id 0)
    bias = jnp.where(tokens != 0, 0.0, -1e9).astype(jnp.float32).reshape(B, 1, L)

    kernel = functools.partial(fused_encoder_kernel,
                               n_head=n_head, d_k=d_k, d_v=d_v,
                               bt=bt, L=L, E=E)

    def wspec(arr):
        zeros = (0,) * (arr.ndim - 1)
        return pl.BlockSpec((1,) + tuple(arr.shape[1:]),
                            lambda i, l, _z=zeros: (l,) + _z)

    grid = (B // bt, n_layers)
    # TODO(synk): at realistic sizes (large E/d_hidden) tile the FFN over
    # d_hidden (extra grid axis + accumulator) or set pipeline_mode=
    # pl.Buffered(1) on the weight specs and raise vmem_limit_bytes so the
    # double-buffered full-weight blocks fit v7x's 64 MiB VMEM; at E<128,
    # a lane-dense (flattened) out layout would also help the store path.
    return pl.pallas_call(
        kernel,
        out_shape=jax.ShapeDtypeStruct((B, L, E), jnp.float32),
        grid=grid,
        in_specs=[
            pl.BlockSpec((bt, L, E), lambda i, l: (i, 0, 0)),   # activations in
            pl.BlockSpec((bt, 1, L), lambda i, l: (i, 0, 0)),   # additive mask bias
            wspec(stacked["wq"]), wspec(stacked["wk"]),
            wspec(stacked["wv"]), wspec(stacked["wo"]),
            wspec(stacked["ln1_g"]), wspec(stacked["ln1_b"]),
            wspec(stacked["w1"]), wspec(stacked["b1"]),
            wspec(stacked["w2"]), wspec(stacked["b2"]),
            wspec(stacked["ln2_g"]), wspec(stacked["ln2_b"]),
        ],
        out_specs=pl.BlockSpec((bt, L, E), lambda i, l: (i, 0, 0)),
        scratch_shapes=[pltpu.VMEM((bt * L, E), jnp.float32)],   # layer-to-layer carry
        compiler_params=pltpu.CompilerParams(
            dimension_semantics=("parallel", "arbitrary")),
    )(x, bias,
      stacked["wq"], stacked["wk"], stacked["wv"], stacked["wo"],
      stacked["ln1_g"], stacked["ln1_b"],
      stacked["w1"], stacked["b1"], stacked["w2"], stacked["b2"],
      stacked["ln2_g"], stacked["ln2_b"])


# ------------------------------- glue (JAX) --------------------------------
def sinusoid_table(n_position, d_hid):
    pos = np.arange(n_position)[:, None].astype(np.float64)
    div = np.power(10000.0, 2.0 * (np.arange(d_hid) // 2) / d_hid)
    table = pos / div
    table[:, 0::2] = np.sin(table[:, 0::2])
    table[:, 1::2] = np.cos(table[:, 1::2])
    return jnp.asarray(table, dtype=jnp.float32)


def init_layer_params(key, E, n_head, d_k, d_v, d_hidden):
    ks = jax.random.split(key, 6)
    s = 0.02
    return {
        "wq": s * jax.random.normal(ks[0], (E, n_head * d_k), jnp.float32),
        "wk": s * jax.random.normal(ks[1], (E, n_head * d_k), jnp.float32),
        "wv": s * jax.random.normal(ks[2], (E, n_head * d_v), jnp.float32),
        "wo": s * jax.random.normal(ks[3], (n_head * d_v, E), jnp.float32),
        "ln1_g": jnp.ones((1, E), jnp.float32),
        "ln1_b": jnp.zeros((1, E), jnp.float32),
        "w1": s * jax.random.normal(ks[4], (E, d_hidden), jnp.float32),
        "b1": jnp.zeros((1, d_hidden), jnp.float32),
        "w2": s * jax.random.normal(ks[5], (d_hidden, E), jnp.float32),
        "b2": jnp.zeros((1, E), jnp.float32),
        "ln2_g": jnp.ones((1, E), jnp.float32),
        "ln2_b": jnp.zeros((1, E), jnp.float32),
    }


# ----------------------- pure-JAX reference (check) -------------------------
def ref_layer(x, mask, p, n_head, d_k, d_v):
    B, L, E = x.shape
    q = (x @ p["wq"]).reshape(B, L, n_head, d_k).transpose(0, 2, 1, 3)
    k = (x @ p["wk"]).reshape(B, L, n_head, d_k).transpose(0, 2, 1, 3)
    v = (x @ p["wv"]).reshape(B, L, n_head, d_v).transpose(0, 2, 1, 3)
    s = jnp.einsum("bhqd,bhkd->bhqk", q, k) / (d_k ** 0.5)
    s = jnp.where(mask[:, None, :, :] > 0.0, s, -1e9)
    a = jax.nn.softmax(s, axis=-1)
    o = jnp.einsum("bhqk,bhkd->bhqd", a, v).transpose(0, 2, 1, 3).reshape(B, L, -1)
    y = o @ p["wo"] + x
    mu = y.mean(-1, keepdims=True)
    var = ((y - mu) ** 2).mean(-1, keepdims=True)
    y = (y - mu) * jax.lax.rsqrt(var + 1e-6) * p["ln1_g"] + p["ln1_b"]
    h = jnp.maximum(y @ p["w1"] + p["b1"], 0.0)
    z = h @ p["w2"] + p["b2"] + y
    mu2 = z.mean(-1, keepdims=True)
    var2 = ((z - mu2) ** 2).mean(-1, keepdims=True)
    return (z - mu2) * jax.lax.rsqrt(var2 + 1e-6) * p["ln2_g"] + p["ln2_b"]


def ref_encoder(tokens, emb_table, pos_table, layers, *, n_head, d_k, d_v):
    B, L = tokens.shape
    mask = (tokens != 0).astype(jnp.float32).reshape(B, 1, L)
    x = emb_table[tokens] + pos_table[None, :L, :]
    for p in layers:
        x = ref_layer(x, mask, p, n_head, d_k, d_v)
    return x


# --------------------------------- main -------------------------------------
if __name__ == "__main__":
    # config
    B, L = 2, 8
    E, n_head, d_k, d_v, d_hidden, n_layers = 32, 4, 8, 8, 64, 2
    vocab, MAX_LENGTH = 50, 16

    key = jax.random.PRNGKey(0)
    k_emb, k_tok, *k_layers = jax.random.split(key, 2 + n_layers)

    emb_table = 0.1 * jax.random.normal(k_emb, (vocab, E), jnp.float32)
    pos_table = sinusoid_table(MAX_LENGTH, E)
    layers = [init_layer_params(k_layers[i], E, n_head, d_k, d_v, d_hidden)
              for i in range(n_layers)]

    tokens = jax.random.randint(k_tok, (B, L), 1, vocab, dtype=jnp.int32)
    tokens = tokens.at[1, 5:].set(0)   # pad tail of second sequence (PAD id 0)

    # f32 operands here for the tight numerical check; pass
    # matmul_dtype=jnp.bfloat16 on v6e/v7x at realistic sizes.
    stacked = stack_layer_params(layers, n_head=n_head, d_k=d_k, d_v=d_v,
                                 matmul_dtype=jnp.float32)

    out = transformer_encoder_pallas(tokens, emb_table, pos_table, stacked,
                                     n_head=n_head, d_k=d_k, d_v=d_v)
    out = jax.block_until_ready(out)

    ref = ref_encoder(tokens, emb_table, pos_table, layers,
                      n_head=n_head, d_k=d_k, d_v=d_v)
    np.testing.assert_allclose(np.asarray(out), np.asarray(ref),
                               rtol=5e-3, atol=5e-3)

    # TODO(synk): dropout layers are treated as identity (inference / eval mode).
    print("KERNEL_OK")
</pallas_src>

<mosaic_0001>
module attributes {stable_mosaic.version = 11 : i64} {
  func.func @fused_encoder_kernel(%arg0: i32, %arg1: i32, %arg2: memref<2x8x32xf32, #tpu.memory_space<vmem>>, %arg3: memref<2x1x8xf32, #tpu.memory_space<vmem>>, %arg4: memref<1x4x32x8xf32, #tpu.memory_space<vmem>>, %arg5: memref<1x4x32x8xf32, #tpu.memory_space<vmem>>, %arg6: memref<1x4x32x8xf32, #tpu.memory_space<vmem>>, %arg7: memref<1x4x8x32xf32, #tpu.memory_space<vmem>>, %arg8: memref<1x1x32xf32, #tpu.memory_space<vmem>>, %arg9: memref<1x1x32xf32, #tpu.memory_space<vmem>>, %arg10: memref<1x32x64xf32, #tpu.memory_space<vmem>>, %arg11: memref<1x1x64xf32, #tpu.memory_space<vmem>>, %arg12: memref<1x64x32xf32, #tpu.memory_space<vmem>>, %arg13: memref<1x1x32xf32, #tpu.memory_space<vmem>>, %arg14: memref<1x1x32xf32, #tpu.memory_space<vmem>>, %arg15: memref<1x1x32xf32, #tpu.memory_space<vmem>>, %arg16: memref<2x8x32xf32, #tpu.memory_space<vmem>>, %arg17: memref<16x32xf32, #tpu.memory_space<vmem>>) attributes {dimension_semantics = [#tpu.dimension_semantics<parallel>, #tpu.dimension_semantics<arbitrary>], iteration_bounds = array<i64: 1, 2>, scalar_prefetch = 0 : i64, scratch_operands = 1 : i64, tpu.core_type = #tpu.core_type<tc>, window_params = [{transform_indices = @transform_0, window_bounds = array<i64: 2, 8, 32>}, {transform_indices = @transform_1, window_bounds = array<i64: 2, 1, 8>}, {transform_indices = @transform_2, window_bounds = array<i64: 1, 4, 32, 8>}, {transform_indices = @transform_3, window_bounds = array<i64: 1, 4, 32, 8>}, {transform_indices = @transform_4, window_bounds = array<i64: 1, 4, 32, 8>}, {transform_indices = @transform_5, window_bounds = array<i64: 1, 4, 8, 32>}, {transform_indices = @transform_6, window_bounds = array<i64: 1, 1, 32>}, {transform_indices = @transform_7, window_bounds = array<i64: 1, 1, 32>}, {transform_indices = @transform_8, window_bounds = array<i64: 1, 32, 64>}, {transform_indices = @transform_9, window_bounds = array<i64: 1, 1, 64>}, {transform_indices = @transform_10, window_bounds = array<i64: 1, 64, 32>}, {transform_indices = @transform_11, window_bounds = array<i64: 1, 1, 32>}, {transform_indices = @transform_12, window_bounds = array<i64: 1, 1, 32>}, {transform_indices = @transform_13, window_bounds = array<i64: 1, 1, 32>}, {transform_indices = @transform_14, window_bounds = array<i64: 2, 8, 32>}]} {
    %c0_i32 = arith.constant 0 : i32
    %0 = arith.cmpi eq, %arg1, %c0_i32 : i32
    %1 = arith.extui %0 : i1 to i32
    %c0_i32_0 = arith.constant 0 : i32
    %2 = arith.cmpi ne, %1, %c0_i32_0 : i32
    scf.if %2 {
      %c0_138 = arith.constant 0 : index
      %c0_139 = arith.constant 0 : index
      %c0_140 = arith.constant 0 : index
      %204 = vector.load %arg2[%c0_138, %c0_139, %c0_140] : memref<2x8x32xf32, #tpu.memory_space<vmem>>, vector<2x8x32xf32>
      %205 = vector.shape_cast %204 : vector<2x8x32xf32> to vector<16x32xf32>
      %c0_141 = arith.constant 0 : index
      %c0_142 = arith.constant 0 : index
      %206 = vector.load %arg17[%c0_141, %c0_142] : memref<16x32xf32, #tpu.memory_space<vmem>>, vector<16x32xf32>
      tpu.vector_store %arg17[%c0_141, %c0_142], %205 {strides = array<i32>} : memref<16x32xf32, #tpu.memory_space<vmem>>, vector<16x32xf32>,
    } else {
    }
    %c0 = arith.constant 0 : index
    %c0_1 = arith.constant 0 : index
    %3 = vector.load %arg17[%c0, %c0_1] : memref<16x32xf32, #tpu.memory_space<vmem>>, vector<16x32xf32>
    %c0_2 = arith.constant 0 : index
    %c0_3 = arith.constant 0 : index
    %c0_4 = arith.constant 0 : index
    %4 = vector.load %arg3[%c0_2, %c0_3, %c0_4] : memref<2x1x8xf32, #tpu.memory_space<vmem>>, vector<2x1x8xf32>
    %cst = arith.constant 0.000000e+00 : f32
    %5 = vector.broadcast %cst : f32 to vector<16x32xf32>
    %c0_5 = arith.constant 0 : index
    %c0_6 = arith.constant 0 : index
    %c0_7 = arith.constant 0 : index
    %c0_8 = arith.constant 0 : index
    %6 = vector.load %arg4[%c0_5, %c0_6, %c0_7, %c0_8] : memref<1x4x32x8xf32, #tpu.memory_space<vmem>>, vector<1x1x32x8xf32>
    %7 = vector.shape_cast %6 : vector<1x1x32x8xf32> to vector<32x8xf32>
    %cst_9 = arith.constant dense<0.000000e+00> : vector<16x8xf32>
    %8 = tpu.matmul %3, %7, %cst_9 {dimension_numbers = #tpu.dot_dimension_numbers<[1], [0], [0], [1], [0, 0, 1, 1], [], []>} : vector<16x32xf32>, vector<32x8xf32>, vector<16x8xf32> -> vector<16x8xf32>
    %c0_10 = arith.constant 0 : index
    %c0_11 = arith.constant 0 : index
    %c0_12 = arith.constant 0 : index
    %c0_13 = arith.constant 0 : index
    %9 = vector.load %arg5[%c0_10, %c0_11, %c0_12, %c0_13] : memref<1x4x32x8xf32, #tpu.memory_space<vmem>>, vector<1x1x32x8xf32>
    %10 = vector.shape_cast %9 : vector<1x1x32x8xf32> to vector<32x8xf32>
    %cst_14 = arith.constant dense<0.000000e+00> : vector<16x8xf32>
    %11 = tpu.matmul %3, %10, %cst_14 {dimension_numbers = #tpu.dot_dimension_numbers<[1], [0], [0], [1], [0, 0, 1, 1], [], []>} : vector<16x32xf32>, vector<32x8xf32>, vector<16x8xf32> -> vector<16x8xf32>
    %c0_15 = arith.constant 0 : index
    %c0_16 = arith.constant 0 : index
    %c0_17 = arith.constant 0 : index
    %c0_18 = arith.constant 0 : index
    %12 = vector.load %arg6[%c0_15, %c0_16, %c0_17, %c0_18] : memref<1x4x32x8xf32, #tpu.memory_space<vmem>>, vector<1x1x32x8xf32>
    %13 = vector.shape_cast %12 : vector<1x1x32x8xf32> to vector<32x8xf32>
    %cst_19 = arith.constant dense<0.000000e+00> : vector<16x8xf32>
    %14 = tpu.matmul %3, %13, %cst_19 {dimension_numbers = #tpu.dot_dimension_numbers<[1], [0], [0], [1], [0, 0, 1, 1], [], []>} : vector<16x32xf32>, vector<32x8xf32>, vector<16x8xf32> -> vector<16x8xf32>
    %15 = vector.shape_cast %8 : vector<16x8xf32> to vector<2x8x8xf32>
    %16 = vector.shape_cast %11 : vector<16x8xf32> to vector<2x8x8xf32>
    %17 = vector.shape_cast %14 : vector<16x8xf32> to vector<2x8x8xf32>
    "tpu.trace_start"() <{level = 10 : i32, message = "bqd,bkd->bqk"}> : () -> ()
    %cst_20 = arith.constant dense<0.000000e+00> : vector<2x8x8xf32>
    %18 = tpu.matmul %15, %16, %cst_20 {dimension_numbers = #tpu.dot_dimension_numbers<[2], [2], [1], [1], [0, 0, 0, 1, 1, 1], [0], [0]>} : vector<2x8x8xf32>, vector<2x8x8xf32>, vector<2x8x8xf32> -> vector<2x8x8xf32>
    "tpu.trace_stop"() : () -> ()
    %19 = vector.broadcast %4 : vector<2x1x8xf32> to vector<2x8x8xf32>
    %20 = arith.addf %18, %19 : vector<2x8x8xf32>
    %cst_21 = arith.constant dense<0xFF800000> : vector<2x8xf32>
    %21 = vector.multi_reduction <maximumf>, %20, %cst_21 [2] : vector<2x8x8xf32> to vector<2x8xf32>
    %22 = vector.shape_cast %21 : vector<2x8xf32> to vector<2x8x1xf32>
    %23 = vector.broadcast %22 : vector<2x8x1xf32> to vector<2x8x8xf32>
    %24 = arith.subf %20, %23 : vector<2x8x8xf32>
    %25 = math.exp %24 : vector<2x8x8xf32>
    %cst_22 = arith.constant dense<0.000000e+00> : vector<2x8xf32>
    %26 = vector.multi_reduction <add>, %25, %cst_22 [2] : vector<2x8x8xf32> to vector<2x8xf32>
    %27 = vector.shape_cast %26 : vector<2x8xf32> to vector<2x8x1xf32>
    %28 = tpu.reciprocal %27 {approx = true} : vector<2x8x1xf32> -> vector<2x8x1xf32>
    %29 = vector.broadcast %28 : vector<2x8x1xf32> to vector<2x8x8xf32>
    %30 = arith.mulf %25, %29 : vector<2x8x8xf32>
    "tpu.trace_start"() <{level = 10 : i32, message = "bqk,bkd->bqd"}> : () -> ()
    %cst_23 = arith.constant dense<0.000000e+00> : vector<2x8x8xf32>
    %31 = tpu.matmul %30, %17, %cst_23 {dimension_numbers = #tpu.dot_dimension_numbers<[2], [1], [1], [2], [0, 0, 0, 1, 1, 2], [0], [0]>} : vector<2x8x8xf32>, vector<2x8x8xf32>, vector<2x8x8xf32> -> vector<2x8x8xf32>
    "tpu.trace_stop"() : () -> ()
    %32 = vector.shape_cast %31 : vector<2x8x8xf32> to vector<16x8xf32>
    %c0_24 = arith.constant 0 : index
    %c0_25 = arith.constant 0 : index
    %c0_26 = arith.constant 0 : index
    %c0_27 = arith.constant 0 : index
    %33 = vector.load %arg7[%c0_24, %c0_25, %c0_26, %c0_27] : memref<1x4x8x32xf32, #tpu.memory_space<vmem>>, vector<1x1x8x32xf32>
    %34 = vector.shape_cast %33 : vector<1x1x8x32xf32> to vector<8x32xf32>
    %cst_28 = arith.constant dense<0.000000e+00> : vector<16x32xf32>
    %35 = tpu.matmul %32, %34, %cst_28 {dimension_numbers = #tpu.dot_dimension_numbers<[1], [0], [0], [1], [0, 0, 1, 1], [], []>} : vector<16x8xf32>, vector<8x32xf32>, vector<16x32xf32> -> vector<16x32xf32>
    %36 = arith.addf %5, %35 : vector<16x32xf32>
    %c0_29 = arith.constant 0 : index
    %c1 = arith.constant 1 : index
    %c0_30 = arith.constant 0 : index
    %c0_31 = arith.constant 0 : index
    %37 = vector.load %arg4[%c0_29, %c1, %c0_30, %c0_31] : memref<1x4x32x8xf32, #tpu.memory_space<vmem>>, vector<1x1x32x8xf32>
    %38 = vector.shape_cast %37 : vector<1x1x32x8xf32> to vector<32x8xf32>
    %cst_32 = arith.constant dense<0.000000e+00> : vector<16x8xf32>
    %39 = tpu.matmul %3, %38, %cst_32 {dimension_numbers = #tpu.dot_dimension_numbers<[1], [0], [0], [1], [0, 0, 1, 1], [], []>} : vector<16x32xf32>, vector<32x8xf32>, vector<16x8xf32> -> vector<16x8xf32>
    %c0_33 = arith.constant 0 : index
    %c1_34 = arith.constant 1 : index
    %c0_35 = arith.constant 0 : index
    %c0_36 = arith.constant 0 : index
    %40 = vector.load %arg5[%c0_33, %c1_34, %c0_35, %c0_36] : memref<1x4x32x8xf32, #tpu.memory_space<vmem>>, vector<1x1x32x8xf32>
    %41 = vector.shape_cast %40 : vector<1x1x32x8xf32> to vector<32x8xf32>
    %cst_37 = arith.constant dense<0.000000e+00> : vector<16x8xf32>
    %42 = tpu.matmul %3, %41, %cst_37 {dimension_numbers = #tpu.dot_dimension_numbers<[1], [0], [0], [1], [0, 0, 1, 1], [], []>} : vector<16x32xf32>, vector<32x8xf32>, vector<16x8xf32> -> vector<16x8xf32>
    %c0_38 = arith.constant 0 : index
    %c1_39 = arith.constant 1 : index
    %c0_40 = arith.constant 0 : index
    %c0_41 = arith.constant 0 : index
    %43 = vector.load %arg6[%c0_38, %c1_39, %c0_40, %c0_41] : memref<1x4x32x8xf32, #tpu.memory_space<vmem>>, vector<1x1x32x8xf32>
    %44 = vector.shape_cast %43 : vector<1x1x32x8xf32> to vector<32x8xf32>
    %cst_42 = arith.constant dense<0.000000e+00> : vector<16x8xf32>
    %45 = tpu.matmul %3, %44, %cst_42 {dimension_numbers = #tpu.dot_dimension_numbers<[1], [0], [0], [1], [0, 0, 1, 1], [], []>} : vector<16x32xf32>, vector<32x8xf32>, vector<16x8xf32> -> vector<16x8xf32>
    %46 = vector.shape_cast %39 : vector<16x8xf32> to vector<2x8x8xf32>
    %47 = vector.shape_cast %42 : vector<16x8xf32> to vector<2x8x8xf32>
    %48 = vector.shape_cast %45 : vector<16x8xf32> to vector<2x8x8xf32>
    "tpu.trace_start"() <{level = 10 : i32, message = "bqd,bkd->bqk"}> : () -> ()
    %cst_43 = arith.constant dense<0.000000e+00> : vector<2x8x8xf32>
    %49 = tpu.matmul %46, %47, %cst_43 {dimension_numbers = #tpu.dot_dimension_numbers<[2], [2], [1], [1], [0, 0, 0, 1, 1, 1], [0], [0]>} : vector<2x8x8xf32>, vector<2x8x8xf32>, vector<2x8x8xf32> -> vector<2x8x8xf32>
    "tpu.trace_stop"() : () -> ()
    %50 = vector.broadcast %4 : vector<2x1x8xf32> to vector<2x8x8xf32>
    %51 = arith.addf %49, %50 : vector<2x8x8xf32>
    %cst_44 = arith.constant dense<0xFF800000> : vector<2x8xf32>
    %52 = vector.multi_reduction <maximumf>, %51, %cst_44 [2] : vector<2x8x8xf32> to vector<2x8xf32>
    %53 = vector.shape_cast %52 : vector<2x8xf32> to vector<2x8x1xf32>
    %54 = vector.broadcast %53 : vector<2x8x1xf32> to vector<2x8x8xf32>
    %55 = arith.subf %51, %54 : vector<2x8x8xf32>
    %56 = math.exp %55 : vector<2x8x8xf32>
    %cst_45 = arith.constant dense<0.000000e+00> : vector<2x8xf32>
    %57 = vector.multi_reduction <add>, %56, %cst_45 [2] : vector<2x8x8xf32> to vector<2x8xf32>
    %58 = vector.shape_cast %57 : vector<2x8xf32> to vector<2x8x1xf32>
    %59 = tpu.reciprocal %58 {approx = true} : vector<2x8x1xf32> -> vector<2x8x1xf32>
    %60 = vector.broadcast %59 : vector<2x8x1xf32> to vector<2x8x8xf32>
    %61 = arith.mulf %56, %60 : vector<2x8x8xf32>
    "tpu.trace_start"() <{level = 10 : i32, message = "bqk,bkd->bqd"}> : () -> ()
    %cst_46 = arith.constant dense<0.000000e+00> : vector<2x8x8xf32>
    %62 = tpu.matmul %61, %48, %cst_46 {dimension_numbers = #tpu.dot_dimension_numbers<[2], [1], [1], [2], [0, 0, 0, 1, 1, 2], [0], [0]>} : vector<2x8x8xf32>, vector<2x8x8xf32>, vector<2x8x8xf32> -> vector<2x8x8xf32>
    "tpu.trace_stop"() : () -> ()
    %63 = vector.shape_cast %62 : vector<2x8x8xf32> to vector<16x8xf32>
    %c0_47 = arith.constant 0 : index
    %c1_48 = arith.constant 1 : index
    %c0_49 = arith.constant 0 : index
    %c0_50 = arith.constant 0 : index
    %64 = vector.load %arg7[%c0_47, %c1_48, %c0_49, %c0_50] : memref<1x4x8x32xf32, #tpu.memory_space<vmem>>, vector<1x1x8x32xf32>
    %65 = vector.shape_cast %64 : vector<1x1x8x32xf32> to vector<8x32xf32>
    %cst_51 = arith.constant dense<0.000000e+00> : vector<16x32xf32>
    %66 = tpu.matmul %63, %65, %cst_51 {dimension_numbers = #tpu.dot_dimension_numbers<[1], [0], [0], [1], [0, 0, 1, 1], [], []>} : vector<16x8xf32>, vector<8x32xf32>, vector<16x32xf32> -> vector<16x32xf32>
    %67 = arith.addf %36, %66 : vector<16x32xf32>
    %c0_52 = arith.constant 0 : index
    %c2 = arith.constant 2 : index
    %c0_53 = arith.constant 0 : index
    %c0_54 = arith.constant 0 : index
    %68 = vector.load %arg4[%c0_52, %c2, %c0_53, %c0_54] : memref<1x4x32x8xf32, #tpu.memory_space<vmem>>, vector<1x1x32x8xf32>
    %69 = vector.shape_cast %68 : vector<1x1x32x8xf32> to vector<32x8xf32>
    %cst_55 = arith.constant dense<0.000000e+00> : vector<16x8xf32>
    %70 = tpu.matmul %3, %69, %cst_55 {dimension_numbers = #tpu.dot_dimension_numbers<[1], [0], [0], [1], [0, 0, 1, 1], [], []>} : vector<16x32xf32>, vector<32x8xf32>, vector<16x8xf32> -> vector<16x8xf32>
    %c0_56 = arith.constant 0 : index
    %c2_57 = arith.constant 2 : index
    %c0_58 = arith.constant 0 : index
    %c0_59 = arith.constant 0 : index
    %71 = vector.load %arg5[%c0_56, %c2_57, %c0_58, %c0_59] : memref<1x4x32x8xf32, #tpu.memory_space<vmem>>, vector<1x1x32x8xf32>
    %72 = vector.shape_cast %71 : vector<1x1x32x8xf32> to vector<32x8xf32>
    %cst_60 = arith.constant dense<0.000000e+00> : vector<16x8xf32>
    %73 = tpu.matmul %3, %72, %cst_60 {dimension_numbers = #tpu.dot_dimension_numbers<[1], [0], [0], [1], [0, 0, 1, 1], [], []>} : vector<16x32xf32>, vector<32x8xf32>, vector<16x8xf32> -> vector<16x8xf32>
    %c0_61 = arith.constant 0 : index
    %c2_62 = arith.constant 2 : index
    %c0_63 = arith.constant 0 : index
    %c0_64 = arith.constant 0 : index
    %74 = vector.load %arg6[%c0_61, %c2_62, %c0_63, %c0_64] : memref<1x4x32x8xf32, #tpu.memory_space<vmem>>, vector<1x1x32x8xf32>
    %75 = vector.shape_cast %74 : vector<1x1x32x8xf32> to vector<32x8xf32>
    %cst_65 = arith.constant dense<0.000000e+00> : vector<16x8xf32>
    %76 = tpu.matmul %3, %75, %cst_65 {dimension_numbers = #tpu.dot_dimension_numbers<[1], [0], [0], [1], [0, 0, 1, 1], [], []>} : vector<16x32xf32>, vector<32x8xf32>, vector<16x8xf32> -> vector<16x8xf32>
    %77 = vector.shape_cast %70 : vector<16x8xf32> to vector<2x8x8xf32>
    %78 = vector.shape_cast %73 : vector<16x8xf32> to vector<2x8x8xf32>
    %79 = vector.shape_cast %76 : vector<16x8xf32> to vector<2x8x8xf32>
    "tpu.trace_start"() <{level = 10 : i32, message = "bqd,bkd->bqk"}> : () -> ()
    %cst_66 = arith.constant dense<0.000000e+00> : vector<2x8x8xf32>
    %80 = tpu.matmul %77, %78, %cst_66 {dimension_numbers = #tpu.dot_dimension_numbers<[2], [2], [1], [1], [0, 0, 0, 1, 1, 1], [0], [0]>} : vector<2x8x8xf32>, vector<2x8x8xf32>, vector<2x8x8xf32> -> vector<2x8x8xf32>
    "tpu.trace_stop"() : () -> ()
    %81 = vector.broadcast %4 : vector<2x1x8xf32> to vector<2x8x8xf32>
    %82 = arith.addf %80, %81 : vector<2x8x8xf32>
    %cst_67 = arith.constant dense<0xFF800000> : vector<2x8xf32>
    %83 = vector.multi_reduction <maximumf>, %82, %cst_67 [2] : vector<2x8x8xf32> to vector<2x8xf32>
    %84 = vector.shape_cast %83 : vector<2x8xf32> to vector<2x8x1xf32>
    %85 = vector.broadcast %84 : vector<2x8x1xf32> to vector<2x8x8xf32>
    %86 = arith.subf %82, %85 : vector<2x8x8xf32>
    %87 = math.exp %86 : vector<2x8x8xf32>
    %cst_68 = arith.constant dense<0.000000e+00> : vector<2x8xf32>
    %88 = vector.multi_reduction <add>, %87, %cst_68 [2] : vector<2x8x8xf32> to vector<2x8xf32>
    %89 = vector.shape_cast %88 : vector<2x8xf32> to vector<2x8x1xf32>
    %90 = tpu.reciprocal %89 {approx = true} : vector<2x8x1xf32> -> vector<2x8x1xf32>
    %91 = vector.broadcast %90 : vector<2x8x1xf32> to vector<2x8x8xf32>
    %92 = arith.mulf %87, %91 : vector<2x8x8xf32>
    "tpu.trace_start"() <{level = 10 : i32, message = "bqk,bkd->bqd"}> : () -> ()
    %cst_69 = arith.constant dense<0.000000e+00> : vector<2x8x8xf32>
    %93 = tpu.matmul %92, %79, %cst_69 {dimension_numbers = #tpu.dot_dimension_numbers<[2], [1], [1], [2], [0, 0, 0, 1, 1, 2], [0], [0]>} : vector<2x8x8xf32>, vector<2x8x8xf32>, vector<2x8x8xf32> -> vector<2x8x8xf32>
    "tpu.trace_stop"() : () -> ()
    %94 = vector.shape_cast %93 : vector<2x8x8xf32> to vector<16x8xf32>
    %c0_70 = arith.constant 0 : index
    %c2_71 = arith.constant 2 : index
    %c0_72 = arith.constant 0 : index
    %c0_73 = arith.constant 0 : index
    %95 = vector.load %arg7[%c0_70, %c2_71, %c0_72, %c0_73] : memref<1x4x8x32xf32, #tpu.memory_space<vmem>>, vector<1x1x8x32xf32>
    %96 = vector.shape_cast %95 : vector<1x1x8x32xf32> to vector<8x32xf32>
    %cst_74 = arith.constant dense<0.000000e+00> : vector<16x32xf32>
    %97 = tpu.matmul %94, %96, %cst_74 {dimension_numbers = #tpu.dot_dimension_numbers<[1], [0], [0], [1], [0, 0, 1, 1], [], []>} : vector<16x8xf32>, vector<8x32xf32>, vector<16x32xf32> -> vector<16x32xf32>
    %98 = arith.addf %67, %97 : vector<16x32xf32>
    %c0_75 = arith.constant 0 : index
    %c3 = arith.constant 3 : index
    %c0_76 = arith.constant 0 : index
    %c0_77 = arith.constant 0 : index
    %99 = vector.load %arg4[%c0_75, %c3, %c0_76, %c0_77] : memref<1x4x32x8xf32, #tpu.memory_space<vmem>>, vector<1x1x32x8xf32>
    %100 = vector.shape_cast %99 : vector<1x1x32x8xf32> to vector<32x8xf32>
    %cst_78 = arith.constant dense<0.000000e+00> : vector<16x8xf32>
    %101 = tpu.matmul %3, %100, %cst_78 {dimension_numbers = #tpu.dot_dimension_numbers<[1], [0], [0], [1], [0, 0, 1, 1], [], []>} : vector<16x32xf32>, vector<32x8xf32>, vector<16x8xf32> -> vector<16x8xf32>
    %c0_79 = arith.constant 0 : index
    %c3_80 = arith.constant 3 : index
    %c0_81 = arith.constant 0 : index
    %c0_82 = arith.constant 0 : index
    %102 = vector.load %arg5[%c0_79, %c3_80, %c0_81, %c0_82] : memref<1x4x32x8xf32, #tpu.memory_space<vmem>>, vector<1x1x32x8xf32>
    %103 = vector.shape_cast %102 : vector<1x1x32x8xf32> to vector<32x8xf32>
    %cst_83 = arith.constant dense<0.000000e+00> : vector<16x8xf32>
    %104 = tpu.matmul %3, %103, %cst_83 {dimension_numbers = #tpu.dot_dimension_numbers<[1], [0], [0], [1], [0, 0, 1, 1], [], []>} : vector<16x32xf32>, vector<32x8xf32>, vector<16x8xf32> -> vector<16x8xf32>
    %c0_84 = arith.constant 0 : index
    %c3_85 = arith.constant 3 : index
    %c0_86 = arith.constant 0 : index
    %c0_87 = arith.constant 0 : index
    %105 = vector.load %arg6[%c0_84, %c3_85, %c0_86, %c0_87] : memref<1x4x32x8xf32, #tpu.memory_space<vmem>>, vector<1x1x32x8xf32>
    %106 = vector.shape_cast %105 : vector<1x1x32x8xf32> to vector<32x8xf32>
    %cst_88 = arith.constant dense<0.000000e+00> : vector<16x8xf32>
    %107 = tpu.matmul %3, %106, %cst_88 {dimension_numbers = #tpu.dot_dimension_numbers<[1], [0], [0], [1], [0, 0, 1, 1], [], []>} : vector<16x32xf32>, vector<32x8xf32>, vector<16x8xf32> -> vector<16x8xf32>
    %108 = vector.shape_cast %101 : vector<16x8xf32> to vector<2x8x8xf32>
    %109 = vector.shape_cast %104 : vector<16x8xf32> to vector<2x8x8xf32>
    %110 = vector.shape_cast %107 : vector<16x8xf32> to vector<2x8x8xf32>
    "tpu.trace_start"() <{level = 10 : i32, message = "bqd,bkd->bqk"}> : () -> ()
    %cst_89 = arith.constant dense<0.000000e+00> : vector<2x8x8xf32>
    %111 = tpu.matmul %108, %109, %cst_89 {dimension_numbers = #tpu.dot_dimension_numbers<[2], [2], [1], [1], [0, 0, 0, 1, 1, 1], [0], [0]>} : vector<2x8x8xf32>, vector<2x8x8xf32>, vector<2x8x8xf32> -> vector<2x8x8xf32>
    "tpu.trace_stop"() : () -> ()
    %112 = vector.broadcast %4 : vector<2x1x8xf32> to vector<2x8x8xf32>
    %113 = arith.addf %111, %112 : vector<2x8x8xf32>
    %cst_90 = arith.constant dense<0xFF800000> : vector<2x8xf32>
    %114 = vector.multi_reduction <maximumf>, %113, %cst_90 [2] : vector<2x8x8xf32> to vector<2x8xf32>
    %115 = vector.shape_cast %114 : vector<2x8xf32> to vector<2x8x1xf32>
    %116 = vector.broadcast %115 : vector<2x8x1xf32> to vector<2x8x8xf32>
    %117 = arith.subf %113, %116 : vector<2x8x8xf32>
    %118 = math.exp %117 : vector<2x8x8xf32>
    %cst_91 = arith.constant dense<0.000000e+00> : vector<2x8xf32>
    %119 = vector.multi_reduction <add>, %118, %cst_91 [2] : vector<2x8x8xf32> to vector<2x8xf32>
    %120 = vector.shape_cast %119 : vector<2x8xf32> to vector<2x8x1xf32>
    %121 = tpu.reciprocal %120 {approx = true} : vector<2x8x1xf32> -> vector<2x8x1xf32>
    %122 = vector.broadcast %121 : vector<2x8x1xf32> to vector<2x8x8xf32>
    %123 = arith.mulf %118, %122 : vector<2x8x8xf32>
    "tpu.trace_start"() <{level = 10 : i32, message = "bqk,bkd->bqd"}> : () -> ()
    %cst_92 = arith.constant dense<0.000000e+00> : vector<2x8x8xf32>
    %124 = tpu.matmul %123, %110, %cst_92 {dimension_numbers = #tpu.dot_dimension_numbers<[2], [1], [1], [2], [0, 0, 0, 1, 1, 2], [0], [0]>} : vector<2x8x8xf32>, vector<2x8x8xf32>, vector<2x8x8xf32> -> vector<2x8x8xf32>
    "tpu.trace_stop"() : () -> ()
    %125 = vector.shape_cast %124 : vector<2x8x8xf32> to vector<16x8xf32>
    %c0_93 = arith.constant 0 : index
    %c3_94 = arith.constant 3 : index
    %c0_95 = arith.constant 0 : index
    %c0_96 = arith.constant 0 : index
    %126 = vector.load %arg7[%c0_93, %c3_94, %c0_95, %c0_96] : memref<1x4x8x32xf32, #tpu.memory_space<vmem>>, vector<1x1x8x32xf32>
    %127 = vector.shape_cast %126 : vector<1x1x8x32xf32> to vector<8x32xf32>
    %cst_97 = arith.constant dense<0.000000e+00> : vector<16x32xf32>
    %128 = tpu.matmul %125, %127, %cst_97 {dimension_numbers = #tpu.dot_dimension_numbers<[1], [0], [0], [1], [0, 0, 1, 1], [], []>} : vector<16x8xf32>, vector<8x32xf32>, vector<16x32xf32> -> vector<16x32xf32>
    %129 = arith.addf %98, %128 : vector<16x32xf32>
    %130 = arith.addf %129, %3 : vector<16x32xf32>
    %cst_98 = arith.constant dense<0.000000e+00> : vector<16xf32>
    %131 = vector.multi_reduction <add>, %130, %cst_98 [1] : vector<16x32xf32> to vector<16xf32>
    %132 = vector.shape_cast %131 : vector<16xf32> to vector<16x1xf32>
    %cst_99 = arith.constant 3.200000e+01 : f32
    %133 = vector.broadcast %cst_99 : f32 to vector<16x1xf32>
    %134 = arith.divf %132, %133 : vector<16x1xf32>
    %135 = vector.broadcast %134 : vector<16x1xf32> to vector<16x32xf32>
    %136 = arith.subf %130, %135 : vector<16x32xf32>
    %137 = arith.mulf %136, %136 : vector<16x32xf32>
    %cst_100 = arith.constant dense<0.000000e+00> : vector<16xf32>
    %138 = vector.multi_reduction <add>, %137, %cst_100 [1] : vector<16x32xf32> to vector<16xf32>
    %139 = vector.shape_cast %138 : vector<16xf32> to vector<16x1xf32>
    %cst_101 = arith.constant 3.200000e+01 : f32
    %140 = vector.broadcast %cst_101 : f32 to vector<16x1xf32>
    %141 = arith.divf %139, %140 : vector<16x1xf32>
    %142 = vector.broadcast %134 : vector<16x1xf32> to vector<16x32xf32>
    %143 = arith.subf %130, %142 : vector<16x32xf32>
    %cst_102 = arith.constant 9.99999997E-7 : f32
    %144 = vector.broadcast %cst_102 : f32 to vector<16x1xf32>
    %145 = arith.addf %141, %144 : vector<16x1xf32>
    %146 = math.rsqrt %145 : vector<16x1xf32>
    %147 = vector.broadcast %146 : vector<16x1xf32> to vector<16x32xf32>
    %148 = arith.mulf %143, %147 : vector<16x32xf32>
    %c0_103 = arith.constant 0 : index
    %c0_104 = arith.constant 0 : index
    %c0_105 = arith.constant 0 : index
    %149 = vector.load %arg8[%c0_103, %c0_104, %c0_105] : memref<1x1x32xf32, #tpu.memory_space<vmem>>, vector<1x1x32xf32>
    %150 = vector.shape_cast %149 : vector<1x1x32xf32> to vector<1x32xf32>
    %151 = vector.broadcast %150 : vector<1x32xf32> to vector<16x32xf32>
    %152 = arith.mulf %148, %151 : vector<16x32xf32>
    %c0_106 = arith.constant 0 : index
    %c0_107 = arith.constant 0 : index
    %c0_108 = arith.constant 0 : index
    %153 = vector.load %arg9[%c0_106, %c0_107, %c0_108] : memref<1x1x32xf32, #tpu.memory_space<vmem>>, vector<1x1x32xf32>
    %154 = vector.shape_cast %153 : vector<1x1x32xf32> to vector<1x32xf32>
    %155 = vector.broadcast %154 : vector<1x32xf32> to vector<16x32xf32>
    %156 = arith.addf %152, %155 : vector<16x32xf32>
    %c0_109 = arith.constant 0 : index
    %c0_110 = arith.constant 0 : index
    %c0_111 = arith.constant 0 : index
    %157 = vector.load %arg10[%c0_109, %c0_110, %c0_111] : memref<1x32x64xf32, #tpu.memory_space<vmem>>, vector<1x32x64xf32>
    %158 = vector.shape_cast %157 : vector<1x32x64xf32> to vector<32x64xf32>
    %cst_112 = arith.constant dense<0.000000e+00> : vector<16x64xf32>
    %159 = tpu.matmul %156, %158, %cst_112 {dimension_numbers = #tpu.dot_dimension_numbers<[1], [0], [0], [1], [0, 0, 1, 1], [], []>} : vector<16x32xf32>, vector<32x64xf32>, vector<16x64xf32> -> vector<16x64xf32>
    %c0_113 = arith.constant 0 : index
    %c0_114 = arith.constant 0 : index
    %c0_115 = arith.constant 0 : index
    %160 = vector.load %arg11[%c0_113, %c0_114, %c0_115] : memref<1x1x64xf32, #tpu.memory_space<vmem>>, vector<1x1x64xf32>
    %161 = vector.shape_cast %160 : vector<1x1x64xf32> to vector<1x64xf32>
    %162 = vector.broadcast %161 : vector<1x64xf32> to vector<16x64xf32>
    %163 = arith.addf %159, %162 : vector<16x64xf32>
    %cst_116 = arith.constant 0.000000e+00 : f32
    %164 = vector.broadcast %cst_116 : f32 to vector<16x64xf32>
    %165 = arith.maximumf %163, %164 : vector<16x64xf32>
    %c0_117 = arith.constant 0 : index
    %c0_118 = arith.constant 0 : index
    %c0_119 = arith.constant 0 : index
    %166 = vector.load %arg12[%c0_117, %c0_118, %c0_119] : memref<1x64x32xf32, #tpu.memory_space<vmem>>, vector<1x64x32xf32>
    %167 = vector.shape_cast %166 : vector<1x64x32xf32> to vector<64x32xf32>
    %cst_120 = arith.constant dense<0.000000e+00> : vector<16x32xf32>
    %168 = tpu.matmul %165, %167, %cst_120 {dimension_numbers = #tpu.dot_dimension_numbers<[1], [0], [0], [1], [0, 0, 1, 1], [], []>} : vector<16x64xf32>, vector<64x32xf32>, vector<16x32xf32> -> vector<16x32xf32>
    %c0_121 = arith.constant 0 : index
    %c0_122 = arith.constant 0 : index
    %c0_123 = arith.constant 0 : index
    %169 = vector.load %arg13[%c0_121, %c0_122, %c0_123] : memref<1x1x32xf32, #tpu.memory_space<vmem>>, vector<1x1x32xf32>
    %170 = vector.shape_cast %169 : vector<1x1x32xf32> to vector<1x32xf32>
    %171 = vector.broadcast %170 : vector<1x32xf32> to vector<16x32xf32>
    %172 = arith.addf %168, %171 : vector<16x32xf32>
    %173 = arith.addf %172, %156 : vector<16x32xf32>
    %cst_124 = arith.constant dense<0.000000e+00> : vector<16xf32>
    %174 = vector.multi_reduction <add>, %173, %cst_124 [1] : vector<16x32xf32> to vector<16xf32>
    %175 = vector.shape_cast %174 : vector<16xf32> to vector<16x1xf32>
    %cst_125 = arith.constant 3.200000e+01 : f32
    %176 = vector.broadcast %cst_125 : f32 to vector<16x1xf32>
    %177 = arith.divf %175, %176 : vector<16x1xf32>
    %178 = vector.broadcast %177 : vector<16x1xf32> to vector<16x32xf32>
    %179 = arith.subf %173, %178 : vector<16x32xf32>
    %180 = arith.mulf %179, %179 : vector<16x32xf32>
    %cst_126 = arith.constant dense<0.000000e+00> : vector<16xf32>
    %181 = vector.multi_reduction <add>, %180, %cst_126 [1] : vector<16x32xf32> to vector<16xf32>
    %182 = vector.shape_cast %181 : vector<16xf32> to vector<16x1xf32>
    %cst_127 = arith.constant 3.200000e+01 : f32
    %183 = vector.broadcast %cst_127 : f32 to vector<16x1xf32>
    %184 = arith.divf %182, %183 : vector<16x1xf32>
    %185 = vector.broadcast %177 : vector<16x1xf32> to vector<16x32xf32>
    %186 = arith.subf %173, %185 : vector<16x32xf32>
    %cst_128 = arith.constant 9.99999997E-7 : f32
    %187 = vector.broadcast %cst_128 : f32 to vector<16x1xf32>
    %188 = arith.addf %184, %187 : vector<16x1xf32>
    %189 = math.rsqrt %188 : vector<16x1xf32>
    %190 = vector.broadcast %189 : vector<16x1xf32> to vector<16x32xf32>
    %191 = arith.mulf %186, %190 : vector<16x32xf32>
    %c0_129 = arith.constant 0 : index
    %c0_130 = arith.constant 0 : index
    %c0_131 = arith.constant 0 : index
    %192 = vector.load %arg14[%c0_129, %c0_130, %c0_131] : memref<1x1x32xf32, #tpu.memory_space<vmem>>, vector<1x1x32xf32>
    %193 = vector.shape_cast %192 : vector<1x1x32xf32> to vector<1x32xf32>
    %194 = vector.broadcast %193 : vector<1x32xf32> to vector<16x32xf32>
    %195 = arith.mulf %191, %194 : vector<16x32xf32>
    %c0_132 = arith.constant 0 : index
    %c0_133 = arith.constant 0 : index
    %c0_134 = arith.constant 0 : index
    %196 = vector.load %arg15[%c0_132, %c0_133, %c0_134] : memref<1x1x32xf32, #tpu.memory_space<vmem>>, vector<1x1x32xf32>
    %197 = vector.shape_cast %196 : vector<1x1x32xf32> to vector<1x32xf32>
    %198 = vector.broadcast %197 : vector<1x32xf32> to vector<16x32xf32>
    %199 = arith.addf %195, %198 : vector<16x32xf32>
    %c0_135 = arith.constant 0 : index
    %c0_136 = arith.constant 0 : index
    %200 = vector.load %arg17[%c0_135, %c0_136] : memref<16x32xf32, #tpu.memory_space<vmem>>, vector<16x32xf32>
    tpu.vector_store %arg17[%c0_135, %c0_136], %199 {strides = array<i32>} : memref<16x32xf32, #tpu.memory_space<vmem>>, vector<16x32xf32>,
    %c1_i32 = arith.constant 1 : i32
    %201 = arith.cmpi eq, %arg1, %c1_i32 : i32
    %202 = arith.extui %201 : i1 to i32
    %c0_i32_137 = arith.constant 0 : i32
    %203 = arith.cmpi ne, %202, %c0_i32_137 : i32
    scf.if %203 {
      %204 = vector.shape_cast %199 : vector<16x32xf32> to vector<2x8x32xf32>
      %c0_138 = arith.constant 0 : index
      %c0_139 = arith.constant 0 : index
      %c0_140 = arith.constant 0 : index
      %205 = vector.load %arg16[%c0_138, %c0_139, %c0_140] : memref<2x8x32xf32, #tpu.memory_space<vmem>>, vector<2x8x32xf32>
      tpu.vector_store %arg16[%c0_138, %c0_139, %c0_140], %204 {strides = array<i32>} : memref<2x8x32xf32, #tpu.memory_space<vmem>>, vector<2x8x32xf32>,
    } else {
    }
    return
  }
  func.func @transform_0(%arg0: i32, %arg1: i32) -> (i32, i32, i32) {
    %c0_i32 = arith.constant 0 : i32
    %c0_i32_0 = arith.constant 0 : i32
    %c0_i32_1 = arith.constant 0 : i32
    return %arg0, %c0_i32, %c0_i32_0 : i32, i32, i32
  }
  func.func @transform_1(%arg0: i32, %arg1: i32) -> (i32, i32, i32) {
    %c0_i32 = arith.constant 0 : i32
    %c0_i32_0 = arith.constant 0 : i32
    %c0_i32_1 = arith.constant 0 : i32
    return %arg0, %c0_i32, %c0_i32_0 : i32, i32, i32
  }
  func.func @transform_2(%arg0: i32, %arg1: i32) -> (i32, i32, i32, i32) {
    %c0_i32 = arith.constant 0 : i32
    %c0_i32_0 = arith.constant 0 : i32
    %c0_i32_1 = arith.constant 0 : i32
    %c0_i32_2 = arith.constant 0 : i32
    return %arg1, %c0_i32, %c0_i32_0, %c0_i32_1 : i32, i32, i32, i32
  }
  func.func @transform_3(%arg0: i32, %arg1: i32) -> (i32, i32, i32, i32) {
    %c0_i32 = arith.constant 0 : i32
    %c0_i32_0 = arith.constant 0 : i32
    %c0_i32_1 = arith.constant 0 : i32
    %c0_i32_2 = arith.constant 0 : i32
    return %arg1, %c0_i32, %c0_i32_0, %c0_i32_1 : i32, i32, i32, i32
  }
  func.func @transform_4(%arg0: i32, %arg1: i32) -> (i32, i32, i32, i32) {
    %c0_i32 = arith.constant 0 : i32
    %c0_i32_0 = arith.constant 0 : i32
    %c0_i32_1 = arith.constant 0 : i32
    %c0_i32_2 = arith.constant 0 : i32
    return %arg1, %c0_i32, %c0_i32_0, %c0_i32_1 : i32, i32, i32, i32
  }
  func.func @transform_5(%arg0: i32, %arg1: i32) -> (i32, i32, i32, i32) {
    %c0_i32 = arith.constant 0 : i32
    %c0_i32_0 = arith.constant 0 : i32
    %c0_i32_1 = arith.constant 0 : i32
    %c0_i32_2 = arith.constant 0 : i32
    return %arg1, %c0_i32, %c0_i32_0, %c0_i32_1 : i32, i32, i32, i32
  }
  func.func @transform_6(%arg0: i32, %arg1: i32) -> (i32, i32, i32) {
    %c0_i32 = arith.constant 0 : i32
    %c0_i32_0 = arith.constant 0 : i32
    %c0_i32_1 = arith.constant 0 : i32
    return %arg1, %c0_i32, %c0_i32_0 : i32, i32, i32
  }
  func.func @transform_7(%arg0: i32, %arg1: i32) -> (i32, i32, i32) {
    %c0_i32 = arith.constant 0 : i32
    %c0_i32_0 = arith.constant 0 : i32
    %c0_i32_1 = arith.constant 0 : i32
    return %arg1, %c0_i32, %c0_i32_0 : i32, i32, i32
  }
  func.func @transform_8(%arg0: i32, %arg1: i32) -> (i32, i32, i32) {
    %c0_i32 = arith.constant 0 : i32
    %c0_i32_0 = arith.constant 0 : i32
    %c0_i32_1 = arith.constant 0 : i32
    return %arg1, %c0_i32, %c0_i32_0 : i32, i32, i32
  }
  func.func @transform_9(%arg0: i32, %arg1: i32) -> (i32, i32, i32) {
    %c0_i32 = arith.constant 0 : i32
    %c0_i32_0 = arith.constant 0 : i32
    %c0_i32_1 = arith.constant 0 : i32
    return %arg1, %c0_i32, %c0_i32_0 : i32, i32, i32
  }
  func.func @transform_10(%arg0: i32, %arg1: i32) -> (i32, i32, i32) {
    %c0_i32 = arith.constant 0 : i32
    %c0_i32_0 = arith.constant 0 : i32
    %c0_i32_1 = arith.constant 0 : i32
    return %arg1, %c0_i32, %c0_i32_0 : i32, i32, i32
  }
  func.func @transform_11(%arg0: i32, %arg1: i32) -> (i32, i32, i32) {
    %c0_i32 = arith.constant 0 : i32
    %c0_i32_0 = arith.constant 0 : i32
    %c0_i32_1 = arith.constant 0 : i32
    return %arg1, %c0_i32, %c0_i32_0 : i32, i32, i32
  }
  func.func @transform_12(%arg0: i32, %arg1: i32) -> (i32, i32, i32) {
    %c0_i32 = arith.constant 0 : i32
    %c0_i32_0 = arith.constant 0 : i32
    %c0_i32_1 = arith.constant 0 : i32
    return %arg1, %c0_i32, %c0_i32_0 : i32, i32, i32
  }
  func.func @transform_13(%arg0: i32, %arg1: i32) -> (i32, i32, i32) {
    %c0_i32 = arith.constant 0 : i32
    %c0_i32_0 = arith.constant 0 : i32
    %c0_i32_1 = arith.constant 0 : i32
    return %arg1, %c0_i32, %c0_i32_0 : i32, i32, i32
  }
  func.func @transform_14(%arg0: i32, %arg1: i32) -> (i32, i32, i32) {
    %c0_i32 = arith.constant 0 : i32
    %c0_i32_0 = arith.constant 0 : i32
    %c0_i32_1 = arith.constant 0 : i32
    return %arg0, %c0_i32, %c0_i32_0 : i32, i32, i32
  }
}

</mosaic_0001>

<llo_original>
// kernel: tpu_custom_call.1
$region0: #{tpu_custom_call.1}
  #allocation0 [shape = 'u32[]', space=smem, size = 0x4, offset = 0x4, fixed_abs, tag = 'smem constant byte address 0x4 - core index']
  #allocation1 [shape = 'u32[144,128]{1,0:T(1,128)}', space=vmem, size = 0x12000, scoped, tag = 'internal scratch']
  #allocation2 [shape = 'f32[16,32]{1,0:T(8,128)}', space=vmem, size = 0x2000, scoped, tag = 'scratch operand']
  %s0 = inlined_call_operand.vmem [shape: f32[2,8,32], index: 0, kind: input, shape index: {}]
  %s1 = inlined_call_operand.vmem [shape: f32[2,1,8], index: 1, kind: input, shape index: {}]
  %s2 = inlined_call_operand.vmem [shape: f32[2,4,32,8], index: 2, kind: input, shape index: {}]
  %s3 = inlined_call_operand.vmem [shape: f32[2,4,32,8], index: 3, kind: input, shape index: {}]
  %s4 = inlined_call_operand.vmem [shape: f32[2,4,32,8], index: 4, kind: input, shape index: {}]
  %s5 = inlined_call_operand.vmem [shape: f32[2,4,8,32], index: 5, kind: input, shape index: {}]
  %s6 = inlined_call_operand.vmem [shape: f32[2,1,32], index: 6, kind: input, shape index: {}]
  %s7 = inlined_call_operand.vmem [shape: f32[2,1,32], index: 7, kind: input, shape index: {}]
  %s8 = inlined_call_operand.vmem [shape: f32[2,32,64], index: 8, kind: input, shape index: {}]
  %s9 = inlined_call_operand.vmem [shape: f32[2,1,64], index: 9, kind: input, shape index: {}]
  %s10 = inlined_call_operand.vmem [shape: f32[2,64,32], index: 10, kind: input, shape index: {}]
  %s11 = inlined_call_operand.vmem [shape: f32[2,1,32], index: 11, kind: input, shape index: {}]
  %s12 = inlined_call_operand.vmem [shape: f32[2,1,32], index: 12, kind: input, shape index: {}]
  %s13 = inlined_call_operand.vmem [shape: f32[2,1,32], index: 13, kind: input, shape index: {}]
  %s14 = inlined_call_operand.hbm [shape: f32[2,8,32], index: 14, kind: output, shape index: {}]
  %s15 = sld [smem:[#allocation0]]
  $region97: #{tpu_custom_call.1} parent=0
    _
  %s17 = ssub.s32 1, %s15
  %s18 = scalar_select 0, %s17, %s15
  $region1: #{tpu_custom_call.1} parent=0
    #allocation3 [shape = 'u8[8192]{0}', space=vmem, size = 0x2000, scoped, tag = 'output window, operand 0, single buffered']
    #allocation4 [shape = 's32[2]{0}', space=sflag, size = 0x8, scoped, tag = 'scoped memory for tpu_custom_call.1']
    %19 = vsyncpa [#allocation4], 0
    loop: start=0, step=1, limit=4
    $region2: #{tpu_custom_call.1} parent=1 // loop_pre_header
      _
    $region3: #{tpu_custom_call.1} parent=1 // loop_header
      %s21 = sphi 0, %s25
      %p22 = scmp.ge.s32.totalorder %s21, 4
      %s28 = sphi 0, %s40
      %s29 = sphi 0, %s36
      %s30 = sphi 0, %s28
      %s31 = sphi 0, %s29
      %s32 = sphi 0, %s30
      %s33 = sphi 0, %s31
      %s43 = sphi 0, %s45
      %s46 = sphi 0, %s43
      %s47 = sphi 0, %s46
      %s63 = sphi 0, %s47
      %s69 = sphi 0, %s71
      %s72 = sphi 0, %s69
      %s73 = sphi 0, %s72
      %s89 = sphi 0, %s73
      %s95 = sphi 0, %s97
      %s98 = sphi 0, %s95
      %s99 = sphi 0, %s98
      %s115 = sphi 0, %s99
      %s121 = sphi 0, %s123
      %s124 = sphi 0, %s121
      %s125 = sphi 0, %s124
      %s141 = sphi 0, %s125
      %s147 = sphi 0, %s149
      %s150 = sphi 0, %s147
      %s151 = sphi 0, %s150
      %s167 = sphi 0, %s151
      %s173 = sphi 0, %s175
      %s176 = sphi 0, %s173
      %s177 = sphi 0, %s176
      %s193 = sphi 0, %s177
      %s199 = sphi 0, %s201
      %s202 = sphi 0, %s199
      %s203 = sphi 0, %s202
      %s219 = sphi 0, %s203
      %s225 = sphi 0, %s227
      %s228 = sphi 0, %s225
      %s229 = sphi 0, %s228
      %s245 = sphi 0, %s229
      %s251 = sphi 0, %s253
      %s254 = sphi 0, %s251
      %s255 = sphi 0, %s254
      %s271 = sphi 0, %s255
      %s277 = sphi 0, %s279
      %s280 = sphi 0, %s277
      %s281 = sphi 0, %s280
      %s297 = sphi 0, %s281
      %s303 = sphi 0, %s305
      %s306 = sphi 0, %s303
      %s307 = sphi 0, %s306
      %s323 = sphi 0, %s307
      %s329 = sphi 0, %s331
      %s332 = sphi 0, %s329
      %s333 = sphi 0, %s332
      %s349 = sphi 0, %s333
      %s355 = sphi 0, %s357
      %s358 = sphi 0, %s355
      %s359 = sphi 0, %s358
      %s375 = sphi 0, %s359
      %s381 = sphi 0, %s383
      %s384 = sphi 0, %s381
      %s385 = sphi 0, %s384
      %s401 = sphi 0, %s385
      %s407 = sphi 0, %s409
      %s410 = sphi 0, %s407
      %s411 = sphi 0, %s410
      %s427 = sphi 0, %s411
    $region4: #{tpu_custom_call.1} parent=1 // loop_header_branch
      %24 = sbr.rel (%p22) target = $region8
    $region5: #{tpu_custom_call.1} parent=1 // loop_body
      %s26 = ssub.s32 %s21, 1
      %s27 = ssub.s32 %s21, 2
      %s34 = sadd.s32 1, %s29
      %p35 = scmp.ge.s32.totalorder %s34, 2
      %s36 = scalar_select %p35, 0, %s34
      %s37 = sadd.s32 1, %s28
      %s38 = scalar_select %p35, %s37, %s28
      %p39 = scmp.ge.s32.totalorder %s38, 1
      %s40 = scalar_select %p39, 0, %s38
      %s41 = ssub.s32 %s28, %s40
      %p42 = scmp.eq.s32.totalorder %s41, 0
      %s44 = sadd.s32 %s43, 1
      %s45 = scalar_select %p42, %s43, %s44
      %p48 = pneg %p42
      %p49 = scmp.eq.s32.totalorder %s21, 1
      %p50 = por %p48, %p49
      %p51 = scmp.ne.s32.totalorder %s43, %s46
      %p52 = scmp.eq.s32.totalorder %s21, 0
      %p53 = por %p51, %p52
      %p54 = scmp.ne.s32.totalorder %s43, %s46
      %p55 = scmp.eq.s32.totalorder %s26, 1
      %p56 = por %p54, %p55
      %p57 = scmp.ne.s32.totalorder %s46, %s47
      %p58 = scmp.eq.s32.totalorder %s26, 0
      %p59 = por %p57, %p58
      %p60 = scmp.ne.s32.totalorder %s46, %s47
      %p61 = scmp.eq.s32.totalorder %s27, 1
      %p62 = por %p60, %p61
      %p64 = scmp.ne.s32.totalorder %s47, %s63
      %p65 = scmp.eq.s32.totalorder %s27, 0
      %p66 = por %p64, %p65
      %s67 = ssub.s32 %s28, %s40
      %p68 = scmp.eq.s32.totalorder %s67, 0
      %s70 = sadd.s32 %s69, 1
      %s71 = scalar_select %p68, %s69, %s70
      %p74 = pneg %p68
      %p75 = scmp.eq.s32.totalorder %s21, 1
      %p76 = por %p74, %p75
      %p77 = scmp.ne.s32.totalorder %s69, %s72
      %p78 = scmp.eq.s32.totalorder %s21, 0
      %p79 = por %p77, %p78
      %p80 = scmp.ne.s32.totalorder %s69, %s72
      %p81 = scmp.eq.s32.totalorder %s26, 1
      %p82 = por %p80, %p81
      %p83 = scmp.ne.s32.totalorder %s72, %s73
      %p84 = scmp.eq.s32.totalorder %s26, 0
      %p85 = por %p83, %p84
      %p86 = scmp.ne.s32.totalorder %s72, %s73
      %p87 = scmp.eq.s32.totalorder %s27, 1
      %p88 = por %p86, %p87
      %p90 = scmp.ne.s32.totalorder %s73, %s89
      %p91 = scmp.eq.s32.totalorder %s27, 0
      %p92 = por %p90, %p91
      %s93 = ssub.s32 %s29, %s36
      %p94 = scmp.eq.s32.totalorder %s93, 0
      %s96 = sadd.s32 %s95, 1
      %s97 = scalar_select %p94, %s95, %s96
      %p100 = pneg %p94
      %p101 = scmp.eq.s32.totalorder %s21, 1
      %p102 = por %p100, %p101
      %p103 = scmp.ne.s32.totalorder %s95, %s98
      %p104 = scmp.eq.s32.totalorder %s21, 0
      %p105 = por %p103, %p104
      %p106 = scmp.ne.s32.totalorder %s95, %s98
      %p107 = scmp.eq.s32.totalorder %s26, 1
      %p108 = por %p106, %p107
      %p109 = scmp.ne.s32.totalorder %s98, %s99
      %p110 = scmp.eq.s32.totalorder %s26, 0
      %p111 = por %p109, %p110
      %p112 = scmp.ne.s32.totalorder %s98, %s99
      %p113 = scmp.eq.s32.totalorder %s27, 1
      %p114 = por %p112, %p113
      %p116 = scmp.ne.s32.totalorder %s99, %s115
      %p117 = scmp.eq.s32.totalorder %s27, 0
      %p118 = por %p116, %p117
      %s119 = ssub.s32 %s29, %s36
      %p120 = scmp.eq.s32.totalorder %s119, 0
      %s122 = sadd.s32 %s121, 1
      %s123 = scalar_select %p120, %s121, %s122
      %p126 = pneg %p120
      %p127 = scmp.eq.s32.totalorder %s21, 1
      %p128 = por %p126, %p127
      %p129 = scmp.ne.s32.totalorder %s121, %s124
      %p130 = scmp.eq.s32.totalorder %s21, 0
      %p131 = por %p129, %p130
      %p132 = scmp.ne.s32.totalorder %s121, %s124
      %p133 = scmp.eq.s32.totalorder %s26, 1
      %p134 = por %p132, %p133
      %p135 = scmp.ne.s32.totalorder %s124, %s125
      %p136 = scmp.eq.s32.totalorder %s26, 0
      %p137 = por %p135, %p136
      %p138 = scmp.ne.s32.totalorder %s124, %s125
      %p139 = scmp.eq.s32.totalorder %s27, 1
      %p140 = por %p138, %p139
      %p142 = scmp.ne.s32.totalorder %s125, %s141
      %p143 = scmp.eq.s32.totalorder %s27, 0
      %p144 = por %p142, %p143
      %s145 = ssub.s32 %s29, %s36
      %p146 = scmp.eq.s32.totalorder %s145, 0
      %s148 = sadd.s32 %s147, 1
      %s149 = scalar_select %p146, %s147, %s148
      %p152 = pneg %p146
      %p153 = scmp.eq.s32.totalorder %s21, 1
      %p154 = por %p152, %p153
      %p155 = scmp.ne.s32.totalorder %s147, %s150
      %p156 = scmp.eq.s32.totalorder %s21, 0
      %p157 = por %p155, %p156
      %p158 = scmp.ne.s32.totalorder %s147, %s150
      %p159 = scmp.eq.s32.totalorder %s26, 1
      %p160 = por %p158, %p159
      %p161 = scmp.ne.s32.totalorder %s150, %s151
      %p162 = scmp.eq.s32.totalorder %s26, 0
      %p163 = por %p161, %p162
      %p164 = scmp.ne.s32.totalorder %s150, %s151
      %p165 = scmp.eq.s32.totalorder %s27, 1
      %p166 = por %p164, %p165
      %p168 = scmp.ne.s32.totalorder %s151, %s167
      %p169 = scmp.eq.s32.totalorder %s27, 0
      %p170 = por %p168, %p169
      %s171 = ssub.s32 %s29, %s36
      %p172 = scmp.eq.s32.totalorder %s171, 0
      %s174 = sadd.s32 %s173, 1
      %s175 = scalar_select %p172, %s173, %s174
      %p178 = pneg %p172
      %p179 = scmp.eq.s32.totalorder %s21, 1
      %p180 = por %p178, %p179
      %p181 = scmp.ne.s32.totalorder %s173, %s176
      %p182 = scmp.eq.s32.totalorder %s21, 0
      %p183 = por %p181, %p182
      %p184 = scmp.ne.s32.totalorder %s173, %s176
      %p185 = scmp.eq.s32.totalorder %s26, 1
      %p186 = por %p184, %p185
      %p187 = scmp.ne.s32.totalorder %s176, %s177
      %p188 = scmp.eq.s32.totalorder %s26, 0
      %p189 = por %p187, %p188
      %p190 = scmp.ne.s32.totalorder %s176, %s177
      %p191 = scmp.eq.s32.totalorder %s27, 1
      %p192 = por %p190, %p191
      %p194 = scmp.ne.s32.totalorder %s177, %s193
      %p195 = scmp.eq.s32.totalorder %s27, 0
      %p196 = por %p194, %p195
      %s197 = ssub.s32 %s29, %s36
      %p198 = scmp.eq.s32.totalorder %s197, 0
      %s200 = sadd.s32 %s199, 1
      %s201 = scalar_select %p198, %s199, %s200
      %p204 = pneg %p198
      %p205 = scmp.eq.s32.totalorder %s21, 1
      %p206 = por %p204, %p205
      %p207 = scmp.ne.s32.totalorder %s199, %s202
      %p208 = scmp.eq.s32.totalorder %s21, 0
      %p209 = por %p207, %p208
      %p210 = scmp.ne.s32.totalorder %s199, %s202
      %p211 = scmp.eq.s32.totalorder %s26, 1
      %p212 = por %p210, %p211
      %p213 = scmp.ne.s32.totalorder %s202, %s203
      %p214 = scmp.eq.s32.totalorder %s26, 0
      %p215 = por %p213, %p214
      %p216 = scmp.ne.s32.totalorder %s202, %s203
      %p217 = scmp.eq.s32.totalorder %s27, 1
      %p218 = por %p216, %p217
      %p220 = scmp.ne.s32.totalorder %s203, %s219
      %p221 = scmp.eq.s32.totalorder %s27, 0
      %p222 = por %p220, %p221
      %s223 = ssub.s32 %s29, %s36
      %p224 = scmp.eq.s32.totalorder %s223, 0
      %s226 = sadd.s32 %s225, 1
      %s227 = scalar_select %p224, %s225, %s226
      %p230 = pneg %p224
      %p231 = scmp.eq.s32.totalorder %s21, 1
      %p232 = por %p230, %p231
      %p233 = scmp.ne.s32.totalorder %s225, %s228
      %p234 = scmp.eq.s32.totalorder %s21, 0
      %p235 = por %p233, %p234
      %p236 = scmp.ne.s32.totalorder %s225, %s228
      %p237 = scmp.eq.s32.totalorder %s26, 1
      %p238 = por %p236, %p237
      %p239 = scmp.ne.s32.totalorder %s228, %s229
      %p240 = scmp.eq.s32.totalorder %s26, 0
      %p241 = por %p239, %p240
      %p242 = scmp.ne.s32.totalorder %s228, %s229
      %p243 = scmp.eq.s32.totalorder %s27, 1
      %p244 = por %p242, %p243
      %p246 = scmp.ne.s32.totalorder %s229, %s245
      %p247 = scmp.eq.s32.totalorder %s27, 0
      %p248 = por %p246, %p247
      %s249 = ssub.s32 %s29, %s36
      %p250 = scmp.eq.s32.totalorder %s249, 0
      %s252 = sadd.s32 %s251, 1
      %s253 = scalar_select %p250, %s251, %s252
      %p256 = pneg %p250
      %p257 = scmp.eq.s32.totalorder %s21, 1
      %p258 = por %p256, %p257
      %p259 = scmp.ne.s32.totalorder %s251, %s254
      %p260 = scmp.eq.s32.totalorder %s21, 0
      %p261 = por %p259, %p260
      %p262 = scmp.ne.s32.totalorder %s251, %s254
      %p263 = scmp.eq.s32.totalorder %s26, 1
      %p264 = por %p262, %p263
      %p265 = scmp.ne.s32.totalorder %s254, %s255
      %p266 = scmp.eq.s32.totalorder %s26, 0
      %p267 = por %p265, %p266
      %p268 = scmp.ne.s32.totalorder %s254, %s255
      %p269 = scmp.eq.s32.totalorder %s27, 1
      %p270 = por %p268, %p269
      %p272 = scmp.ne.s32.totalorder %s255, %s271
      %p273 = scmp.eq.s32.totalorder %s27, 0
      %p274 = por %p272, %p273
      %s275 = ssub.s32 %s29, %s36
      %p276 = scmp.eq.s32.totalorder %s275, 0
      %s278 = sadd.s32 %s277, 1
      %s279 = scalar_select %p276, %s277, %s278
      %p282 = pneg %p276
      %p283 = scmp.eq.s32.totalorder %s21, 1
      %p284 = por %p282, %p283
      %p285 = scmp.ne.s32.totalorder %s277, %s280
      %p286 = scmp.eq.s32.totalorder %s21, 0
      %p287 = por %p285, %p286
      %p288 = scmp.ne.s32.totalorder %s277, %s280
      %p289 = scmp.eq.s32.totalorder %s26, 1
      %p290 = por %p288, %p289
      %p291 = scmp.ne.s32.totalorder %s280, %s281
      %p292 = scmp.eq.s32.totalorder %s26, 0
      %p293 = por %p291, %p292
      %p294 = scmp.ne.s32.totalorder %s280, %s281
      %p295 = scmp.eq.s32.totalorder %s27, 1
      %p296 = por %p294, %p295
      %p298 = scmp.ne.s32.totalorder %s281, %s297
      %p299 = scmp.eq.s32.totalorder %s27, 0
      %p300 = por %p298, %p299
      %s301 = ssub.s32 %s29, %s36
      %p302 = scmp.eq.s32.totalorder %s301, 0
      %s304 = sadd.s32 %s303, 1
      %s305 = scalar_select %p302, %s303, %s304
      %p308 = pneg %p302
      %p309 = scmp.eq.s32.totalorder %s21, 1
      %p310 = por %p308, %p309
      %p311 = scmp.ne.s32.totalorder %s303, %s306
      %p312 = scmp.eq.s32.totalorder %s21, 0
      %p313 = por %p311, %p312
      %p314 = scmp.ne.s32.totalorder %s303, %s306
      %p315 = scmp.eq.s32.totalorder %s26, 1
      %p316 = por %p314, %p315
      %p317 = scmp.ne.s32.totalorder %s306, %s307
      %p318 = scmp.eq.s32.totalorder %s26, 0
      %p319 = por %p317, %p318
      %p320 = scmp.ne.s32.totalorder %s306, %s307
      %p321 = scmp.eq.s32.totalorder %s27, 1
      %p322 = por %p320, %p321
      %p324 = scmp.ne.s32.totalorder %s307, %s323
      %p325 = scmp.eq.s32.totalorder %s27, 0
      %p326 = por %p324, %p325
      %s327 = ssub.s32 %s29, %s36
      %p328 = scmp.eq.s32.totalorder %s327, 0
      %s330 = sadd.s32 %s329, 1
      %s331 = scalar_select %p328, %s329, %s330
      %p334 = pneg %p328
      %p335 = scmp.eq.s32.totalorder %s21, 1
      %p336 = por %p334, %p335
      %p337 = scmp.ne.s32.totalorder %s329, %s332
      %p338 = scmp.eq.s32.totalorder %s21, 0
      %p339 = por %p337, %p338
      %p340 = scmp.ne.s32.totalorder %s329, %s332
      %p341 = scmp.eq.s32.totalorder %s26, 1
      %p342 = por %p340, %p341
      %p343 = scmp.ne.s32.totalorder %s332, %s333
      %p344 = scmp.eq.s32.totalorder %s26, 0
      %p345 = por %p343, %p344
      %p346 = scmp.ne.s32.totalorder %s332, %s333
      %p347 = scmp.eq.s32.totalorder %s27, 1
      %p348 = por %p346, %p347
      %p350 = scmp.ne.s32.totalorder %s333, %s349
      %p351 = scmp.eq.s32.totalorder %s27, 0
      %p352 = por %p350, %p351
      %s353 = ssub.s32 %s29, %s36
      %p354 = scmp.eq.s32.totalorder %s353, 0
      %s356 = sadd.s32 %s355, 1
      %s357 = scalar_select %p354, %s355, %s356
      %p360 = pneg %p354
      %p361 = scmp.eq.s32.totalorder %s21, 1
      %p362 = por %p360, %p361
      %p363 = scmp.ne.s32.totalorder %s355, %s358
      %p364 = scmp.eq.s32.totalorder %s21, 0
      %p365 = por %p363, %p364
      %p366 = scmp.ne.s32.totalorder %s355, %s358
      %p367 = scmp.eq.s32.totalorder %s26, 1
      %p368 = por %p366, %p367
      %p369 = scmp.ne.s32.totalorder %s358, %s359
      %p370 = scmp.eq.s32.totalorder %s26, 0
      %p371 = por %p369, %p370
      %p372 = scmp.ne.s32.totalorder %s358, %s359
      %p373 = scmp.eq.s32.totalorder %s27, 1
      %p374 = por %p372, %p373
      %p376 = scmp.ne.s32.totalorder %s359, %s375
      %p377 = scmp.eq.s32.totalorder %s27, 0
      %p378 = por %p376, %p377
      %s379 = ssub.s32 %s29, %s36
      %p380 = scmp.eq.s32.totalorder %s379, 0
      %s382 = sadd.s32 %s381, 1
      %s383 = scalar_select %p380, %s381, %s382
      %p386 = pneg %p380
      %p387 = scmp.eq.s32.totalorder %s21, 1
      %p388 = por %p386, %p387
      %p389 = scmp.ne.s32.totalorder %s381, %s384
      %p390 = scmp.eq.s32.totalorder %s21, 0
      %p391 = por %p389, %p390
      %p392 = scmp.ne.s32.totalorder %s381, %s384
      %p393 = scmp.eq.s32.totalorder %s26, 1
      %p394 = por %p392, %p393
      %p395 = scmp.ne.s32.totalorder %s384, %s385
      %p396 = scmp.eq.s32.totalorder %s26, 0
      %p397 = por %p395, %p396
      %p398 = scmp.ne.s32.totalorder %s384, %s385
      %p399 = scmp.eq.s32.totalorder %s27, 1
      %p400 = por %p398, %p399
      %p402 = scmp.ne.s32.totalorder %s385, %s401
      %p403 = scmp.eq.s32.totalorder %s27, 0
      %p404 = por %p402, %p403
      %s405 = ssub.s32 %s28, %s40
      %p406 = scmp.eq.s32.totalorder %s405, 0
      %s408 = sadd.s32 %s407, 1
      %s409 = scalar_select %p406, %s407, %s408
      %p412 = pneg %p406
      %p413 = scmp.eq.s32.totalorder %s21, 1
      %p414 = por %p412, %p413
      %p415 = scmp.ne.s32.totalorder %s407, %s410
      %p416 = scmp.eq.s32.totalorder %s21, 0
      %p417 = por %p415, %p416
      %p418 = scmp.ne.s32.totalorder %s407, %s410
      %p419 = scmp.eq.s32.totalorder %s26, 1
      %p420 = por %p418, %p419
      %p421 = scmp.ne.s32.totalorder %s410, %s411
      %p422 = scmp.eq.s32.totalorder %s26, 0
      %p423 = por %p421, %p422
      %p424 = scmp.ne.s32.totalorder %s410, %s411
      %p425 = scmp.eq.s32.totalorder %s27, 1
      %p426 = por %p424, %p425
      %p428 = scmp.ne.s32.totalorder %s411, %s427
      %p429 = scmp.eq.s32.totalorder %s27, 0
      %p430 = por %p428, %p429
      %p431 = scmp.le.s32.totalorder 1, %s21
      %p432 = scmp.lt.s32.totalorder %s21, 3
      %p433 = pnand %p431, %p432
      %p434 = pneg %p433
      // Predicated region
      $region9: #{tpu_custom_call.1} parent=5 // pred_check
        _
      $region10: #{tpu_custom_call.1} parent=5 // pred_check_branch
        %436 = sbr.rel (%p433) target = $region12
      $region11: #{tpu_custom_call.1} parent=5 // pred_region
        %s437 = ssub.s32 %s21, 1
        // Predicated region
        $region13: #{tpu_custom_call.1} parent=11 // pred_check
          %p438 = pneg %p59
        $region14: #{tpu_custom_call.1} parent=11 // pred_check_branch
          %440 = sbr.rel (%p438) target = $region16
        $region15: #{tpu_custom_call.1} parent=11 // pred_region
          %s441 = smul.u32 2, %s30
          %p442 = scmp.lt.s32.totalorder %s441, 1
          %s443 = scalar_select %p442, %s441, 1
          %s444 = smul.addr %s443, 8
          %s445 = scalar_lea.vmem %s0, %s444
          %s446 = smul.u32 2, %s30
        $region16: #{tpu_custom_call.1} parent=11 // pred_fallthru
          _
        // Predicated region
        $region17: #{tpu_custom_call.1} parent=11 // pred_check
          %p447 = pneg %p85
        $region18: #{tpu_custom_call.1} parent=11 // pred_check_branch
          %449 = sbr.rel (%p447) target = $region20
        $region19: #{tpu_custom_call.1} parent=11 // pred_region
          %s450 = smul.u32 2, %s30
          %p451 = scmp.lt.s32.totalorder %s450, 1
          %s452 = scalar_select %p451, %s450, 1
          %s453 = scalar_lea.vmem %s1, %s452
          %s454 = smul.u32 2, %s30
        $region20: #{tpu_custom_call.1} parent=11 // pred_fallthru
          _
      $region12: #{tpu_custom_call.1} parent=5 // pred_fallthru
        _
      %p455 = scmp.lt.s32.totalorder %s21, 2
      // Predicated region
      $region21: #{tpu_custom_call.1} parent=5 // pred_check
        %p456 = pneg %p455
      $region22: #{tpu_custom_call.1} parent=5 // pred_check_branch
        %458 = sbr.rel (%p456) target = $region24
      $region23: #{tpu_custom_call.1} parent=5 // pred_region
        // Predicated region
        $region25: #{tpu_custom_call.1} parent=23 // pred_check
          %p459 = pneg %p105
        $region26: #{tpu_custom_call.1} parent=23 // pred_check_branch
          %461 = sbr.rel (%p459) target = $region28
        $region27: #{tpu_custom_call.1} parent=23 // pred_region
          %p462 = scmp.lt.s32.totalorder %s29, 1
          %s463 = scalar_select %p462, %s29, 1
          %s464 = smul.addr %s463, 16
          %s465 = smul.addr %s464, 8
          %s466 = scalar_lea.vmem %s2, %s465
        $region28: #{tpu_custom_call.1} parent=23 // pred_fallthru
          _
        // Predicated region
        $region29: #{tpu_custom_call.1} parent=23 // pred_check
          %p467 = pneg %p131
        $region30: #{tpu_custom_call.1} parent=23 // pred_check_branch
          %469 = sbr.rel (%p467) target = $region32
        $region31: #{tpu_custom_call.1} parent=23 // pred_region
          %p470 = scmp.lt.s32.totalorder %s29, 1
          %s471 = scalar_select %p470, %s29, 1
          %s472 = smul.addr %s471, 16
          %s473 = smul.addr %s472, 8
          %s474 = scalar_lea.vmem %s3, %s473
        $region32: #{tpu_custom_call.1} parent=23 // pred_fallthru
          _
        // Predicated region
        $region33: #{tpu_custom_call.1} parent=23 // pred_check
          %p475 = pneg %p157
        $region34: #{tpu_custom_call.1} parent=23 // pred_check_branch
          %477 = sbr.rel (%p475) target = $region36
        $region35: #{tpu_custom_call.1} parent=23 // pred_region
          %p478 = scmp.lt.s32.totalorder %s29, 1
          %s479 = scalar_select %p478, %s29, 1
          %s480 = smul.addr %s479, 16
          %s481 = smul.addr %s480, 8
          %s482 = scalar_lea.vmem %s4, %s481
        $region36: #{tpu_custom_call.1} parent=23 // pred_fallthru
          _
        // Predicated region
        $region37: #{tpu_custom_call.1} parent=23 // pred_check
          %p483 = pneg %p183
        $region38: #{tpu_custom_call.1} parent=23 // pred_check_branch
          %485 = sbr.rel (%p483) target = $region40
        $region39: #{tpu_custom_call.1} parent=23 // pred_region
          %p486 = scmp.lt.s32.totalorder %s29, 1
          %s487 = scalar_select %p486, %s29, 1
          %s488 = smul.addr %s487, 4
          %s489 = smul.addr %s488, 8
          %s490 = scalar_lea.vmem %s5, %s489
        $region40: #{tpu_custom_call.1} parent=23 // pred_fallthru
          _
        // Predicated region
        $region41: #{tpu_custom_call.1} parent=23 // pred_check
          %p491 = pneg %p209
        $region42: #{tpu_custom_call.1} parent=23 // pred_check_branch
          %493 = sbr.rel (%p491) target = $region44
        $region43: #{tpu_custom_call.1} parent=23 // pred_region
          %p494 = scmp.lt.s32.totalorder %s29, 1
          %s495 = scalar_select %p494, %s29, 1
          %s496 = scalar_lea.vmem %s6, %s495
        $region44: #{tpu_custom_call.1} parent=23 // pred_fallthru
          _
        // Predicated region
        $region45: #{tpu_custom_call.1} parent=23 // pred_check
          %p497 = pneg %p235
        $region46: #{tpu_custom_call.1} parent=23 // pred_check_branch
          %499 = sbr.rel (%p497) target = $region48
        $region47: #{tpu_custom_call.1} parent=23 // pred_region
          %p500 = scmp.lt.s32.totalorder %s29, 1
          %s501 = scalar_select %p500, %s29, 1
          %s502 = scalar_lea.vmem %s7, %s501
        $region48: #{tpu_custom_call.1} parent=23 // pred_fallthru
          _
        // Predicated region
        $region49: #{tpu_custom_call.1} parent=23 // pred_check
          %p503 = pneg %p261
        $region50: #{tpu_custom_call.1} parent=23 // pred_check_branch
          %505 = sbr.rel (%p503) target = $region52
        $region51: #{tpu_custom_call.1} parent=23 // pred_region
          %p506 = scmp.lt.s32.totalorder %s29, 1
          %s507 = scalar_select %p506, %s29, 1
          %s508 = smul.addr %s507, 4
          %s509 = smul.addr %s508, 8
          %s510 = scalar_lea.vmem %s8, %s509
        $region52: #{tpu_custom_call.1} parent=23 // pred_fallthru
          _
        // Predicated region
        $region53: #{tpu_custom_call.1} parent=23 // pred_check
          %p511 = pneg %p287
        $region54: #{tpu_custom_call.1} parent=23 // pred_check_branch
          %513 = sbr.rel (%p511) target = $region56
        $region55: #{tpu_custom_call.1} parent=23 // pred_region
          %p514 = scmp.lt.s32.totalorder %s29, 1
          %s515 = scalar_select %p514, %s29, 1
          %s516 = scalar_lea.vmem %s9, %s515
        $region56: #{tpu_custom_call.1} parent=23 // pred_fallthru
          _
        // Predicated region
        $region57: #{tpu_custom_call.1} parent=23 // pred_check
          %p517 = pneg %p313
        $region58: #{tpu_custom_call.1} parent=23 // pred_check_branch
          %519 = sbr.rel (%p517) target = $region60
        $region59: #{tpu_custom_call.1} parent=23 // pred_region
          %p520 = scmp.lt.s32.totalorder %s29, 1
          %s521 = scalar_select %p520, %s29, 1
          %s522 = smul.addr %s521, 8
          %s523 = smul.addr %s522, 8
          %s524 = scalar_lea.vmem %s10, %s523
        $region60: #{tpu_custom_call.1} parent=23 // pred_fallthru
          _
        // Predicated region
        $region61: #{tpu_custom_call.1} parent=23 // pred_check
          %p525 = pneg %p339
        $region62: #{tpu_custom_call.1} parent=23 // pred_check_branch
          %527 = sbr.rel (%p525) target = $region64
        $region63: #{tpu_custom_call.1} parent=23 // pred_region
          %p528 = scmp.lt.s32.totalorder %s29, 1
          %s529 = scalar_select %p528, %s29, 1
          %s530 = scalar_lea.vmem %s11, %s529
        $region64: #{tpu_custom_call.1} parent=23 // pred_fallthru
          _
        // Predicated region
        $region65: #{tpu_custom_call.1} parent=23 // pred_check
          %p531 = pneg %p365
        $region66: #{tpu_custom_call.1} parent=23 // pred_check_branch
          %533 = sbr.rel (%p531) target = $region68
        $region67: #{tpu_custom_call.1} parent=23 // pred_region
          %p534 = scmp.lt.s32.totalorder %s29, 1
          %s535 = scalar_select %p534, %s29, 1
          %s536 = scalar_lea.vmem %s12, %s535
        $region68: #{tpu_custom_call.1} parent=23 // pred_fallthru
          _
        // Predicated region
        $region69: #{tpu_custom_call.1} parent=23 // pred_check
          %p537 = pneg %p391
        $region70: #{tpu_custom_call.1} parent=23 // pred_check_branch
          %539 = sbr.rel (%p537) target = $region72
        $region71: #{tpu_custom_call.1} parent=23 // pred_region
          %p540 = scmp.lt.s32.totalorder %s29, 1
          %s541 = scalar_select %p540, %s29, 1
          %s542 = scalar_lea.vmem %s13, %s541
        $region72: #{tpu_custom_call.1} parent=23 // pred_fallthru
          _
      $region24: #{tpu_custom_call.1} parent=5 // pred_fallthru
        _
      %p543 = scmp.le.s32.totalorder 1, %s21
      %p544 = scmp.lt.s32.totalorder %s21, 3
      %p545 = pnand %p543, %p544
      %p546 = pneg %p545
      // Predicated region
      $region73: #{tpu_custom_call.1} parent=5 // pred_check
        _
      $region74: #{tpu_custom_call.1} parent=5 // pred_check_branch
        %548 = sbr.rel (%p545) target = $region76
      $region75: #{tpu_custom_call.1} parent=5 // pred_region
        %s549 = ssub.s32 %s21, 1
        %s550 = smul.u32 2, %s30
        %p551 = scmp.lt.s32.totalorder %s550, 1
        %s552 = scalar_select %p551, %s550, 1
        %s553 = smul.addr %s552, 8
        %s554 = scalar_lea.vmem %s0, %s553
        %p555 = pneg %p59
        %p556 = pneg %p56
        %s557 = smul.u32 2, %s30
        %p558 = scmp.lt.s32.totalorder %s557, 1
        %s559 = scalar_select %p558, %s557, 1
        %s560 = scalar_lea.vmem %s1, %s559
        %p561 = pneg %p85
        %p562 = pneg %p82
        %p563 = scmp.lt.s32.totalorder %s31, 1
        %s564 = scalar_select %p563, %s31, 1
        %s565 = smul.addr %s564, 16
        %s566 = smul.addr %s565, 8
        %s567 = scalar_lea.vmem %s2, %s566
        %p568 = pneg %p111
        %p569 = pneg %p108
        %p570 = scmp.lt.s32.totalorder %s31, 1
        %s571 = scalar_select %p570, %s31, 1
        %s572 = smul.addr %s571, 16
        %s573 = smul.addr %s572, 8
        %s574 = scalar_lea.vmem %s3, %s573
        %p575 = pneg %p137
        %p576 = pneg %p134
        %p577 = scmp.lt.s32.totalorder %s31, 1
        %s578 = scalar_select %p577, %s31, 1
        %s579 = smul.addr %s578, 16
        %s580 = smul.addr %s579, 8
        %s581 = scalar_lea.vmem %s4, %s580
        %p582 = pneg %p163
        %p583 = pneg %p160
        %p584 = scmp.lt.s32.totalorder %s31, 1
        %s585 = scalar_select %p584, %s31, 1
        %s586 = smul.addr %s585, 4
        %s587 = smul.addr %s586, 8
        %s588 = scalar_lea.vmem %s5, %s587
        %p589 = pneg %p189
        %p590 = pneg %p186
        %p591 = scmp.lt.s32.totalorder %s31, 1
        %s592 = scalar_select %p591, %s31, 1
        %s593 = scalar_lea.vmem %s6, %s592
        %p594 = pneg %p215
        %p595 = pneg %p212
        %p596 = scmp.lt.s32.totalorder %s31, 1
        %s597 = scalar_select %p596, %s31, 1
        %s598 = scalar_lea.vmem %s7, %s597
        %p599 = pneg %p241
        %p600 = pneg %p238
        %p601 = scmp.lt.s32.totalorder %s31, 1
        %s602 = scalar_select %p601, %s31, 1
        %s603 = smul.addr %s602, 4
        %s604 = smul.addr %s603, 8
        %s605 = scalar_lea.vmem %s8, %s604
        %p606 = pneg %p267
        %p607 = pneg %p264
        %p608 = scmp.lt.s32.totalorder %s31, 1
        %s609 = scalar_select %p608, %s31, 1
        %s610 = scalar_lea.vmem %s9, %s609
        %p611 = pneg %p293
        %p612 = pneg %p290
        %p613 = scmp.lt.s32.totalorder %s31, 1
        %s614 = scalar_select %p613, %s31, 1
        %s615 = smul.addr %s614, 8
        %s616 = smul.addr %s615, 8
        %s617 = scalar_lea.vmem %s10, %s616
        %p618 = pneg %p319
        %p619 = pneg %p316
        %p620 = scmp.lt.s32.totalorder %s31, 1
        %s621 = scalar_select %p620, %s31, 1
        %s622 = scalar_lea.vmem %s11, %s621
        %p623 = pneg %p345
        %p624 = pneg %p342
        %p625 = scmp.lt.s32.totalorder %s31, 1
        %s626 = scalar_select %p625, %s31, 1
        %s627 = scalar_lea.vmem %s12, %s626
        %p628 = pneg %p371
        %p629 = pneg %p368
        %p630 = scmp.lt.s32.totalorder %s31, 1
        %s631 = scalar_select %p630, %s31, 1
        %s632 = scalar_lea.vmem %s13, %s631
        %p633 = pneg %p397
        %p634 = pneg %p394
        %p635 = pneg %p423
        %p636 = pneg %p420
        %s637 = smul.u32 2, %s30
        %p638 = scmp.lt.s32.totalorder %s637, 1
        %s639 = scalar_select %p638, %s637, 1
        %s640 = smul.addr %s639, 8
        %s641 = scalar_lea.vmem %s0, %s640
        %s642 = smul.u32 2, %s30
        %s643 = smul.u32 2, %s30
        %p644 = scmp.lt.s32.totalorder %s643, 1
        %s645 = scalar_select %p644, %s643, 1
        %s646 = scalar_lea.vmem %s1, %s645
        %s647 = smul.u32 2, %s30
        %p648 = scmp.lt.s32.totalorder %s31, 1
        %s649 = scalar_select %p648, %s31, 1
        %s650 = smul.addr %s649, 16
        %s651 = smul.addr %s650, 8
        %s652 = scalar_lea.vmem %s2, %s651
        %p653 = scmp.lt.s32.totalorder %s31, 1
        %s654 = scalar_select %p653, %s31, 1
        %s655 = smul.addr %s654, 16
        %s656 = smul.addr %s655, 8
        %s657 = scalar_lea.vmem %s3, %s656
        %p658 = scmp.lt.s32.totalorder %s31, 1
        %s659 = scalar_select %p658, %s31, 1
        %s660 = smul.addr %s659, 16
        %s661 = smul.addr %s660, 8
        %s662 = scalar_lea.vmem %s4, %s661
        %p663 = scmp.lt.s32.totalorder %s31, 1
        %s664 = scalar_select %p663, %s31, 1
        %s665 = smul.addr %s664, 4
        %s666 = smul.addr %s665, 8
        %s667 = scalar_lea.vmem %s5, %s666
        %p668 = scmp.lt.s32.totalorder %s31, 1
        %s669 = scalar_select %p668, %s31, 1
        %s670 = scalar_lea.vmem %s6, %s669
        %p671 = scmp.lt.s32.totalorder %s31, 1
        %s672 = scalar_select %p671, %s31, 1
        %s673 = scalar_lea.vmem %s7, %s672
        %p674 = scmp.lt.s32.totalorder %s31, 1
        %s675 = scalar_select %p674, %s31, 1
        %s676 = smul.addr %s675, 4
        %s677 = smul.addr %s676, 8
        %s678 = scalar_lea.vmem %s8, %s677
        %p679 = scmp.lt.s32.totalorder %s31, 1
        %s680 = scalar_select %p679, %s31, 1
        %s681 = scalar_lea.vmem %s9, %s680
        %p682 = scmp.lt.s32.totalorder %s31, 1
        %s683 = scalar_select %p682, %s31, 1
        %s684 = smul.addr %s683, 8
        %s685 = smul.addr %s684, 8
        %s686 = scalar_lea.vmem %s10, %s685
        %p687 = scmp.lt.s32.totalorder %s31, 1
        %s688 = scalar_select %p687, %s31, 1
        %s689 = scalar_lea.vmem %s11, %s688
        %p690 = scmp.lt.s32.totalorder %s31, 1
        %s691 = scalar_select %p690, %s31, 1
        %s692 = scalar_lea.vmem %s12, %s691
        %p693 = scmp.lt.s32.totalorder %s31, 1
        %s694 = scalar_select %p693, %s31, 1
        %s695 = scalar_lea.vmem %s13, %s694
        %s696 = smul.u32 2, %s30
        %p697 = scmp.eq.s32.totalorder %s31, 0
        // Predicated region
        $region77: #{tpu_custom_call.1} parent=75 // pred_check
          %p698 = pneg %p697
        $region78: #{tpu_custom_call.1} parent=75 // pred_check_branch
          %700 = sbr.rel (%p698) target = $region80
        $region79: #{tpu_custom_call.1} parent=75 // pred_region
          %v701 = vld [vmem:[%s641] sm:$0xff]
          %v702 = vld [vmem:[%s641 + $0x8] sm:$0xff]
          %vm703 = vcmask 261120
          %704 = vst.msk [vmem:[#allocation2] sm:$0xff] %vm703, %v701
          %705 = vst.msk [vmem:[#allocation2 + $0x8] sm:$0xff] %vm703, %v702
        $region80: #{tpu_custom_call.1} parent=75 // pred_fallthru
          _
        %v706 = vld [vmem:[#allocation2] sm:$0xff]
        %v707 = vld [vmem:[#allocation2 + $0x8] sm:$0xff]
        %v708 = vld [vmem:[%s646] sm:$0x1]
        %v709 = vld [vmem:[%s646 + $0x1] sm:$0x1]
        %v710 = vld [vmem:[%s652] sm:$0xff]
        %v711 = vld [vmem:[%s652 + $0x8] sm:$0xff]
        %v712 = vld [vmem:[%s652 + $0x10] sm:$0xff]
        %v713 = vld [vmem:[%s652 + $0x18] sm:$0xff]
        %vm714 = vcmask 261120
        %v716 = vsel %vm714, %v706, 0
        %v719 = vsel %vm714, %v707, 0
        %721 = vmatprep.subr.mxu0 0.0
        %722 = vmatpush1.msra.mxu0 0.0
        %723 = vmatprep.subr.mxu0 0.0
        %724 = vmatpush1.msra.mxu0 0.0
        %725 = vmatprep.subr.mxu0 0.0
        %726 = vmatpush1.msra.mxu0 0.0
        %727 = vmatprep.subr.mxu0 0.0
        %728 = vmatpush1.msra.mxu0 0.0
        %729 = vmatprep.subr.mxu0 0.0
        %730 = vmatpush1.msra.mxu0 0.0
        %731 = vmatprep.subr.mxu0 0.0
        %732 = vmatpush1.msra.mxu0 0.0
        %733 = vmatprep.subr.mxu0 0.0
        %734 = vmatpush1.msra.mxu0 0.0
        %735 = vmatprep.subr.mxu0 0.0
        %736 = vmatpush1.msra.mxu0 0.0
        %737 = vmatprep.subr.mxu0 0.0
        %738 = vmatpush1.msra.mxu0 0.0
        %739 = vmatprep.subr.mxu0 0.0
        %740 = vmatpush1.msra.mxu0 0.0
        %741 = vmatprep.subr.mxu0 0.0
        %742 = vmatpush1.msra.mxu0 0.0
        %743 = vmatprep.subr.mxu0 0.0
        %744 = vmatpush1.msra.mxu0 0.0
        %745 = vmatprep.subr.mxu0 0.0
        %746 = vmatpush1.msra.mxu0 %v713
        %747 = vmatprep.subr.mxu0 0.0
        %748 = vmatpush1.msra.mxu0 %v712
        %749 = vmatprep.subr.mxu0 0.0
        %750 = vmatpush1.msra.mxu0 %v711
        %751 = vmatprep.subr.mxu0 0.0
        %752 = vmatpush1.msra.mxu0 %v710
        %753 = vmatprep.subr.mxu0 0.0
        %754 = vmatpush2.msra.mxu0 0.0
        %755 = vmatprep.subr.mxu0 0.0
        %756 = vmatpush2.msra.mxu0 0.0
        %757 = vmatprep.subr.mxu0 0.0
        %758 = vmatpush2.msra.mxu0 0.0
        %759 = vmatprep.subr.mxu0 0.0
        %760 = vmatpush2.msra.mxu0 0.0
        %761 = vmatprep.subr.mxu0 0.0
        %762 = vmatpush2.msra.mxu0 0.0
        %763 = vmatprep.subr.mxu0 0.0
        %764 = vmatpush2.msra.mxu0 0.0
        %765 = vmatprep.subr.mxu0 0.0
        %766 = vmatpush2.msra.mxu0 0.0
        %767 = vmatprep.subr.mxu0 0.0
        %768 = vmatpush2.msra.mxu0 0.0
        %769 = vmatprep.subr.mxu0 0.0
        %770 = vmatpush2.msra.mxu0 0.0
        %771 = vmatprep.subr.mxu0 0.0
        %772 = vmatpush2.msra.mxu0 0.0
        %773 = vmatprep.subr.mxu0 0.0
        %774 = vmatpush2.msra.mxu0 0.0
        %775 = vmatprep.subr.mxu0 0.0
        %776 = vmatpush2.msra.mxu0 0.0
        %777 = vmatprep.subr.mxu0 0.0
        %778 = vmatpush2.msra.mxu0 0.0
        %779 = vmatprep.subr.mxu0 0.0
        %780 = vmatpush2.msra.mxu0 0.0
        %781 = vmatprep.subr.mxu0 0.0
        %782 = vmatpush2.msra.mxu0 0.0
        %783 = vmatprep.subr.mxu0 0.0
        %784 = vmatpush2.msra.mxu0 0.0
        %785 = vmatprep.mubr.f32.mxu0 0.0
        %786 = vmatmul.mubr.f32.gmra.mxu0 %v716
        %v787 = vpop.f32.mrf.mxu0
        %v788 = vadd.f32 0.0, %v787
        %v789 = vpop.f32.mrf.mxu0
        %790 = vmatprep.mubr.f32.mxu0 0.0
        %791 = vmatmul.mubr.f32.gmra.mxu0 %v719
        %v792 = vpop.f32.mrf.mxu0
        %v793 = vadd.f32 0.0, %v792
        %v794 = vpop.f32.mrf.mxu0
        %795 = vdwg.mxu0
        %v796 = vld [vmem:[%s657] sm:$0xff]
        %v797 = vld [vmem:[%s657 + $0x8] sm:$0xff]
        %v798 = vld [vmem:[%s657 + $0x10] sm:$0xff]
        %v799 = vld [vmem:[%s657 + $0x18] sm:$0xff]
        %800 = vmatprep.subr.mxu0 0.0
        %801 = vmatpush1.msra.mxu0 0.0
        %802 = vmatprep.subr.mxu0 0.0
        %803 = vmatpush1.msra.mxu0 0.0
        %804 = vmatprep.subr.mxu0 0.0
        %805 = vmatpush1.msra.mxu0 0.0
        %806 = vmatprep.subr.mxu0 0.0
        %807 = vmatpush1.msra.mxu0 0.0
        %808 = vmatprep.subr.mxu0 0.0
        %809 = vmatpush1.msra.mxu0 0.0
        %810 = vmatprep.subr.mxu0 0.0
        %811 = vmatpush1.msra.mxu0 0.0
        %812 = vmatprep.subr.mxu0 0.0
        %813 = vmatpush1.msra.mxu0 0.0
        %814 = vmatprep.subr.mxu0 0.0
        %815 = vmatpush1.msra.mxu0 0.0
        %816 = vmatprep.subr.mxu0 0.0
        %817 = vmatpush1.msra.mxu0 0.0
        %818 = vmatprep.subr.mxu0 0.0
        %819 = vmatpush1.msra.mxu0 0.0
        %820 = vmatprep.subr.mxu0 0.0
        %821 = vmatpush1.msra.mxu0 0.0
        %822 = vmatprep.subr.mxu0 0.0
        %823 = vmatpush1.msra.mxu0 0.0
        %824 = vmatprep.subr.mxu0 0.0
        %825 = vmatpush1.msra.mxu0 %v799
        %826 = vmatprep.subr.mxu0 0.0
        %827 = vmatpush1.msra.mxu0 %v798
        %828 = vmatprep.subr.mxu0 0.0
        %829 = vmatpush1.msra.mxu0 %v797
        %830 = vmatprep.subr.mxu0 0.0
        %831 = vmatpush1.msra.mxu0 %v796
        %832 = vmatprep.subr.mxu0 0.0
        %833 = vmatpush2.msra.mxu0 0.0
        %834 = vmatprep.subr.mxu0 0.0
        %835 = vmatpush2.msra.mxu0 0.0
        %836 = vmatprep.subr.mxu0 0.0
        %837 = vmatpush2.msra.mxu0 0.0
        %838 = vmatprep.subr.mxu0 0.0
        %839 = vmatpush2.msra.mxu0 0.0
        %840 = vmatprep.subr.mxu0 0.0
        %841 = vmatpush2.msra.mxu0 0.0
        %842 = vmatprep.subr.mxu0 0.0
        %843 = vmatpush2.msra.mxu0 0.0
        %844 = vmatprep.subr.mxu0 0.0
        %845 = vmatpush2.msra.mxu0 0.0
        %846 = vmatprep.subr.mxu0 0.0
        %847 = vmatpush2.msra.mxu0 0.0
        %848 = vmatprep.subr.mxu0 0.0
        %849 = vmatpush2.msra.mxu0 0.0
        %850 = vmatprep.subr.mxu0 0.0
        %851 = vmatpush2.msra.mxu0 0.0
        %852 = vmatprep.subr.mxu0 0.0
        %853 = vmatpush2.msra.mxu0 0.0
        %854 = vmatprep.subr.mxu0 0.0
        %855 = vmatpush2.msra.mxu0 0.0
        %856 = vmatprep.subr.mxu0 0.0
        %857 = vmatpush2.msra.mxu0 0.0
        %858 = vmatprep.subr.mxu0 0.0
        %859 = vmatpush2.msra.mxu0 0.0
        %860 = vmatprep.subr.mxu0 0.0
        %861 = vmatpush2.msra.mxu0 0.0
        %862 = vmatprep.subr.mxu0 0.0
        %863 = vmatpush2.msra.mxu0 0.0
        %864 = vmatprep.mubr.f32.mxu0 0.0
        %865 = vmatmul.mubr.f32.gmra.mxu0 %v716
        %v866 = vpop.f32.mrf.mxu0
        %v867 = vadd.f32 0.0, %v866
        %v868 = vpop.f32.mrf.mxu0
        %869 = vmatprep.mubr.f32.mxu0 0.0
        %870 = vmatmul.mubr.f32.gmra.mxu0 %v719
        %v871 = vpop.f32.mrf.mxu0
        %v872 = vadd.f32 0.0, %v871
        %v873 = vpop.f32.mrf.mxu0
        %874 = vdwg.mxu0
        %v875 = vld [vmem:[%s662] sm:$0xff]
        %v876 = vld [vmem:[%s662 + $0x8] sm:$0xff]
        %v877 = vld [vmem:[%s662 + $0x10] sm:$0xff]
        %v878 = vld [vmem:[%s662 + $0x18] sm:$0xff]
        %879 = vmatprep.subr.mxu0 0.0
        %880 = vmatpush1.msra.mxu0 0.0
        %881 = vmatprep.subr.mxu0 0.0
        %882 = vmatpush1.msra.mxu0 0.0
        %883 = vmatprep.subr.mxu0 0.0
        %884 = vmatpush1.msra.mxu0 0.0
        %885 = vmatprep.subr.mxu0 0.0
        %886 = vmatpush1.msra.mxu0 0.0
        %887 = vmatprep.subr.mxu0 0.0
        %888 = vmatpush1.msra.mxu0 0.0
        %889 = vmatprep.subr.mxu0 0.0
        %890 = vmatpush1.msra.mxu0 0.0
        %891 = vmatprep.subr.mxu0 0.0
        %892 = vmatpush1.msra.mxu0 0.0
        %893 = vmatprep.subr.mxu0 0.0
        %894 = vmatpush1.msra.mxu0 0.0
        %895 = vmatprep.subr.mxu0 0.0
        %896 = vmatpush1.msra.mxu0 0.0
        %897 = vmatprep.subr.mxu0 0.0
        %898 = vmatpush1.msra.mxu0 0.0
        %899 = vmatprep.subr.mxu0 0.0
        %900 = vmatpush1.msra.mxu0 0.0
        %901 = vmatprep.subr.mxu0 0.0
        %902 = vmatpush1.msra.mxu0 0.0
        %903 = vmatprep.subr.mxu0 0.0
        %904 = vmatpush1.msra.mxu0 %v878
        %905 = vmatprep.subr.mxu0 0.0
        %906 = vmatpush1.msra.mxu0 %v877
        %907 = vmatprep.subr.mxu0 0.0
        %908 = vmatpush1.msra.mxu0 %v876
        %909 = vmatprep.subr.mxu0 0.0
        %910 = vmatpush1.msra.mxu0 %v875
        %911 = vmatprep.subr.mxu0 0.0
        %912 = vmatpush2.msra.mxu0 0.0
        %913 = vmatprep.subr.mxu0 0.0
        %914 = vmatpush2.msra.mxu0 0.0
        %915 = vmatprep.subr.mxu0 0.0
        %916 = vmatpush2.msra.mxu0 0.0
        %917 = vmatprep.subr.mxu0 0.0
        %918 = vmatpush2.msra.mxu0 0.0
        %919 = vmatprep.subr.mxu0 0.0
        %920 = vmatpush2.msra.mxu0 0.0
        %921 = vmatprep.subr.mxu0 0.0
        %922 = vmatpush2.msra.mxu0 0.0
        %923 = vmatprep.subr.mxu0 0.0
        %924 = vmatpush2.msra.mxu0 0.0
        %925 = vmatprep.subr.mxu0 0.0
        %926 = vmatpush2.msra.mxu0 0.0
        %927 = vmatprep.subr.mxu0 0.0
        %928 = vmatpush2.msra.mxu0 0.0
        %929 = vmatprep.subr.mxu0 0.0
        %930 = vmatpush2.msra.mxu0 0.0
        %931 = vmatprep.subr.mxu0 0.0
        %932 = vmatpush2.msra.mxu0 0.0
        %933 = vmatprep.subr.mxu0 0.0
        %934 = vmatpush2.msra.mxu0 0.0
        %935 = vmatprep.subr.mxu0 0.0
        %936 = vmatpush2.msra.mxu0 0.0
        %937 = vmatprep.subr.mxu0 0.0
        %938 = vmatpush2.msra.mxu0 0.0
        %939 = vmatprep.subr.mxu0 0.0
        %940 = vmatpush2.msra.mxu0 0.0
        %941 = vmatprep.subr.mxu0 0.0
        %942 = vmatpush2.msra.mxu0 0.0
        %943 = vmatprep.mubr.f32.mxu0 0.0
        %944 = vmatmul.mubr.f32.gmra.mxu0 %v716
        %v945 = vpop.f32.mrf.mxu0
        %v946 = vadd.f32 0.0, %v945
        %v947 = vpop.f32.mrf.mxu0
        %948 = vmatprep.mubr.f32.mxu0 0.0
        %949 = vmatmul.mubr.f32.gmra.mxu0 %v719
        %v950 = vpop.f32.mrf.mxu0
        %v951 = vadd.f32 0.0, %v950
        %v952 = vpop.f32.mrf.mxu0
        %953 = vdwg.mxu0
        %v956 = vlaneseq
        %v957 = vshrl.u32 %v956, 7
        %v958 = vsub.s32 0, %v957
        %v959 = vrot.slane %v708, %v958
        %v960 = vlaneseq
        %v961 = vshrl.u32 %v960, 7
        %v962 = vsub.s32 0, %v961
        %v963 = vrot.slane %v709, %v962
        %vm966 = vcmask 64512
        %v968 = vsel %vm966, %v788, 0
        %v971 = vsel %vm966, %v867, 0
        %973 = vmatprep.subr.mxu0 0.0
        %974 = vmatpush1.xpose.msra.mxu0 0.0
        %975 = vmatprep.subr.mxu0 0.0
        %976 = vmatpush1.xpose.msra.mxu0 0.0
        %977 = vmatprep.subr.mxu0 0.0
        %978 = vmatpush1.xpose.msra.mxu0 0.0
        %979 = vmatprep.subr.mxu0 0.0
        %980 = vmatpush1.xpose.msra.mxu0 0.0
        %981 = vmatprep.subr.mxu0 0.0
        %982 = vmatpush1.xpose.msra.mxu0 0.0
        %983 = vmatprep.subr.mxu0 0.0
        %984 = vmatpush1.xpose.msra.mxu0 0.0
        %985 = vmatprep.subr.mxu0 0.0
        %986 = vmatpush1.xpose.msra.mxu0 0.0
        %987 = vmatprep.subr.mxu0 0.0
        %988 = vmatpush1.xpose.msra.mxu0 0.0
        %989 = vmatprep.subr.mxu0 0.0
        %990 = vmatpush1.xpose.msra.mxu0 0.0
        %991 = vmatprep.subr.mxu0 0.0
        %992 = vmatpush1.xpose.msra.mxu0 0.0
        %993 = vmatprep.subr.mxu0 0.0
        %994 = vmatpush1.xpose.msra.mxu0 0.0
        %995 = vmatprep.subr.mxu0 0.0
        %996 = vmatpush1.xpose.msra.mxu0 0.0
        %997 = vmatprep.subr.mxu0 0.0
        %998 = vmatpush1.xpose.msra.mxu0 0.0
        %999 = vmatprep.subr.mxu0 0.0
        %1000 = vmatpush1.xpose.msra.mxu0 0.0
        %1001 = vmatprep.subr.mxu0 0.0
        %1002 = vmatpush1.xpose.msra.mxu0 0.0
        %1003 = vmatprep.subr.mxu0 0.0
        %1004 = vmatpush1.xpose.msra.mxu0 %v971
        %1005 = vmatprep.subr.mxu0 0.0
        %1006 = vmatpush2.xpose.msra.mxu0 0.0
        %1007 = vmatprep.subr.mxu0 0.0
        %1008 = vmatpush2.xpose.msra.mxu0 0.0
        %1009 = vmatprep.subr.mxu0 0.0
        %1010 = vmatpush2.xpose.msra.mxu0 0.0
        %1011 = vmatprep.subr.mxu0 0.0
        %1012 = vmatpush2.xpose.msra.mxu0 0.0
        %1013 = vmatprep.subr.mxu0 0.0
        %1014 = vmatpush2.xpose.msra.mxu0 0.0
        %1015 = vmatprep.subr.mxu0 0.0
        %1016 = vmatpush2.xpose.msra.mxu0 0.0
        %1017 = vmatprep.subr.mxu0 0.0
        %1018 = vmatpush2.xpose.msra.mxu0 0.0
        %1019 = vmatprep.subr.mxu0 0.0
        %1020 = vmatpush2.xpose.msra.mxu0 0.0
        %1021 = vmatprep.subr.mxu0 0.0
        %1022 = vmatpush2.xpose.msra.mxu0 0.0
        %1023 = vmatprep.subr.mxu0 0.0
        %1024 = vmatpush2.xpose.msra.mxu0 0.0
        %1025 = vmatprep.subr.mxu0 0.0
        %1026 = vmatpush2.xpose.msra.mxu0 0.0
        %1027 = vmatprep.subr.mxu0 0.0
        %1028 = vmatpush2.xpose.msra.mxu0 0.0
        %1029 = vmatprep.subr.mxu0 0.0
        %1030 = vmatpush2.xpose.msra.mxu0 0.0
        %1031 = vmatprep.subr.mxu0 0.0
        %1032 = vmatpush2.xpose.msra.mxu0 0.0
        %1033 = vmatprep.subr.mxu0 0.0
        %1034 = vmatpush2.xpose.msra.mxu0 0.0
        %1035 = vmatprep.subr.mxu0 0.0
        %1036 = vmatpush2.xpose.msra.mxu0 0.0
        %1037 = vmatprep.mubr.f32.mxu0 0.0
        %1038 = vmatmul.mubr.f32.gmra.mxu0 %v968
        %v1039 = vpop.f32.mrf.mxu0
        %v1040 = vadd.f32 %v959, %v1039
        %v1041 = vpop.f32.mrf.mxu0
        %1042 = vdwg.mxu0
        %v1044 = vsel %vm966, %v793, 0
        %v1047 = vsel %vm966, %v872, 0
        %1049 = vmatprep.subr.mxu0 0.0
        %1050 = vmatpush1.xpose.msra.mxu0 0.0
        %1051 = vmatprep.subr.mxu0 0.0
        %1052 = vmatpush1.xpose.msra.mxu0 0.0
        %1053 = vmatprep.subr.mxu0 0.0
        %1054 = vmatpush1.xpose.msra.mxu0 0.0
        %1055 = vmatprep.subr.mxu0 0.0
        %1056 = vmatpush1.xpose.msra.mxu0 0.0
        %1057 = vmatprep.subr.mxu0 0.0
        %1058 = vmatpush1.xpose.msra.mxu0 0.0
        %1059 = vmatprep.subr.mxu0 0.0
        %1060 = vmatpush1.xpose.msra.mxu0 0.0
        %1061 = vmatprep.subr.mxu0 0.0
        %1062 = vmatpush1.xpose.msra.mxu0 0.0
        %1063 = vmatprep.subr.mxu0 0.0
        %1064 = vmatpush1.xpose.msra.mxu0 0.0
        %1065 = vmatprep.subr.mxu0 0.0
        %1066 = vmatpush1.xpose.msra.mxu0 0.0
        %1067 = vmatprep.subr.mxu0 0.0
        %1068 = vmatpush1.xpose.msra.mxu0 0.0
        %1069 = vmatprep.subr.mxu0 0.0
        %1070 = vmatpush1.xpose.msra.mxu0 0.0
        %1071 = vmatprep.subr.mxu0 0.0
        %1072 = vmatpush1.xpose.msra.mxu0 0.0
        %1073 = vmatprep.subr.mxu0 0.0
        %1074 = vmatpush1.xpose.msra.mxu0 0.0
        %1075 = vmatprep.subr.mxu0 0.0
        %1076 = vmatpush1.xpose.msra.mxu0 0.0
        %1077 = vmatprep.subr.mxu0 0.0
        %1078 = vmatpush1.xpose.msra.mxu0 0.0
        %1079 = vmatprep.subr.mxu0 0.0
        %1080 = vmatpush1.xpose.msra.mxu0 %v1047
        %1081 = vmatprep.subr.mxu0 0.0
        %1082 = vmatpush2.xpose.msra.mxu0 0.0
        %1083 = vmatprep.subr.mxu0 0.0
        %1084 = vmatpush2.xpose.msra.mxu0 0.0
        %1085 = vmatprep.subr.mxu0 0.0
        %1086 = vmatpush2.xpose.msra.mxu0 0.0
        %1087 = vmatprep.subr.mxu0 0.0
        %1088 = vmatpush2.xpose.msra.mxu0 0.0
        %1089 = vmatprep.subr.mxu0 0.0
        %1090 = vmatpush2.xpose.msra.mxu0 0.0
        %1091 = vmatprep.subr.mxu0 0.0
        %1092 = vmatpush2.xpose.msra.mxu0 0.0
        %1093 = vmatprep.subr.mxu0 0.0
        %1094 = vmatpush2.xpose.msra.mxu0 0.0
        %1095 = vmatprep.subr.mxu0 0.0
        %1096 = vmatpush2.xpose.msra.mxu0 0.0
        %1097 = vmatprep.subr.mxu0 0.0
        %1098 = vmatpush2.xpose.msra.mxu0 0.0
        %1099 = vmatprep.subr.mxu0 0.0
        %1100 = vmatpush2.xpose.msra.mxu0 0.0
        %1101 = vmatprep.subr.mxu0 0.0
        %1102 = vmatpush2.xpose.msra.mxu0 0.0
        %1103 = vmatprep.subr.mxu0 0.0
        %1104 = vmatpush2.xpose.msra.mxu0 0.0
        %1105 = vmatprep.subr.mxu0 0.0
        %1106 = vmatpush2.xpose.msra.mxu0 0.0
        %1107 = vmatprep.subr.mxu0 0.0
        %1108 = vmatpush2.xpose.msra.mxu0 0.0
        %1109 = vmatprep.subr.mxu0 0.0
        %1110 = vmatpush2.xpose.msra.mxu0 0.0
        %1111 = vmatprep.subr.mxu0 0.0
        %1112 = vmatpush2.xpose.msra.mxu0 0.0
        %1113 = vmatprep.mubr.f32.mxu0 0.0
        %1114 = vmatmul.mubr.f32.gmra.mxu0 %v1044
        %v1115 = vpop.f32.mrf.mxu0
        %v1116 = vadd.f32 %v963, %v1115
        %v1117 = vpop.f32.mrf.mxu0
        %1118 = vdwg.mxu0
        %v1119 = vsel %vm966, %v1040, -inf
        %1120 = vmax.xlane.f32.xlu0 %v1119
        %v1121 = vpop.xlane.xlu0 %1120
        %v1122 = vsel %vm966, %v1116, -inf
        %1123 = vmax.xlane.f32.xlu0 %v1122
        %v1124 = vpop.xlane.xlu0 %1123
        %v1125 = vsub.f32 %v1040, %v1121
        %v1126 = vsub.f32 %v1116, %v1124
        %v1127 = vmul.f32 %v1125, 1.442695
        %v1128 = vpow.pop %v1127
        %v1129 = vmul.f32 %v1126, 1.442695
        %v1130 = vpow.pop %v1129
        %v1131 = vsel %vm966, %v1128, 0.0
        %1132 = vadd.xlane.f32.xlu0 %v1131
        %v1133 = vpop.xlane.xlu0 %1132
        %v1134 = vsel %vm966, %v1130, 0.0
        %1135 = vadd.xlane.f32.xlu0 %v1134
        %v1136 = vpop.xlane.xlu0 %1135
        %v1137 = vrcp.pop %v1133
        %v1138 = vrcp.pop %v1136
        %v1139 = vmul.f32 %v1128, %v1137
        %v1140 = vmul.f32 %v1130, %v1138
        %v1142 = vsel %vm966, %v1139, 0
        %1144 = vmatprep.subr.mxu0 0.0
        %1145 = vmatpush1.msra.mxu0 0.0
        %1146 = vmatprep.subr.mxu0 0.0
        %1147 = vmatpush1.msra.mxu0 0.0
        %1148 = vmatprep.subr.mxu0 0.0
        %1149 = vmatpush1.msra.mxu0 0.0
        %1150 = vmatprep.subr.mxu0 0.0
        %1151 = vmatpush1.msra.mxu0 0.0
        %1152 = vmatprep.subr.mxu0 0.0
        %1153 = vmatpush1.msra.mxu0 0.0
        %1154 = vmatprep.subr.mxu0 0.0
        %1155 = vmatpush1.msra.mxu0 0.0
        %1156 = vmatprep.subr.mxu0 0.0
        %1157 = vmatpush1.msra.mxu0 0.0
        %1158 = vmatprep.subr.mxu0 0.0
        %1159 = vmatpush1.msra.mxu0 0.0
        %1160 = vmatprep.subr.mxu0 0.0
        %1161 = vmatpush1.msra.mxu0 0.0
        %1162 = vmatprep.subr.mxu0 0.0
        %1163 = vmatpush1.msra.mxu0 0.0
        %1164 = vmatprep.subr.mxu0 0.0
        %1165 = vmatpush1.msra.mxu0 0.0
        %1166 = vmatprep.subr.mxu0 0.0
        %1167 = vmatpush1.msra.mxu0 0.0
        %1168 = vmatprep.subr.mxu0 0.0
        %1169 = vmatpush1.msra.mxu0 0.0
        %1170 = vmatprep.subr.mxu0 0.0
        %1171 = vmatpush1.msra.mxu0 0.0
        %1172 = vmatprep.subr.mxu0 0.0
        %1173 = vmatpush1.msra.mxu0 0.0
        %1174 = vmatprep.subr.mxu0 0.0
        %1175 = vmatpush1.msra.mxu0 %v946
        %1176 = vmatprep.subr.mxu0 0.0
        %1177 = vmatpush2.msra.mxu0 0.0
        %1178 = vmatprep.subr.mxu0 0.0
        %1179 = vmatpush2.msra.mxu0 0.0
        %1180 = vmatprep.subr.mxu0 0.0
        %1181 = vmatpush2.msra.mxu0 0.0
        %1182 = vmatprep.subr.mxu0 0.0
        %1183 = vmatpush2.msra.mxu0 0.0
        %1184 = vmatprep.subr.mxu0 0.0
        %1185 = vmatpush2.msra.mxu0 0.0
        %1186 = vmatprep.subr.mxu0 0.0
        %1187 = vmatpush2.msra.mxu0 0.0
        %1188 = vmatprep.subr.mxu0 0.0
        %1189 = vmatpush2.msra.mxu0 0.0
        %1190 = vmatprep.subr.mxu0 0.0
        %1191 = vmatpush2.msra.mxu0 0.0
        %1192 = vmatprep.subr.mxu0 0.0
        %1193 = vmatpush2.msra.mxu0 0.0
        %1194 = vmatprep.subr.mxu0 0.0
        %1195 = vmatpush2.msra.mxu0 0.0
        %1196 = vmatprep.subr.mxu0 0.0
        %1197 = vmatpush2.msra.mxu0 0.0
        %1198 = vmatprep.subr.mxu0 0.0
        %1199 = vmatpush2.msra.mxu0 0.0
        %1200 = vmatprep.subr.mxu0 0.0
        %1201 = vmatpush2.msra.mxu0 0.0
        %1202 = vmatprep.subr.mxu0 0.0
        %1203 = vmatpush2.msra.mxu0 0.0
        %1204 = vmatprep.subr.mxu0 0.0
        %1205 = vmatpush2.msra.mxu0 0.0
        %1206 = vmatprep.subr.mxu0 0.0
        %1207 = vmatpush2.msra.mxu0 0.0
        %1208 = vmatprep.mubr.f32.mxu0 0.0
        %1209 = vmatmul.mubr.f32.gmra.mxu0 %v1142
        %v1210 = vpop.f32.mrf.mxu0
        %v1211 = vadd.f32 0.0, %v1210
        %v1212 = vpop.f32.mrf.mxu0
        %1213 = vdwg.mxu0
        %v1215 = vsel %vm966, %v1140, 0
        %1217 = vmatprep.subr.mxu0 0.0
        %1218 = vmatpush1.msra.mxu0 0.0
        %1219 = vmatprep.subr.mxu0 0.0
        %1220 = vmatpush1.msra.mxu0 0.0
        %1221 = vmatprep.subr.mxu0 0.0
        %1222 = vmatpush1.msra.mxu0 0.0
        %1223 = vmatprep.subr.mxu0 0.0
        %1224 = vmatpush1.msra.mxu0 0.0
        %1225 = vmatprep.subr.mxu0 0.0
        %1226 = vmatpush1.msra.mxu0 0.0
        %1227 = vmatprep.subr.mxu0 0.0
        %1228 = vmatpush1.msra.mxu0 0.0
        %1229 = vmatprep.subr.mxu0 0.0
        %1230 = vmatpush1.msra.mxu0 0.0
        %1231 = vmatprep.subr.mxu0 0.0
        %1232 = vmatpush1.msra.mxu0 0.0
        %1233 = vmatprep.subr.mxu0 0.0
        %1234 = vmatpush1.msra.mxu0 0.0
        %1235 = vmatprep.subr.mxu0 0.0
        %1236 = vmatpush1.msra.mxu0 0.0
        %1237 = vmatprep.subr.mxu0 0.0
        %1238 = vmatpush1.msra.mxu0 0.0
        %1239 = vmatprep.subr.mxu0 0.0
        %1240 = vmatpush1.msra.mxu0 0.0
        %1241 = vmatprep.subr.mxu0 0.0
        %1242 = vmatpush1.msra.mxu0 0.0
        %1243 = vmatprep.subr.mxu0 0.0
        %1244 = vmatpush1.msra.mxu0 0.0
        %1245 = vmatprep.subr.mxu0 0.0
        %1246 = vmatpush1.msra.mxu0 0.0
        %1247 = vmatprep.subr.mxu0 0.0
        %1248 = vmatpush1.msra.mxu0 %v951
        %1249 = vmatprep.subr.mxu0 0.0
        %1250 = vmatpush2.msra.mxu0 0.0
        %1251 = vmatprep.subr.mxu0 0.0
        %1252 = vmatpush2.msra.mxu0 0.0
        %1253 = vmatprep.subr.mxu0 0.0
        %1254 = vmatpush2.msra.mxu0 0.0
        %1255 = vmatprep.subr.mxu0 0.0
        %1256 = vmatpush2.msra.mxu0 0.0
        %1257 = vmatprep.subr.mxu0 0.0
        %1258 = vmatpush2.msra.mxu0 0.0
        %1259 = vmatprep.subr.mxu0 0.0
        %1260 = vmatpush2.msra.mxu0 0.0
        %1261 = vmatprep.subr.mxu0 0.0
        %1262 = vmatpush2.msra.mxu0 0.0
        %1263 = vmatprep.subr.mxu0 0.0
        %1264 = vmatpush2.msra.mxu0 0.0
        %1265 = vmatprep.subr.mxu0 0.0
        %1266 = vmatpush2.msra.mxu0 0.0
        %1267 = vmatprep.subr.mxu0 0.0
        %1268 = vmatpush2.msra.mxu0 0.0
        %1269 = vmatprep.subr.mxu0 0.0
        %1270 = vmatpush2.msra.mxu0 0.0
        %1271 = vmatprep.subr.mxu0 0.0
        %1272 = vmatpush2.msra.mxu0 0.0
        %1273 = vmatprep.subr.mxu0 0.0
        %1274 = vmatpush2.msra.mxu0 0.0
        %1275 = vmatprep.subr.mxu0 0.0
        %1276 = vmatpush2.msra.mxu0 0.0
        %1277 = vmatprep.subr.mxu0 0.0
        %1278 = vmatpush2.msra.mxu0 0.0
        %1279 = vmatprep.subr.mxu0 0.0
        %1280 = vmatpush2.msra.mxu0 0.0
        %1281 = vmatprep.mubr.f32.mxu0 0.0
        %1282 = vmatmul.mubr.f32.gmra.mxu0 %v1215
        %v1283 = vpop.f32.mrf.mxu0
        %v1284 = vadd.f32 0.0, %v1283
        %v1285 = vpop.f32.mrf.mxu0
        %1286 = vdwg.mxu0
        %v1287 = vld [vmem:[%s667] sm:$0xff]
        %s1288 = scalar_lea.vmem %s652, 32
        %v1289 = vld [vmem:[%s1288] sm:$0xff]
        %v1290 = vld [vmem:[%s1288 + $0x8] sm:$0xff]
        %v1291 = vld [vmem:[%s1288 + $0x10] sm:$0xff]
        %v1292 = vld [vmem:[%s1288 + $0x18] sm:$0xff]
        %1293 = vmatprep.subr.mxu0 0.0
        %1294 = vmatpush1.msra.mxu0 0.0
        %1295 = vmatprep.subr.mxu0 0.0
        %1296 = vmatpush1.msra.mxu0 0.0
        %1297 = vmatprep.subr.mxu0 0.0
        %1298 = vmatpush1.msra.mxu0 0.0
        %1299 = vmatprep.subr.mxu0 0.0
        %1300 = vmatpush1.msra.mxu0 0.0
        %1301 = vmatprep.subr.mxu0 0.0
        %1302 = vmatpush1.msra.mxu0 0.0
        %1303 = vmatprep.subr.mxu0 0.0
        %1304 = vmatpush1.msra.mxu0 0.0
        %1305 = vmatprep.subr.mxu0 0.0
        %1306 = vmatpush1.msra.mxu0 0.0
        %1307 = vmatprep.subr.mxu0 0.0
        %1308 = vmatpush1.msra.mxu0 0.0
        %1309 = vmatprep.subr.mxu0 0.0
        %1310 = vmatpush1.msra.mxu0 0.0
        %1311 = vmatprep.subr.mxu0 0.0
        %1312 = vmatpush1.msra.mxu0 0.0
        %1313 = vmatprep.subr.mxu0 0.0
        %1314 = vmatpush1.msra.mxu0 0.0
        %1315 = vmatprep.subr.mxu0 0.0
        %1316 = vmatpush1.msra.mxu0 0.0
        %1317 = vmatprep.subr.mxu0 0.0
        %1318 = vmatpush1.msra.mxu0 %v1292
        %1319 = vmatprep.subr.mxu0 0.0
        %1320 = vmatpush1.msra.mxu0 %v1291
        %1321 = vmatprep.subr.mxu0 0.0
        %1322 = vmatpush1.msra.mxu0 %v1290
        %1323 = vmatprep.subr.mxu0 0.0
        %1324 = vmatpush1.msra.mxu0 %v1289
        %1325 = vmatprep.subr.mxu0 0.0
        %1326 = vmatpush2.msra.mxu0 0.0
        %1327 = vmatprep.subr.mxu0 0.0
        %1328 = vmatpush2.msra.mxu0 0.0
        %1329 = vmatprep.subr.mxu0 0.0
        %1330 = vmatpush2.msra.mxu0 0.0
        %1331 = vmatprep.subr.mxu0 0.0
        %1332 = vmatpush2.msra.mxu0 0.0
        %1333 = vmatprep.subr.mxu0 0.0
        %1334 = vmatpush2.msra.mxu0 0.0
        %1335 = vmatprep.subr.mxu0 0.0
        %1336 = vmatpush2.msra.mxu0 0.0
        %1337 = vmatprep.subr.mxu0 0.0
        %1338 = vmatpush2.msra.mxu0 0.0
        %1339 = vmatprep.subr.mxu0 0.0
        %1340 = vmatpush2.msra.mxu0 0.0
        %1341 = vmatprep.subr.mxu0 0.0
        %1342 = vmatpush2.msra.mxu0 0.0
        %1343 = vmatprep.subr.mxu0 0.0
        %1344 = vmatpush2.msra.mxu0 0.0
        %1345 = vmatprep.subr.mxu0 0.0
        %1346 = vmatpush2.msra.mxu0 0.0
        %1347 = vmatprep.subr.mxu0 0.0
        %1348 = vmatpush2.msra.mxu0 0.0
        %1349 = vmatprep.subr.mxu0 0.0
        %1350 = vmatpush2.msra.mxu0 0.0
        %1351 = vmatprep.subr.mxu0 0.0
        %1352 = vmatpush2.msra.mxu0 0.0
        %1353 = vmatprep.subr.mxu0 0.0
        %1354 = vmatpush2.msra.mxu0 0.0
        %1355 = vmatprep.subr.mxu0 0.0
        %1356 = vmatpush2.msra.mxu0 0.0
        %1357 = vmatprep.mubr.f32.mxu0 0.0
        %1358 = vmatmul.mubr.f32.gmra.mxu0 %v716
        %v1359 = vpop.f32.mrf.mxu0
        %v1360 = vadd.f32 0.0, %v1359
        %v1361 = vpop.f32.mrf.mxu0
        %1362 = vmatprep.mubr.f32.mxu0 0.0
        %1363 = vmatmul.mubr.f32.gmra.mxu0 %v719
        %v1364 = vpop.f32.mrf.mxu0
        %v1365 = vadd.f32 0.0, %v1364
        %v1366 = vpop.f32.mrf.mxu0
        %1367 = vdwg.mxu0
        %s1368 = scalar_lea.vmem %s657, 32
        %v1369 = vld [vmem:[%s1368] sm:$0xff]
        %v1370 = vld [vmem:[%s1368 + $0x8] sm:$0xff]
        %v1371 = vld [vmem:[%s1368 + $0x10] sm:$0xff]
        %v1372 = vld [vmem:[%s1368 + $0x18] sm:$0xff]
        %1373 = vmatprep.subr.mxu0 0.0
        %1374 = vmatpush1.msra.mxu0 0.0
        %1375 = vmatprep.subr.mxu0 0.0
        %1376 = vmatpush1.msra.mxu0 0.0
        %1377 = vmatprep.subr.mxu0 0.0
        %1378 = vmatpush1.msra.mxu0 0.0
        %1379 = vmatprep.subr.mxu0 0.0
        %1380 = vmatpush1.msra.mxu0 0.0
        %1381 = vmatprep.subr.mxu0 0.0
        %1382 = vmatpush1.msra.mxu0 0.0
        %1383 = vmatprep.subr.mxu0 0.0
        %1384 = vmatpush1.msra.mxu0 0.0
        %1385 = vmatprep.subr.mxu0 0.0
        %1386 = vmatpush1.msra.mxu0 0.0
        %1387 = vmatprep.subr.mxu0 0.0
        %1388 = vmatpush1.msra.mxu0 0.0
        %1389 = vmatprep.subr.mxu0 0.0
        %1390 = vmatpush1.msra.mxu0 0.0
        %1391 = vmatprep.subr.mxu0 0.0
        %1392 = vmatpush1.msra.mxu0 0.0
        %1393 = vmatprep.subr.mxu0 0.0
        %1394 = vmatpush1.msra.mxu0 0.0
        %1395 = vmatprep.subr.mxu0 0.0
        %1396 = vmatpush1.msra.mxu0 0.0
        %1397 = vmatprep.subr.mxu0 0.0
        %1398 = vmatpush1.msra.mxu0 %v1372
        %1399 = vmatprep.subr.mxu0 0.0
        %1400 = vmatpush1.msra.mxu0 %v1371
        %1401 = vmatprep.subr.mxu0 0.0
        %1402 = vmatpush1.msra.mxu0 %v1370
        %1403 = vmatprep.subr.mxu0 0.0
        %1404 = vmatpush1.msra.mxu0 %v1369
        %1405 = vmatprep.subr.mxu0 0.0
        %1406 = vmatpush2.msra.mxu0 0.0
        %1407 = vmatprep.subr.mxu0 0.0
        %1408 = vmatpush2.msra.mxu0 0.0
        %1409 = vmatprep.subr.mxu0 0.0
        %1410 = vmatpush2.msra.mxu0 0.0
        %1411 = vmatprep.subr.mxu0 0.0
        %1412 = vmatpush2.msra.mxu0 0.0
        %1413 = vmatprep.subr.mxu0 0.0
        %1414 = vmatpush2.msra.mxu0 0.0
        %1415 = vmatprep.subr.mxu0 0.0
        %1416 = vmatpush2.msra.mxu0 0.0
        %1417 = vmatprep.subr.mxu0 0.0
        %1418 = vmatpush2.msra.mxu0 0.0
        %1419 = vmatprep.subr.mxu0 0.0
        %1420 = vmatpush2.msra.mxu0 0.0
        %1421 = vmatprep.subr.mxu0 0.0
        %1422 = vmatpush2.msra.mxu0 0.0
        %1423 = vmatprep.subr.mxu0 0.0
        %1424 = vmatpush2.msra.mxu0 0.0
        %1425 = vmatprep.subr.mxu0 0.0
        %1426 = vmatpush2.msra.mxu0 0.0
        %1427 = vmatprep.subr.mxu0 0.0
        %1428 = vmatpush2.msra.mxu0 0.0
        %1429 = vmatprep.subr.mxu0 0.0
        %1430 = vmatpush2.msra.mxu0 0.0
        %1431 = vmatprep.subr.mxu0 0.0
        %1432 = vmatpush2.msra.mxu0 0.0
        %1433 = vmatprep.subr.mxu0 0.0
        %1434 = vmatpush2.msra.mxu0 0.0
        %1435 = vmatprep.subr.mxu0 0.0
        %1436 = vmatpush2.msra.mxu0 0.0
        %1437 = vmatprep.mubr.f32.mxu0 0.0
        %1438 = vmatmul.mubr.f32.gmra.mxu0 %v716
        %v1439 = vpop.f32.mrf.mxu0
        %v1440 = vadd.f32 0.0, %v1439
        %v1441 = vpop.f32.mrf.mxu0
        %1442 = vmatprep.mubr.f32.mxu0 0.0
        %1443 = vmatmul.mubr.f32.gmra.mxu0 %v719
        %v1444 = vpop.f32.mrf.mxu0
        %v1445 = vadd.f32 0.0, %v1444
        %v1446 = vpop.f32.mrf.mxu0
        %1447 = vdwg.mxu0
        %s1448 = scalar_lea.vmem %s662, 32
        %v1449 = vld [vmem:[%s1448] sm:$0xff]
        %v1450 = vld [vmem:[%s1448 + $0x8] sm:$0xff]
        %v1451 = vld [vmem:[%s1448 + $0x10] sm:$0xff]
        %v1452 = vld [vmem:[%s1448 + $0x18] sm:$0xff]
        %1453 = vmatprep.subr.mxu0 0.0
        %1454 = vmatpush1.msra.mxu0 0.0
        %1455 = vmatprep.subr.mxu0 0.0
        %1456 = vmatpush1.msra.mxu0 0.0
        %1457 = vmatprep.subr.mxu0 0.0
        %1458 = vmatpush1.msra.mxu0 0.0
        %1459 = vmatprep.subr.mxu0 0.0
        %1460 = vmatpush1.msra.mxu0 0.0
        %1461 = vmatprep.subr.mxu0 0.0
        %1462 = vmatpush1.msra.mxu0 0.0
        %1463 = vmatprep.subr.mxu0 0.0
        %1464 = vmatpush1.msra.mxu0 0.0
        %1465 = vmatprep.subr.mxu0 0.0
        %1466 = vmatpush1.msra.mxu0 0.0
        %1467 = vmatprep.subr.mxu0 0.0
        %1468 = vmatpush1.msra.mxu0 0.0
        %1469 = vmatprep.subr.mxu0 0.0
        %1470 = vmatpush1.msra.mxu0 0.0
        %1471 = vmatprep.subr.mxu0 0.0
        %1472 = vmatpush1.msra.mxu0 0.0
        %1473 = vmatprep.subr.mxu0 0.0
        %1474 = vmatpush1.msra.mxu0 0.0
        %1475 = vmatprep.subr.mxu0 0.0
        %1476 = vmatpush1.msra.mxu0 0.0
        %1477 = vmatprep.subr.mxu0 0.0
        %1478 = vmatpush1.msra.mxu0 %v1452
        %1479 = vmatprep.subr.mxu0 0.0
        %1480 = vmatpush1.msra.mxu0 %v1451
        %1481 = vmatprep.subr.mxu0 0.0
        %1482 = vmatpush1.msra.mxu0 %v1450
        %1483 = vmatprep.subr.mxu0 0.0
        %1484 = vmatpush1.msra.mxu0 %v1449
        %1485 = vmatprep.subr.mxu0 0.0
        %1486 = vmatpush2.msra.mxu0 0.0
        %1487 = vmatprep.subr.mxu0 0.0
        %1488 = vmatpush2.msra.mxu0 0.0
        %1489 = vmatprep.subr.mxu0 0.0
        %1490 = vmatpush2.msra.mxu0 0.0
        %1491 = vmatprep.subr.mxu0 0.0
        %1492 = vmatpush2.msra.mxu0 0.0
        %1493 = vmatprep.subr.mxu0 0.0
        %1494 = vmatpush2.msra.mxu0 0.0
        %1495 = vmatprep.subr.mxu0 0.0
        %1496 = vmatpush2.msra.mxu0 0.0
        %1497 = vmatprep.subr.mxu0 0.0
        %1498 = vmatpush2.msra.mxu0 0.0
        %1499 = vmatprep.subr.mxu0 0.0
        %1500 = vmatpush2.msra.mxu0 0.0
        %1501 = vmatprep.subr.mxu0 0.0
        %1502 = vmatpush2.msra.mxu0 0.0
        %1503 = vmatprep.subr.mxu0 0.0
        %1504 = vmatpush2.msra.mxu0 0.0
        %1505 = vmatprep.subr.mxu0 0.0
        %1506 = vmatpush2.msra.mxu0 0.0
        %1507 = vmatprep.subr.mxu0 0.0
        %1508 = vmatpush2.msra.mxu0 0.0
        %1509 = vmatprep.subr.mxu0 0.0
        %1510 = vmatpush2.msra.mxu0 0.0
        %1511 = vmatprep.subr.mxu0 0.0
        %1512 = vmatpush2.msra.mxu0 0.0
        %1513 = vmatprep.subr.mxu0 0.0
        %1514 = vmatpush2.msra.mxu0 0.0
        %1515 = vmatprep.subr.mxu0 0.0
        %1516 = vmatpush2.msra.mxu0 0.0
        %1517 = vmatprep.mubr.f32.mxu0 0.0
        %1518 = vmatmul.mubr.f32.gmra.mxu0 %v716
        %v1519 = vpop.f32.mrf.mxu0
        %v1520 = vadd.f32 0.0, %v1519
        %v1521 = vpop.f32.mrf.mxu0
        %1522 = vmatprep.mubr.f32.mxu0 0.0
        %1523 = vmatmul.mubr.f32.gmra.mxu0 %v719
        %v1524 = vpop.f32.mrf.mxu0
        %v1525 = vadd.f32 0.0, %v1524
        %v1526 = vpop.f32.mrf.mxu0
        %1527 = vdwg.mxu0
        %v1529 = vsel %vm966, %v1360, 0
        %v1532 = vsel %vm966, %v1440, 0
        %1534 = vmatprep.subr.mxu0 0.0
        %1535 = vmatpush1.xpose.msra.mxu0 0.0
        %1536 = vmatprep.subr.mxu0 0.0
        %1537 = vmatpush1.xpose.msra.mxu0 0.0
        %1538 = vmatprep.subr.mxu0 0.0
        %1539 = vmatpush1.xpose.msra.mxu0 0.0
        %1540 = vmatprep.subr.mxu0 0.0
        %1541 = vmatpush1.xpose.msra.mxu0 0.0
        %1542 = vmatprep.subr.mxu0 0.0
        %1543 = vmatpush1.xpose.msra.mxu0 0.0
        %1544 = vmatprep.subr.mxu0 0.0
        %1545 = vmatpush1.xpose.msra.mxu0 0.0
        %1546 = vmatprep.subr.mxu0 0.0
        %1547 = vmatpush1.xpose.msra.mxu0 0.0
        %1548 = vmatprep.subr.mxu0 0.0
        %1549 = vmatpush1.xpose.msra.mxu0 0.0
        %1550 = vmatprep.subr.mxu0 0.0
        %1551 = vmatpush1.xpose.msra.mxu0 0.0
        %1552 = vmatprep.subr.mxu0 0.0
        %1553 = vmatpush1.xpose.msra.mxu0 0.0
        %1554 = vmatprep.subr.mxu0 0.0
        %1555 = vmatpush1.xpose.msra.mxu0 0.0
        %1556 = vmatprep.subr.mxu0 0.0
        %1557 = vmatpush1.xpose.msra.mxu0 0.0
        %1558 = vmatprep.subr.mxu0 0.0
        %1559 = vmatpush1.xpose.msra.mxu0 0.0
        %1560 = vmatprep.subr.mxu0 0.0
        %1561 = vmatpush1.xpose.msra.mxu0 0.0
        %1562 = vmatprep.subr.mxu0 0.0
        %1563 = vmatpush1.xpose.msra.mxu0 0.0
        %1564 = vmatprep.subr.mxu0 0.0
        %1565 = vmatpush1.xpose.msra.mxu0 %v1532
        %1566 = vmatprep.subr.mxu0 0.0
        %1567 = vmatpush2.xpose.msra.mxu0 0.0
        %1568 = vmatprep.subr.mxu0 0.0
        %1569 = vmatpush2.xpose.msra.mxu0 0.0
        %1570 = vmatprep.subr.mxu0 0.0
        %1571 = vmatpush2.xpose.msra.mxu0 0.0
        %1572 = vmatprep.subr.mxu0 0.0
        %1573 = vmatpush2.xpose.msra.mxu0 0.0
        %1574 = vmatprep.subr.mxu0 0.0
        %1575 = vmatpush2.xpose.msra.mxu0 0.0
        %1576 = vmatprep.subr.mxu0 0.0
        %1577 = vmatpush2.xpose.msra.mxu0 0.0
        %1578 = vmatprep.subr.mxu0 0.0
        %1579 = vmatpush2.xpose.msra.mxu0 0.0
        %1580 = vmatprep.subr.mxu0 0.0
        %1581 = vmatpush2.xpose.msra.mxu0 0.0
        %1582 = vmatprep.subr.mxu0 0.0
        %1583 = vmatpush2.xpose.msra.mxu0 0.0
        %1584 = vmatprep.subr.mxu0 0.0
        %1585 = vmatpush2.xpose.msra.mxu0 0.0
        %1586 = vmatprep.subr.mxu0 0.0
        %1587 = vmatpush2.xpose.msra.mxu0 0.0
        %1588 = vmatprep.subr.mxu0 0.0
        %1589 = vmatpush2.xpose.msra.mxu0 0.0
        %1590 = vmatprep.subr.mxu0 0.0
        %1591 = vmatpush2.xpose.msra.mxu0 0.0
        %1592 = vmatprep.subr.mxu0 0.0
        %1593 = vmatpush2.xpose.msra.mxu0 0.0
        %1594 = vmatprep.subr.mxu0 0.0
        %1595 = vmatpush2.xpose.msra.mxu0 0.0
        %1596 = vmatprep.subr.mxu0 0.0
        %1597 = vmatpush2.xpose.msra.mxu0 0.0
        %1598 = vmatprep.mubr.f32.mxu0 0.0
        %1599 = vmatmul.mubr.f32.gmra.mxu0 %v1529
        %v1600 = vpop.f32.mrf.mxu0
        %v1601 = vadd.f32 %v959, %v1600
        %v1602 = vpop.f32.mrf.mxu0
        %1603 = vdwg.mxu0
        %v1605 = vsel %vm966, %v1365, 0
        %v1608 = vsel %vm966, %v1445, 0
        %1610 = vmatprep.subr.mxu0 0.0
        %1611 = vmatpush1.xpose.msra.mxu0 0.0
        %1612 = vmatprep.subr.mxu0 0.0
        %1613 = vmatpush1.xpose.msra.mxu0 0.0
        %1614 = vmatprep.subr.mxu0 0.0
        %1615 = vmatpush1.xpose.msra.mxu0 0.0
        %1616 = vmatprep.subr.mxu0 0.0
        %1617 = vmatpush1.xpose.msra.mxu0 0.0
        %1618 = vmatprep.subr.mxu0 0.0
        %1619 = vmatpush1.xpose.msra.mxu0 0.0
        %1620 = vmatprep.subr.mxu0 0.0
        %1621 = vmatpush1.xpose.msra.mxu0 0.0
        %1622 = vmatprep.subr.mxu0 0.0
        %1623 = vmatpush1.xpose.msra.mxu0 0.0
        %1624 = vmatprep.subr.mxu0 0.0
        %1625 = vmatpush1.xpose.msra.mxu0 0.0
        %1626 = vmatprep.subr.mxu0 0.0
        %1627 = vmatpush1.xpose.msra.mxu0 0.0
        %1628 = vmatprep.subr.mxu0 0.0
        %1629 = vmatpush1.xpose.msra.mxu0 0.0
        %1630 = vmatprep.subr.mxu0 0.0
        %1631 = vmatpush1.xpose.msra.mxu0 0.0
        %1632 = vmatprep.subr.mxu0 0.0
        %1633 = vmatpush1.xpose.msra.mxu0 0.0
        %1634 = vmatprep.subr.mxu0 0.0
        %1635 = vmatpush1.xpose.msra.mxu0 0.0
        %1636 = vmatprep.subr.mxu0 0.0
        %1637 = vmatpush1.xpose.msra.mxu0 0.0
        %1638 = vmatprep.subr.mxu0 0.0
        %1639 = vmatpush1.xpose.msra.mxu0 0.0
        %1640 = vmatprep.subr.mxu0 0.0
        %1641 = vmatpush1.xpose.msra.mxu0 %v1608
        %1642 = vmatprep.subr.mxu0 0.0
        %1643 = vmatpush2.xpose.msra.mxu0 0.0
        %1644 = vmatprep.subr.mxu0 0.0
        %1645 = vmatpush2.xpose.msra.mxu0 0.0
        %1646 = vmatprep.subr.mxu0 0.0
        %1647 = vmatpush2.xpose.msra.mxu0 0.0
        %1648 = vmatprep.subr.mxu0 0.0
        %1649 = vmatpush2.xpose.msra.mxu0 0.0
        %1650 = vmatprep.subr.mxu0 0.0
        %1651 = vmatpush2.xpose.msra.mxu0 0.0
        %1652 = vmatprep.subr.mxu0 0.0
        %1653 = vmatpush2.xpose.msra.mxu0 0.0
        %1654 = vmatprep.subr.mxu0 0.0
        %1655 = vmatpush2.xpose.msra.mxu0 0.0
        %1656 = vmatprep.subr.mxu0 0.0
        %1657 = vmatpush2.xpose.msra.mxu0 0.0
        %1658 = vmatprep.subr.mxu0 0.0
        %1659 = vmatpush2.xpose.msra.mxu0 0.0
        %1660 = vmatprep.subr.mxu0 0.0
        %1661 = vmatpush2.xpose.msra.mxu0 0.0
        %1662 = vmatprep.subr.mxu0 0.0
        %1663 = vmatpush2.xpose.msra.mxu0 0.0
        %1664 = vmatprep.subr.mxu0 0.0
        %1665 = vmatpush2.xpose.msra.mxu0 0.0
        %1666 = vmatprep.subr.mxu0 0.0
        %1667 = vmatpush2.xpose.msra.mxu0 0.0
        %1668 = vmatprep.subr.mxu0 0.0
        %1669 = vmatpush2.xpose.msra.mxu0 0.0
        %1670 = vmatprep.subr.mxu0 0.0
        %1671 = vmatpush2.xpose.msra.mxu0 0.0
        %1672 = vmatprep.subr.mxu0 0.0
        %1673 = vmatpush2.xpose.msra.mxu0 0.0
        %1674 = vmatprep.mubr.f32.mxu0 0.0
        %1675 = vmatmul.mubr.f32.gmra.mxu0 %v1605
        %v1676 = vpop.f32.mrf.mxu0
        %v1677 = vadd.f32 %v963, %v1676
        %v1678 = vpop.f32.mrf.mxu0
        %1679 = vdwg.mxu0
        %v1680 = vsel %vm966, %v1601, -inf
        %1681 = vmax.xlane.f32.xlu0 %v1680
        %v1682 = vpop.xlane.xlu0 %1681
        %v1683 = vsel %vm966, %v1677, -inf
        %1684 = vmax.xlane.f32.xlu0 %v1683
        %v1685 = vpop.xlane.xlu0 %1684
        %v1686 = vsub.f32 %v1601, %v1682
        %v1687 = vsub.f32 %v1677, %v1685
        %v1688 = vmul.f32 %v1686, 1.442695
        %v1689 = vpow.pop %v1688
        %v1690 = vmul.f32 %v1687, 1.442695
        %v1691 = vpow.pop %v1690
        %v1692 = vsel %vm966, %v1689, 0.0
        %1693 = vadd.xlane.f32.xlu0 %v1692
        %v1694 = vpop.xlane.xlu0 %1693
        %v1695 = vsel %vm966, %v1691, 0.0
        %1696 = vadd.xlane.f32.xlu0 %v1695
        %v1697 = vpop.xlane.xlu0 %1696
        %v1698 = vrcp.pop %v1694
        %v1699 = vrcp.pop %v1697
        %v1700 = vmul.f32 %v1689, %v1698
        %v1701 = vmul.f32 %v1691, %v1699
        %v1703 = vsel %vm966, %v1700, 0
        %1705 = vmatprep.subr.mxu0 0.0
        %1706 = vmatpush1.msra.mxu0 0.0
        %1707 = vmatprep.subr.mxu0 0.0
        %1708 = vmatpush1.msra.mxu0 0.0
        %1709 = vmatprep.subr.mxu0 0.0
        %1710 = vmatpush1.msra.mxu0 0.0
        %1711 = vmatprep.subr.mxu0 0.0
        %1712 = vmatpush1.msra.mxu0 0.0
        %1713 = vmatprep.subr.mxu0 0.0
        %1714 = vmatpush1.msra.mxu0 0.0
        %1715 = vmatprep.subr.mxu0 0.0
        %1716 = vmatpush1.msra.mxu0 0.0
        %1717 = vmatprep.subr.mxu0 0.0
        %1718 = vmatpush1.msra.mxu0 0.0
        %1719 = vmatprep.subr.mxu0 0.0
        %1720 = vmatpush1.msra.mxu0 0.0
        %1721 = vmatprep.subr.mxu0 0.0
        %1722 = vmatpush1.msra.mxu0 0.0
        %1723 = vmatprep.subr.mxu0 0.0
        %1724 = vmatpush1.msra.mxu0 0.0
        %1725 = vmatprep.subr.mxu0 0.0
        %1726 = vmatpush1.msra.mxu0 0.0
        %1727 = vmatprep.subr.mxu0 0.0
        %1728 = vmatpush1.msra.mxu0 0.0
        %1729 = vmatprep.subr.mxu0 0.0
        %1730 = vmatpush1.msra.mxu0 0.0
        %1731 = vmatprep.subr.mxu0 0.0
        %1732 = vmatpush1.msra.mxu0 0.0
        %1733 = vmatprep.subr.mxu0 0.0
        %1734 = vmatpush1.msra.mxu0 0.0
        %1735 = vmatprep.subr.mxu0 0.0
        %1736 = vmatpush1.msra.mxu0 %v1520
        %1737 = vmatprep.subr.mxu0 0.0
        %1738 = vmatpush2.msra.mxu0 0.0
        %1739 = vmatprep.subr.mxu0 0.0
        %1740 = vmatpush2.msra.mxu0 0.0
        %1741 = vmatprep.subr.mxu0 0.0
        %1742 = vmatpush2.msra.mxu0 0.0
        %1743 = vmatprep.subr.mxu0 0.0
        %1744 = vmatpush2.msra.mxu0 0.0
        %1745 = vmatprep.subr.mxu0 0.0
        %1746 = vmatpush2.msra.mxu0 0.0
        %1747 = vmatprep.subr.mxu0 0.0
        %1748 = vmatpush2.msra.mxu0 0.0
        %1749 = vmatprep.subr.mxu0 0.0
        %1750 = vmatpush2.msra.mxu0 0.0
        %1751 = vmatprep.subr.mxu0 0.0
        %1752 = vmatpush2.msra.mxu0 0.0
        %1753 = vmatprep.subr.mxu0 0.0
        %1754 = vmatpush2.msra.mxu0 0.0
        %1755 = vmatprep.subr.mxu0 0.0
        %1756 = vmatpush2.msra.mxu0 0.0
        %1757 = vmatprep.subr.mxu0 0.0
        %1758 = vmatpush2.msra.mxu0 0.0
        %1759 = vmatprep.subr.mxu0 0.0
        %1760 = vmatpush2.msra.mxu0 0.0
        %1761 = vmatprep.subr.mxu0 0.0
        %1762 = vmatpush2.msra.mxu0 0.0
        %1763 = vmatprep.subr.mxu0 0.0
        %1764 = vmatpush2.msra.mxu0 0.0
        %1765 = vmatprep.subr.mxu0 0.0
        %1766 = vmatpush2.msra.mxu0 0.0
        %1767 = vmatprep.subr.mxu0 0.0
        %1768 = vmatpush2.msra.mxu0 0.0
        %1769 = vmatprep.mubr.f32.mxu0 0.0
        %1770 = vmatmul.mubr.f32.gmra.mxu0 %v1703
        %v1771 = vpop.f32.mrf.mxu0
        %v1772 = vadd.f32 0.0, %v1771
        %v1773 = vpop.f32.mrf.mxu0
        %1774 = vdwg.mxu0
        %v1776 = vsel %vm966, %v1701, 0
        %1778 = vmatprep.subr.mxu0 0.0
        %1779 = vmatpush1.msra.mxu0 0.0
        %1780 = vmatprep.subr.mxu0 0.0
        %1781 = vmatpush1.msra.mxu0 0.0
        %1782 = vmatprep.subr.mxu0 0.0
        %1783 = vmatpush1.msra.mxu0 0.0
        %1784 = vmatprep.subr.mxu0 0.0
        %1785 = vmatpush1.msra.mxu0 0.0
        %1786 = vmatprep.subr.mxu0 0.0
        %1787 = vmatpush1.msra.mxu0 0.0
        %1788 = vmatprep.subr.mxu0 0.0
        %1789 = vmatpush1.msra.mxu0 0.0
        %1790 = vmatprep.subr.mxu0 0.0
        %1791 = vmatpush1.msra.mxu0 0.0
        %1792 = vmatprep.subr.mxu0 0.0
        %1793 = vmatpush1.msra.mxu0 0.0
        %1794 = vmatprep.subr.mxu0 0.0
        %1795 = vmatpush1.msra.mxu0 0.0
        %1796 = vmatprep.subr.mxu0 0.0
        %1797 = vmatpush1.msra.mxu0 0.0
        %1798 = vmatprep.subr.mxu0 0.0
        %1799 = vmatpush1.msra.mxu0 0.0
        %1800 = vmatprep.subr.mxu0 0.0
        %1801 = vmatpush1.msra.mxu0 0.0
        %1802 = vmatprep.subr.mxu0 0.0
        %1803 = vmatpush1.msra.mxu0 0.0
        %1804 = vmatprep.subr.mxu0 0.0
        %1805 = vmatpush1.msra.mxu0 0.0
        %1806 = vmatprep.subr.mxu0 0.0
        %1807 = vmatpush1.msra.mxu0 0.0
        %1808 = vmatprep.subr.mxu0 0.0
        %1809 = vmatpush1.msra.mxu0 %v1525
        %1810 = vmatprep.subr.mxu0 0.0
        %1811 = vmatpush2.msra.mxu0 0.0
        %1812 = vmatprep.subr.mxu0 0.0
        %1813 = vmatpush2.msra.mxu0 0.0
        %1814 = vmatprep.subr.mxu0 0.0
        %1815 = vmatpush2.msra.mxu0 0.0
        %1816 = vmatprep.subr.mxu0 0.0
        %1817 = vmatpush2.msra.mxu0 0.0
        %1818 = vmatprep.subr.mxu0 0.0
        %1819 = vmatpush2.msra.mxu0 0.0
        %1820 = vmatprep.subr.mxu0 0.0
        %1821 = vmatpush2.msra.mxu0 0.0
        %1822 = vmatprep.subr.mxu0 0.0
        %1823 = vmatpush2.msra.mxu0 0.0
        %1824 = vmatprep.subr.mxu0 0.0
        %1825 = vmatpush2.msra.mxu0 0.0
        %1826 = vmatprep.subr.mxu0 0.0
        %1827 = vmatpush2.msra.mxu0 0.0
        %1828 = vmatprep.subr.mxu0 0.0
        %1829 = vmatpush2.msra.mxu0 0.0
        %1830 = vmatprep.subr.mxu0 0.0
        %1831 = vmatpush2.msra.mxu0 0.0
        %1832 = vmatprep.subr.mxu0 0.0
        %1833 = vmatpush2.msra.mxu0 0.0
        %1834 = vmatprep.subr.mxu0 0.0
        %1835 = vmatpush2.msra.mxu0 0.0
        %1836 = vmatprep.subr.mxu0 0.0
        %1837 = vmatpush2.msra.mxu0 0.0
        %1838 = vmatprep.subr.mxu0 0.0
        %1839 = vmatpush2.msra.mxu0 0.0
        %1840 = vmatprep.subr.mxu0 0.0
        %1841 = vmatpush2.msra.mxu0 0.0
        %1842 = vmatprep.mubr.f32.mxu0 0.0
        %1843 = vmatmul.mubr.f32.gmra.mxu0 %v1776
        %v1844 = vpop.f32.mrf.mxu0
        %v1845 = vadd.f32 0.0, %v1844
        %v1846 = vpop.f32.mrf.mxu0
        %1847 = vdwg.mxu0
        %s1848 = scalar_lea.vmem %s667, 8
        %v1849 = vld [vmem:[%s1848] sm:$0xff]
        %v1851 = vsel %vm966, %v1772, 0
        %v1854 = vsel %vm966, %v1845, 0
        %1856 = vmatprep.subr.mxu0 0.0
        %1857 = vmatpush1.msra.mxu0 0.0
        %1858 = vmatprep.subr.mxu0 0.0
        %1859 = vmatpush1.msra.mxu0 0.0
        %1860 = vmatprep.subr.mxu0 0.0
        %1861 = vmatpush1.msra.mxu0 0.0
        %1862 = vmatprep.subr.mxu0 0.0
        %1863 = vmatpush1.msra.mxu0 0.0
        %1864 = vmatprep.subr.mxu0 0.0
        %1865 = vmatpush1.msra.mxu0 0.0
        %1866 = vmatprep.subr.mxu0 0.0
        %1867 = vmatpush1.msra.mxu0 0.0
        %1868 = vmatprep.subr.mxu0 0.0
        %1869 = vmatpush1.msra.mxu0 0.0
        %1870 = vmatprep.subr.mxu0 0.0
        %1871 = vmatpush1.msra.mxu0 0.0
        %1872 = vmatprep.subr.mxu0 0.0
        %1873 = vmatpush1.msra.mxu0 0.0
        %1874 = vmatprep.subr.mxu0 0.0
        %1875 = vmatpush1.msra.mxu0 0.0
        %1876 = vmatprep.subr.mxu0 0.0
        %1877 = vmatpush1.msra.mxu0 0.0
        %1878 = vmatprep.subr.mxu0 0.0
        %1879 = vmatpush1.msra.mxu0 0.0
        %1880 = vmatprep.subr.mxu0 0.0
        %1881 = vmatpush1.msra.mxu0 0.0
        %1882 = vmatprep.subr.mxu0 0.0
        %1883 = vmatpush1.msra.mxu0 0.0
        %1884 = vmatprep.subr.mxu0 0.0
        %1885 = vmatpush1.msra.mxu0 0.0
        %1886 = vmatprep.subr.mxu0 0.0
        %1887 = vmatpush1.msra.mxu0 %v1849
        %1888 = vmatprep.subr.mxu0 0.0
        %1889 = vmatpush2.msra.mxu0 0.0
        %1890 = vmatprep.subr.mxu0 0.0
        %1891 = vmatpush2.msra.mxu0 0.0
        %1892 = vmatprep.subr.mxu0 0.0
        %1893 = vmatpush2.msra.mxu0 0.0
        %1894 = vmatprep.subr.mxu0 0.0
        %1895 = vmatpush2.msra.mxu0 0.0
        %1896 = vmatprep.subr.mxu0 0.0
        %1897 = vmatpush2.msra.mxu0 0.0
        %1898 = vmatprep.subr.mxu0 0.0
        %1899 = vmatpush2.msra.mxu0 0.0
        %1900 = vmatprep.subr.mxu0 0.0
        %1901 = vmatpush2.msra.mxu0 0.0
        %1902 = vmatprep.subr.mxu0 0.0
        %1903 = vmatpush2.msra.mxu0 0.0
        %1904 = vmatprep.subr.mxu0 0.0
        %1905 = vmatpush2.msra.mxu0 0.0
        %1906 = vmatprep.subr.mxu0 0.0
        %1907 = vmatpush2.msra.mxu0 0.0
        %1908 = vmatprep.subr.mxu0 0.0
        %1909 = vmatpush2.msra.mxu0 0.0
        %1910 = vmatprep.subr.mxu0 0.0
        %1911 = vmatpush2.msra.mxu0 0.0
        %1912 = vmatprep.subr.mxu0 0.0
        %1913 = vmatpush2.msra.mxu0 0.0
        %1914 = vmatprep.subr.mxu0 0.0
        %1915 = vmatpush2.msra.mxu0 0.0
        %1916 = vmatprep.subr.mxu0 0.0
        %1917 = vmatpush2.msra.mxu0 0.0
        %1918 = vmatprep.subr.mxu0 0.0
        %1919 = vmatpush2.msra.mxu0 0.0
        %1920 = vmatprep.mubr.f32.mxu0 0.0
        %1921 = vmatmul.mubr.f32.gmra.mxu0 %v1851
        %v1922 = vpop.f32.mrf.mxu0
        %v1923 = vadd.f32 0.0, %v1922
        %v1924 = vpop.f32.mrf.mxu0
        %1925 = vmatprep.mubr.f32.mxu0 0.0
        %1926 = vmatmul.mubr.f32.gmra.mxu0 %v1854
        %v1927 = vpop.f32.mrf.mxu0
        %v1928 = vadd.f32 0.0, %v1927
        %v1929 = vpop.f32.mrf.mxu0
        %1930 = vdwg.mxu0
        %v1932 = vsel %vm966, %v1211, 0
        %v1935 = vsel %vm966, %v1284, 0
        %1937 = vmatprep.subr.mxu0 0.0
        %1938 = vmatpush1.msra.mxu0 0.0
        %1939 = vmatprep.subr.mxu0 0.0
        %1940 = vmatpush1.msra.mxu0 0.0
        %1941 = vmatprep.subr.mxu0 0.0
        %1942 = vmatpush1.msra.mxu0 0.0
        %1943 = vmatprep.subr.mxu0 0.0
        %1944 = vmatpush1.msra.mxu0 0.0
        %1945 = vmatprep.subr.mxu0 0.0
        %1946 = vmatpush1.msra.mxu0 0.0
        %1947 = vmatprep.subr.mxu0 0.0
        %1948 = vmatpush1.msra.mxu0 0.0
        %1949 = vmatprep.subr.mxu0 0.0
        %1950 = vmatpush1.msra.mxu0 0.0
        %1951 = vmatprep.subr.mxu0 0.0
        %1952 = vmatpush1.msra.mxu0 0.0
        %1953 = vmatprep.subr.mxu0 0.0
        %1954 = vmatpush1.msra.mxu0 0.0
        %1955 = vmatprep.subr.mxu0 0.0
        %1956 = vmatpush1.msra.mxu0 0.0
        %1957 = vmatprep.subr.mxu0 0.0
        %1958 = vmatpush1.msra.mxu0 0.0
        %1959 = vmatprep.subr.mxu0 0.0
        %1960 = vmatpush1.msra.mxu0 0.0
        %1961 = vmatprep.subr.mxu0 0.0
        %1962 = vmatpush1.msra.mxu0 0.0
        %1963 = vmatprep.subr.mxu0 0.0
        %1964 = vmatpush1.msra.mxu0 0.0
        %1965 = vmatprep.subr.mxu0 0.0
        %1966 = vmatpush1.msra.mxu0 0.0
        %1967 = vmatprep.subr.mxu0 0.0
        %1968 = vmatpush1.msra.mxu0 %v1287
        %1969 = vmatprep.subr.mxu0 0.0
        %1970 = vmatpush2.msra.mxu0 0.0
        %1971 = vmatprep.subr.mxu0 0.0
        %1972 = vmatpush2.msra.mxu0 0.0
        %1973 = vmatprep.subr.mxu0 0.0
        %1974 = vmatpush2.msra.mxu0 0.0
        %1975 = vmatprep.subr.mxu0 0.0
        %1976 = vmatpush2.msra.mxu0 0.0
        %1977 = vmatprep.subr.mxu0 0.0
        %1978 = vmatpush2.msra.mxu0 0.0
        %1979 = vmatprep.subr.mxu0 0.0
        %1980 = vmatpush2.msra.mxu0 0.0
        %1981 = vmatprep.subr.mxu0 0.0
        %1982 = vmatpush2.msra.mxu0 0.0
        %1983 = vmatprep.subr.mxu0 0.0
        %1984 = vmatpush2.msra.mxu0 0.0
        %1985 = vmatprep.subr.mxu0 0.0
        %1986 = vmatpush2.msra.mxu0 0.0
        %1987 = vmatprep.subr.mxu0 0.0
        %1988 = vmatpush2.msra.mxu0 0.0
        %1989 = vmatprep.subr.mxu0 0.0
        %1990 = vmatpush2.msra.mxu0 0.0
        %1991 = vmatprep.subr.mxu0 0.0
        %1992 = vmatpush2.msra.mxu0 0.0
        %1993 = vmatprep.subr.mxu0 0.0
        %1994 = vmatpush2.msra.mxu0 0.0
        %1995 = vmatprep.subr.mxu0 0.0
        %1996 = vmatpush2.msra.mxu0 0.0
        %1997 = vmatprep.subr.mxu0 0.0
        %1998 = vmatpush2.msra.mxu0 0.0
        %1999 = vmatprep.subr.mxu0 0.0
        %2000 = vmatpush2.msra.mxu0 0.0
        %2001 = vmatprep.mubr.f32.mxu0 0.0
        %2002 = vmatmul.mubr.f32.gmra.mxu0 %v1932
        %v2003 = vpop.f32.mrf.mxu0
        %v2004 = vadd.f32 %v1923, %v2003
        %v2005 = vpop.f32.mrf.mxu0
        %2006 = vmatprep.mubr.f32.mxu0 0.0
        %2007 = vmatmul.mubr.f32.gmra.mxu0 %v1935
        %v2008 = vpop.f32.mrf.mxu0
        %v2009 = vadd.f32 %v1928, %v2008
        %v2010 = vpop.f32.mrf.mxu0
        %2011 = vdwg.mxu0
        %s2012 = scalar_lea.vmem %s652, 64
        %v2013 = vld [vmem:[%s2012] sm:$0xff]
        %v2014 = vld [vmem:[%s2012 + $0x8] sm:$0xff]
        %v2015 = vld [vmem:[%s2012 + $0x10] sm:$0xff]
        %v2016 = vld [vmem:[%s2012 + $0x18] sm:$0xff]
        %2017 = vmatprep.subr.mxu0 0.0
        %2018 = vmatpush1.msra.mxu0 0.0
        %2019 = vmatprep.subr.mxu0 0.0
        %2020 = vmatpush1.msra.mxu0 0.0
        %2021 = vmatprep.subr.mxu0 0.0
        %2022 = vmatpush1.msra.mxu0 0.0
        %2023 = vmatprep.subr.mxu0 0.0
        %2024 = vmatpush1.msra.mxu0 0.0
        %2025 = vmatprep.subr.mxu0 0.0
        %2026 = vmatpush1.msra.mxu0 0.0
        %2027 = vmatprep.subr.mxu0 0.0
        %2028 = vmatpush1.msra.mxu0 0.0
        %2029 = vmatprep.subr.mxu0 0.0
        %2030 = vmatpush1.msra.mxu0 0.0
        %2031 = vmatprep.subr.mxu0 0.0
        %2032 = vmatpush1.msra.mxu0 0.0
        %2033 = vmatprep.subr.mxu0 0.0
        %2034 = vmatpush1.msra.mxu0 0.0
        %2035 = vmatprep.subr.mxu0 0.0
        %2036 = vmatpush1.msra.mxu0 0.0
        %2037 = vmatprep.subr.mxu0 0.0
        %2038 = vmatpush1.msra.mxu0 0.0
        %2039 = vmatprep.subr.mxu0 0.0
        %2040 = vmatpush1.msra.mxu0 0.0
        %2041 = vmatprep.subr.mxu0 0.0
        %2042 = vmatpush1.msra.mxu0 %v2016
        %2043 = vmatprep.subr.mxu0 0.0
        %2044 = vmatpush1.msra.mxu0 %v2015
        %2045 = vmatprep.subr.mxu0 0.0
        %2046 = vmatpush1.msra.mxu0 %v2014
        %2047 = vmatprep.subr.mxu0 0.0
        %2048 = vmatpush1.msra.mxu0 %v2013
        %2049 = vmatprep.subr.mxu0 0.0
        %2050 = vmatpush2.msra.mxu0 0.0
        %2051 = vmatprep.subr.mxu0 0.0
        %2052 = vmatpush2.msra.mxu0 0.0
        %2053 = vmatprep.subr.mxu0 0.0
        %2054 = vmatpush2.msra.mxu0 0.0
        %2055 = vmatprep.subr.mxu0 0.0
        %2056 = vmatpush2.msra.mxu0 0.0
        %2057 = vmatprep.subr.mxu0 0.0
        %2058 = vmatpush2.msra.mxu0 0.0
        %2059 = vmatprep.subr.mxu0 0.0
        %2060 = vmatpush2.msra.mxu0 0.0
        %2061 = vmatprep.subr.mxu0 0.0
        %2062 = vmatpush2.msra.mxu0 0.0
        %2063 = vmatprep.subr.mxu0 0.0
        %2064 = vmatpush2.msra.mxu0 0.0
        %2065 = vmatprep.subr.mxu0 0.0
        %2066 = vmatpush2.msra.mxu0 0.0
        %2067 = vmatprep.subr.mxu0 0.0
        %2068 = vmatpush2.msra.mxu0 0.0
        %2069 = vmatprep.subr.mxu0 0.0
        %2070 = vmatpush2.msra.mxu0 0.0
        %2071 = vmatprep.subr.mxu0 0.0
        %2072 = vmatpush2.msra.mxu0 0.0
        %2073 = vmatprep.subr.mxu0 0.0
        %2074 = vmatpush2.msra.mxu0 0.0
        %2075 = vmatprep.subr.mxu0 0.0
        %2076 = vmatpush2.msra.mxu0 0.0
        %2077 = vmatprep.subr.mxu0 0.0
        %2078 = vmatpush2.msra.mxu0 0.0
        %2079 = vmatprep.subr.mxu0 0.0
        %2080 = vmatpush2.msra.mxu0 0.0
        %2081 = vmatprep.mubr.f32.mxu0 0.0
        %2082 = vmatmul.mubr.f32.gmra.mxu0 %v716
        %v2083 = vpop.f32.mrf.mxu0
        %v2084 = vadd.f32 0.0, %v2083
        %v2085 = vpop.f32.mrf.mxu0
        %2086 = vmatprep.mubr.f32.mxu0 0.0
        %2087 = vmatmul.mubr.f32.gmra.mxu0 %v719
        %v2088 = vpop.f32.mrf.mxu0
        %v2089 = vadd.f32 0.0, %v2088
        %v2090 = vpop.f32.mrf.mxu0
        %2091 = vdwg.mxu0
        %s2092 = scalar_lea.vmem %s657, 64
        %v2093 = vld [vmem:[%s2092] sm:$0xff]
        %v2094 = vld [vmem:[%s2092 + $0x8] sm:$0xff]
        %v2095 = vld [vmem:[%s2092 + $0x10] sm:$0xff]
        %v2096 = vld [vmem:[%s2092 + $0x18] sm:$0xff]
        %2097 = vmatprep.subr.mxu0 0.0
        %2098 = vmatpush1.msra.mxu0 0.0
        %2099 = vmatprep.subr.mxu0 0.0
        %2100 = vmatpush1.msra.mxu0 0.0
        %2101 = vmatprep.subr.mxu0 0.0
        %2102 = vmatpush1.msra.mxu0 0.0
        %2103 = vmatprep.subr.mxu0 0.0
        %2104 = vmatpush1.msra.mxu0 0.0
        %2105 = vmatprep.subr.mxu0 0.0
        %2106 = vmatpush1.msra.mxu0 0.0
        %2107 = vmatprep.subr.mxu0 0.0
        %2108 = vmatpush1.msra.mxu0 0.0
        %2109 = vmatprep.subr.mxu0 0.0
        %2110 = vmatpush1.msra.mxu0 0.0
        %2111 = vmatprep.subr.mxu0 0.0
        %2112 = vmatpush1.msra.mxu0 0.0
        %2113 = vmatprep.subr.mxu0 0.0
        %2114 = vmatpush1.msra.mxu0 0.0
        %2115 = vmatprep.subr.mxu0 0.0
        %2116 = vmatpush1.msra.mxu0 0.0
        %2117 = vmatprep.subr.mxu0 0.0
        %2118 = vmatpush1.msra.mxu0 0.0
        %2119 = vmatprep.subr.mxu0 0.0
        %2120 = vmatpush1.msra.mxu0 0.0
        %2121 = vmatprep.subr.mxu0 0.0
        %2122 = vmatpush1.msra.mxu0 %v2096
        %2123 = vmatprep.subr.mxu0 0.0
        %2124 = vmatpush1.msra.mxu0 %v2095
        %2125 = vmatprep.subr.mxu0 0.0
        %2126 = vmatpush1.msra.mxu0 %v2094
        %2127 = vmatprep.subr.mxu0 0.0
        %2128 = vmatpush1.msra.mxu0 %v2093
        %2129 = vmatprep.subr.mxu0 0.0
        %2130 = vmatpush2.msra.mxu0 0.0
        %2131 = vmatprep.subr.mxu0 0.0
        %2132 = vmatpush2.msra.mxu0 0.0
        %2133 = vmatprep.subr.mxu0 0.0
        %2134 = vmatpush2.msra.mxu0 0.0
        %2135 = vmatprep.subr.mxu0 0.0
        %2136 = vmatpush2.msra.mxu0 0.0
        %2137 = vmatprep.subr.mxu0 0.0
        %2138 = vmatpush2.msra.mxu0 0.0
        %2139 = vmatprep.subr.mxu0 0.0
        %2140 = vmatpush2.msra.mxu0 0.0
        %2141 = vmatprep.subr.mxu0 0.0
        %2142 = vmatpush2.msra.mxu0 0.0
        %2143 = vmatprep.subr.mxu0 0.0
        %2144 = vmatpush2.msra.mxu0 0.0
        %2145 = vmatprep.subr.mxu0 0.0
        %2146 = vmatpush2.msra.mxu0 0.0
        %2147 = vmatprep.subr.mxu0 0.0
        %2148 = vmatpush2.msra.mxu0 0.0
        %2149 = vmatprep.subr.mxu0 0.0
        %2150 = vmatpush2.msra.mxu0 0.0
        %2151 = vmatprep.subr.mxu0 0.0
        %2152 = vmatpush2.msra.mxu0 0.0
        %2153 = vmatprep.subr.mxu0 0.0
        %2154 = vmatpush2.msra.mxu0 0.0
        %2155 = vmatprep.subr.mxu0 0.0
        %2156 = vmatpush2.msra.mxu0 0.0
        %2157 = vmatprep.subr.mxu0 0.0
        %2158 = vmatpush2.msra.mxu0 0.0
        %2159 = vmatprep.subr.mxu0 0.0
        %2160 = vmatpush2.msra.mxu0 0.0
        %2161 = vmatprep.mubr.f32.mxu0 0.0
        %2162 = vmatmul.mubr.f32.gmra.mxu0 %v716
        %v2163 = vpop.f32.mrf.mxu0
        %v2164 = vadd.f32 0.0, %v2163
        %v2165 = vpop.f32.mrf.mxu0
        %2166 = vmatprep.mubr.f32.mxu0 0.0
        %2167 = vmatmul.mubr.f32.gmra.mxu0 %v719
        %v2168 = vpop.f32.mrf.mxu0
        %v2169 = vadd.f32 0.0, %v2168
        %v2170 = vpop.f32.mrf.mxu0
        %2171 = vdwg.mxu0
        %s2172 = scalar_lea.vmem %s662, 64
        %v2173 = vld [vmem:[%s2172] sm:$0xff]
        %v2174 = vld [vmem:[%s2172 + $0x8] sm:$0xff]
        %v2175 = vld [vmem:[%s2172 + $0x10] sm:$0xff]
        %v2176 = vld [vmem:[%s2172 + $0x18] sm:$0xff]
        %2177 = vmatprep.subr.mxu0 0.0
        %2178 = vmatpush1.msra.mxu0 0.0
        %2179 = vmatprep.subr.mxu0 0.0
        %2180 = vmatpush1.msra.mxu0 0.0
        %2181 = vmatprep.subr.mxu0 0.0
        %2182 = vmatpush1.msra.mxu0 0.0
        %2183 = vmatprep.subr.mxu0 0.0
        %2184 = vmatpush1.msra.mxu0 0.0
        %2185 = vmatprep.subr.mxu0 0.0
        %2186 = vmatpush1.msra.mxu0 0.0
        %2187 = vmatprep.subr.mxu0 0.0
        %2188 = vmatpush1.msra.mxu0 0.0
        %2189 = vmatprep.subr.mxu0 0.0
        %2190 = vmatpush1.msra.mxu0 0.0
        %2191 = vmatprep.subr.mxu0 0.0
        %2192 = vmatpush1.msra.mxu0 0.0
        %2193 = vmatprep.subr.mxu0 0.0
        %2194 = vmatpush1.msra.mxu0 0.0
        %2195 = vmatprep.subr.mxu0 0.0
        %2196 = vmatpush1.msra.mxu0 0.0
        %2197 = vmatprep.subr.mxu0 0.0
        %2198 = vmatpush1.msra.mxu0 0.0
        %2199 = vmatprep.subr.mxu0 0.0
        %2200 = vmatpush1.msra.mxu0 0.0
        %2201 = vmatprep.subr.mxu0 0.0
        %2202 = vmatpush1.msra.mxu0 %v2176
        %2203 = vmatprep.subr.mxu0 0.0
        %2204 = vmatpush1.msra.mxu0 %v2175
        %2205 = vmatprep.subr.mxu0 0.0
        %2206 = vmatpush1.msra.mxu0 %v2174
        %2207 = vmatprep.subr.mxu0 0.0
        %2208 = vmatpush1.msra.mxu0 %v2173
        %2209 = vmatprep.subr.mxu0 0.0
        %2210 = vmatpush2.msra.mxu0 0.0
        %2211 = vmatprep.subr.mxu0 0.0
        %2212 = vmatpush2.msra.mxu0 0.0
        %2213 = vmatprep.subr.mxu0 0.0
        %2214 = vmatpush2.msra.mxu0 0.0
        %2215 = vmatprep.subr.mxu0 0.0
        %2216 = vmatpush2.msra.mxu0 0.0
        %2217 = vmatprep.subr.mxu0 0.0
        %2218 = vmatpush2.msra.mxu0 0.0
        %2219 = vmatprep.subr.mxu0 0.0
        %2220 = vmatpush2.msra.mxu0 0.0
        %2221 = vmatprep.subr.mxu0 0.0
        %2222 = vmatpush2.msra.mxu0 0.0
        %2223 = vmatprep.subr.mxu0 0.0
        %2224 = vmatpush2.msra.mxu0 0.0
        %2225 = vmatprep.subr.mxu0 0.0
        %2226 = vmatpush2.msra.mxu0 0.0
        %2227 = vmatprep.subr.mxu0 0.0
        %2228 = vmatpush2.msra.mxu0 0.0
        %2229 = vmatprep.subr.mxu0 0.0
        %2230 = vmatpush2.msra.mxu0 0.0
        %2231 = vmatprep.subr.mxu0 0.0
        %2232 = vmatpush2.msra.mxu0 0.0
        %2233 = vmatprep.subr.mxu0 0.0
        %2234 = vmatpush2.msra.mxu0 0.0
        %2235 = vmatprep.subr.mxu0 0.0
        %2236 = vmatpush2.msra.mxu0 0.0
        %2237 = vmatprep.subr.mxu0 0.0
        %2238 = vmatpush2.msra.mxu0 0.0
        %2239 = vmatprep.subr.mxu0 0.0
        %2240 = vmatpush2.msra.mxu0 0.0
        %2241 = vmatprep.mubr.f32.mxu0 0.0
        %2242 = vmatmul.mubr.f32.gmra.mxu0 %v716
        %v2243 = vpop.f32.mrf.mxu0
        %v2244 = vadd.f32 0.0, %v2243
        %v2245 = vpop.f32.mrf.mxu0
        %2246 = vmatprep.mubr.f32.mxu0 0.0
        %2247 = vmatmul.mubr.f32.gmra.mxu0 %v719
        %v2248 = vpop.f32.mrf.mxu0
        %v2249 = vadd.f32 0.0, %v2248
        %v2250 = vpop.f32.mrf.mxu0
        %2251 = vdwg.mxu0
        %v2253 = vsel %vm966, %v2084, 0
        %v2256 = vsel %vm966, %v2164, 0
        %2258 = vmatprep.subr.mxu0 0.0
        %2259 = vmatpush1.xpose.msra.mxu0 0.0
        %2260 = vmatprep.subr.mxu0 0.0
        %2261 = vmatpush1.xpose.msra.mxu0 0.0
        %2262 = vmatprep.subr.mxu0 0.0
        %2263 = vmatpush1.xpose.msra.mxu0 0.0
        %2264 = vmatprep.subr.mxu0 0.0
        %2265 = vmatpush1.xpose.msra.mxu0 0.0
        %2266 = vmatprep.subr.mxu0 0.0
        %2267 = vmatpush1.xpose.msra.mxu0 0.0
        %2268 = vmatprep.subr.mxu0 0.0
        %2269 = vmatpush1.xpose.msra.mxu0 0.0
        %2270 = vmatprep.subr.mxu0 0.0
        %2271 = vmatpush1.xpose.msra.mxu0 0.0
        %2272 = vmatprep.subr.mxu0 0.0
        %2273 = vmatpush1.xpose.msra.mxu0 0.0
        %2274 = vmatprep.subr.mxu0 0.0
        %2275 = vmatpush1.xpose.msra.mxu0 0.0
        %2276 = vmatprep.subr.mxu0 0.0
        %2277 = vmatpush1.xpose.msra.mxu0 0.0
        %2278 = vmatprep.subr.mxu0 0.0
        %2279 = vmatpush1.xpose.msra.mxu0 0.0
        %2280 = vmatprep.subr.mxu0 0.0
        %2281 = vmatpush1.xpose.msra.mxu0 0.0
        %2282 = vmatprep.subr.mxu0 0.0
        %2283 = vmatpush1.xpose.msra.mxu0 0.0
        %2284 = vmatprep.subr.mxu0 0.0
        %2285 = vmatpush1.xpose.msra.mxu0 0.0
        %2286 = vmatprep.subr.mxu0 0.0
        %2287 = vmatpush1.xpose.msra.mxu0 0.0
        %2288 = vmatprep.subr.mxu0 0.0
        %2289 = vmatpush1.xpose.msra.mxu0 %v2256
        %2290 = vmatprep.subr.mxu0 0.0
        %2291 = vmatpush2.xpose.msra.mxu0 0.0
        %2292 = vmatprep.subr.mxu0 0.0
        %2293 = vmatpush2.xpose.msra.mxu0 0.0
        %2294 = vmatprep.subr.mxu0 0.0
        %2295 = vmatpush2.xpose.msra.mxu0 0.0
        %2296 = vmatprep.subr.mxu0 0.0
        %2297 = vmatpush2.xpose.msra.mxu0 0.0
        %2298 = vmatprep.subr.mxu0 0.0
        %2299 = vmatpush2.xpose.msra.mxu0 0.0
        %2300 = vmatprep.subr.mxu0 0.0
        %2301 = vmatpush2.xpose.msra.mxu0 0.0
        %2302 = vmatprep.subr.mxu0 0.0
        %2303 = vmatpush2.xpose.msra.mxu0 0.0
        %2304 = vmatprep.subr.mxu0 0.0
        %2305 = vmatpush2.xpose.msra.mxu0 0.0
        %2306 = vmatprep.subr.mxu0 0.0
        %2307 = vmatpush2.xpose.msra.mxu0 0.0
        %2308 = vmatprep.subr.mxu0 0.0
        %2309 = vmatpush2.xpose.msra.mxu0 0.0
        %2310 = vmatprep.subr.mxu0 0.0
        %2311 = vmatpush2.xpose.msra.mxu0 0.0
        %2312 = vmatprep.subr.mxu0 0.0
        %2313 = vmatpush2.xpose.msra.mxu0 0.0
        %2314 = vmatprep.subr.mxu0 0.0
        %2315 = vmatpush2.xpose.msra.mxu0 0.0
        %2316 = vmatprep.subr.mxu0 0.0
        %2317 = vmatpush2.xpose.msra.mxu0 0.0
        %2318 = vmatprep.subr.mxu0 0.0
        %2319 = vmatpush2.xpose.msra.mxu0 0.0
        %2320 = vmatprep.subr.mxu0 0.0
        %2321 = vmatpush2.xpose.msra.mxu0 0.0
        %2322 = vmatprep.mubr.f32.mxu0 0.0
        %2323 = vmatmul.mubr.f32.gmra.mxu0 %v2253
        %v2324 = vpop.f32.mrf.mxu0
        %v2325 = vadd.f32 %v959, %v2324
        %v2326 = vpop.f32.mrf.mxu0
        %2327 = vdwg.mxu0
        %v2329 = vsel %vm966, %v2089, 0
        %v2332 = vsel %vm966, %v2169, 0
        %2334 = vmatprep.subr.mxu0 0.0
        %2335 = vmatpush1.xpose.msra.mxu0 0.0
        %2336 = vmatprep.subr.mxu0 0.0
        %2337 = vmatpush1.xpose.msra.mxu0 0.0
        %2338 = vmatprep.subr.mxu0 0.0
        %2339 = vmatpush1.xpose.msra.mxu0 0.0
        %2340 = vmatprep.subr.mxu0 0.0
        %2341 = vmatpush1.xpose.msra.mxu0 0.0
        %2342 = vmatprep.subr.mxu0 0.0
        %2343 = vmatpush1.xpose.msra.mxu0 0.0
        %2344 = vmatprep.subr.mxu0 0.0
        %2345 = vmatpush1.xpose.msra.mxu0 0.0
        %2346 = vmatprep.subr.mxu0 0.0
        %2347 = vmatpush1.xpose.msra.mxu0 0.0
        %2348 = vmatprep.subr.mxu0 0.0
        %2349 = vmatpush1.xpose.msra.mxu0 0.0
        %2350 = vmatprep.subr.mxu0 0.0
        %2351 = vmatpush1.xpose.msra.mxu0 0.0
        %2352 = vmatprep.subr.mxu0 0.0
        %2353 = vmatpush1.xpose.msra.mxu0 0.0
        %2354 = vmatprep.subr.mxu0 0.0
        %2355 = vmatpush1.xpose.msra.mxu0 0.0
        %2356 = vmatprep.subr.mxu0 0.0
        %2357 = vmatpush1.xpose.msra.mxu0 0.0
        %2358 = vmatprep.subr.mxu0 0.0
        %2359 = vmatpush1.xpose.msra.mxu0 0.0
        %2360 = vmatprep.subr.mxu0 0.0
        %2361 = vmatpush1.xpose.msra.mxu0 0.0
        %2362 = vmatprep.subr.mxu0 0.0
        %2363 = vmatpush1.xpose.msra.mxu0 0.0
        %2364 = vmatprep.subr.mxu0 0.0
        %2365 = vmatpush1.xpose.msra.mxu0 %v2332
        %2366 = vmatprep.subr.mxu0 0.0
        %2367 = vmatpush2.xpose.msra.mxu0 0.0
        %2368 = vmatprep.subr.mxu0 0.0
        %2369 = vmatpush2.xpose.msra.mxu0 0.0
        %2370 = vmatprep.subr.mxu0 0.0
        %2371 = vmatpush2.xpose.msra.mxu0 0.0
        %2372 = vmatprep.subr.mxu0 0.0
        %2373 = vmatpush2.xpose.msra.mxu0 0.0
        %2374 = vmatprep.subr.mxu0 0.0
        %2375 = vmatpush2.xpose.msra.mxu0 0.0
        %2376 = vmatprep.subr.mxu0 0.0
        %2377 = vmatpush2.xpose.msra.mxu0 0.0
        %2378 = vmatprep.subr.mxu0 0.0
        %2379 = vmatpush2.xpose.msra.mxu0 0.0
        %2380 = vmatprep.subr.mxu0 0.0
        %2381 = vmatpush2.xpose.msra.mxu0 0.0
        %2382 = vmatprep.subr.mxu0 0.0
        %2383 = vmatpush2.xpose.msra.mxu0 0.0
        %2384 = vmatprep.subr.mxu0 0.0
        %2385 = vmatpush2.xpose.msra.mxu0 0.0
        %2386 = vmatprep.subr.mxu0 0.0
        %2387 = vmatpush2.xpose.msra.mxu0 0.0
        %2388 = vmatprep.subr.mxu0 0.0
        %2389 = vmatpush2.xpose.msra.mxu0 0.0
        %2390 = vmatprep.subr.mxu0 0.0
        %2391 = vmatpush2.xpose.msra.mxu0 0.0
        %2392 = vmatprep.subr.mxu0 0.0
        %2393 = vmatpush2.xpose.msra.mxu0 0.0
        %2394 = vmatprep.subr.mxu0 0.0
        %2395 = vmatpush2.xpose.msra.mxu0 0.0
        %2396 = vmatprep.subr.mxu0 0.0
        %2397 = vmatpush2.xpose.msra.mxu0 0.0
        %2398 = vmatprep.mubr.f32.mxu0 0.0
        %2399 = vmatmul.mubr.f32.gmra.mxu0 %v2329
        %v2400 = vpop.f32.mrf.mxu0
        %v2401 = vadd.f32 %v963, %v2400
        %v2402 = vpop.f32.mrf.mxu0
        %2403 = vdwg.mxu0
        %v2404 = vsel %vm966, %v2325, -inf
        %2405 = vmax.xlane.f32.xlu0 %v2404
        %v2406 = vpop.xlane.xlu0 %2405
        %v2407 = vsel %vm966, %v2401, -inf
        %2408 = vmax.xlane.f32.xlu0 %v2407
        %v2409 = vpop.xlane.xlu0 %2408
        %v2410 = vsub.f32 %v2325, %v2406
        %v2411 = vsub.f32 %v2401, %v2409
        %v2412 = vmul.f32 %v2410, 1.442695
        %v2413 = vpow.pop %v2412
        %v2414 = vmul.f32 %v2411, 1.442695
        %v2415 = vpow.pop %v2414
        %v2416 = vsel %vm966, %v2413, 0.0
        %2417 = vadd.xlane.f32.xlu0 %v2416
        %v2418 = vpop.xlane.xlu0 %2417
        %v2419 = vsel %vm966, %v2415, 0.0
        %2420 = vadd.xlane.f32.xlu0 %v2419
        %v2421 = vpop.xlane.xlu0 %2420
        %v2422 = vrcp.pop %v2418
        %v2423 = vrcp.pop %v2421
        %v2424 = vmul.f32 %v2413, %v2422
        %v2425 = vmul.f32 %v2415, %v2423
        %v2427 = vsel %vm966, %v2424, 0
        %2429 = vmatprep.subr.mxu0 0.0
        %2430 = vmatpush1.msra.mxu0 0.0
        %2431 = vmatprep.subr.mxu0 0.0
        %2432 = vmatpush1.msra.mxu0 0.0
        %2433 = vmatprep.subr.mxu0 0.0
        %2434 = vmatpush1.msra.mxu0 0.0
        %2435 = vmatprep.subr.mxu0 0.0
        %2436 = vmatpush1.msra.mxu0 0.0
        %2437 = vmatprep.subr.mxu0 0.0
        %2438 = vmatpush1.msra.mxu0 0.0
        %2439 = vmatprep.subr.mxu0 0.0
        %2440 = vmatpush1.msra.mxu0 0.0
        %2441 = vmatprep.subr.mxu0 0.0
        %2442 = vmatpush1.msra.mxu0 0.0
        %2443 = vmatprep.subr.mxu0 0.0
        %2444 = vmatpush1.msra.mxu0 0.0
        %2445 = vmatprep.subr.mxu0 0.0
        %2446 = vmatpush1.msra.mxu0 0.0
        %2447 = vmatprep.subr.mxu0 0.0
        %2448 = vmatpush1.msra.mxu0 0.0
        %2449 = vmatprep.subr.mxu0 0.0
        %2450 = vmatpush1.msra.mxu0 0.0
        %2451 = vmatprep.subr.mxu0 0.0
        %2452 = vmatpush1.msra.mxu0 0.0
        %2453 = vmatprep.subr.mxu0 0.0
        %2454 = vmatpush1.msra.mxu0 0.0
        %2455 = vmatprep.subr.mxu0 0.0
        %2456 = vmatpush1.msra.mxu0 0.0
        %2457 = vmatprep.subr.mxu0 0.0
        %2458 = vmatpush1.msra.mxu0 0.0
        %2459 = vmatprep.subr.mxu0 0.0
        %2460 = vmatpush1.msra.mxu0 %v2244
        %2461 = vmatprep.subr.mxu0 0.0
        %2462 = vmatpush2.msra.mxu0 0.0
        %2463 = vmatprep.subr.mxu0 0.0
        %2464 = vmatpush2.msra.mxu0 0.0
        %2465 = vmatprep.subr.mxu0 0.0
        %2466 = vmatpush2.msra.mxu0 0.0
        %2467 = vmatprep.subr.mxu0 0.0
        %2468 = vmatpush2.msra.mxu0 0.0
        %2469 = vmatprep.subr.mxu0 0.0
        %2470 = vmatpush2.msra.mxu0 0.0
        %2471 = vmatprep.subr.mxu0 0.0
        %2472 = vmatpush2.msra.mxu0 0.0
        %2473 = vmatprep.subr.mxu0 0.0
        %2474 = vmatpush2.msra.mxu0 0.0
        %2475 = vmatprep.subr.mxu0 0.0
        %2476 = vmatpush2.msra.mxu0 0.0
        %2477 = vmatprep.subr.mxu0 0.0
        %2478 = vmatpush2.msra.mxu0 0.0
        %2479 = vmatprep.subr.mxu0 0.0
        %2480 = vmatpush2.msra.mxu0 0.0
        %2481 = vmatprep.subr.mxu0 0.0
        %2482 = vmatpush2.msra.mxu0 0.0
        %2483 = vmatprep.subr.mxu0 0.0
        %2484 = vmatpush2.msra.mxu0 0.0
        %2485 = vmatprep.subr.mxu0 0.0
        %2486 = vmatpush2.msra.mxu0 0.0
        %2487 = vmatprep.subr.mxu0 0.0
        %2488 = vmatpush2.msra.mxu0 0.0
        %2489 = vmatprep.subr.mxu0 0.0
        %2490 = vmatpush2.msra.mxu0 0.0
        %2491 = vmatprep.subr.mxu0 0.0
        %2492 = vmatpush2.msra.mxu0 0.0
        %2493 = vmatprep.mubr.f32.mxu0 0.0
        %2494 = vmatmul.mubr.f32.gmra.mxu0 %v2427
        %v2495 = vpop.f32.mrf.mxu0
        %v2496 = vadd.f32 0.0, %v2495
        %v2497 = vpop.f32.mrf.mxu0
        %2498 = vdwg.mxu0
        %v2500 = vsel %vm966, %v2425, 0
        %2502 = vmatprep.subr.mxu0 0.0
        %2503 = vmatpush1.msra.mxu0 0.0
        %2504 = vmatprep.subr.mxu0 0.0
        %2505 = vmatpush1.msra.mxu0 0.0
        %2506 = vmatprep.subr.mxu0 0.0
        %2507 = vmatpush1.msra.mxu0 0.0
        %2508 = vmatprep.subr.mxu0 0.0
        %2509 = vmatpush1.msra.mxu0 0.0
        %2510 = vmatprep.subr.mxu0 0.0
        %2511 = vmatpush1.msra.mxu0 0.0
        %2512 = vmatprep.subr.mxu0 0.0
        %2513 = vmatpush1.msra.mxu0 0.0
        %2514 = vmatprep.subr.mxu0 0.0
        %2515 = vmatpush1.msra.mxu0 0.0
        %2516 = vmatprep.subr.mxu0 0.0
        %2517 = vmatpush1.msra.mxu0 0.0
        %2518 = vmatprep.subr.mxu0 0.0
        %2519 = vmatpush1.msra.mxu0 0.0
        %2520 = vmatprep.subr.mxu0 0.0
        %2521 = vmatpush1.msra.mxu0 0.0
        %2522 = vmatprep.subr.mxu0 0.0
        %2523 = vmatpush1.msra.mxu0 0.0
        %2524 = vmatprep.subr.mxu0 0.0
        %2525 = vmatpush1.msra.mxu0 0.0
        %2526 = vmatprep.subr.mxu0 0.0
        %2527 = vmatpush1.msra.mxu0 0.0
        %2528 = vmatprep.subr.mxu0 0.0
        %2529 = vmatpush1.msra.mxu0 0.0
        %2530 = vmatprep.subr.mxu0 0.0
        %2531 = vmatpush1.msra.mxu0 0.0
        %2532 = vmatprep.subr.mxu0 0.0
        %2533 = vmatpush1.msra.mxu0 %v2249
        %2534 = vmatprep.subr.mxu0 0.0
        %2535 = vmatpush2.msra.mxu0 0.0
        %2536 = vmatprep.subr.mxu0 0.0
        %2537 = vmatpush2.msra.mxu0 0.0
        %2538 = vmatprep.subr.mxu0 0.0
        %2539 = vmatpush2.msra.mxu0 0.0
        %2540 = vmatprep.subr.mxu0 0.0
        %2541 = vmatpush2.msra.mxu0 0.0
        %2542 = vmatprep.subr.mxu0 0.0
        %2543 = vmatpush2.msra.mxu0 0.0
        %2544 = vmatprep.subr.mxu0 0.0
        %2545 = vmatpush2.msra.mxu0 0.0
        %2546 = vmatprep.subr.mxu0 0.0
        %2547 = vmatpush2.msra.mxu0 0.0
        %2548 = vmatprep.subr.mxu0 0.0
        %2549 = vmatpush2.msra.mxu0 0.0
        %2550 = vmatprep.subr.mxu0 0.0
        %2551 = vmatpush2.msra.mxu0 0.0
        %2552 = vmatprep.subr.mxu0 0.0
        %2553 = vmatpush2.msra.mxu0 0.0
        %2554 = vmatprep.subr.mxu0 0.0
        %2555 = vmatpush2.msra.mxu0 0.0
        %2556 = vmatprep.subr.mxu0 0.0
        %2557 = vmatpush2.msra.mxu0 0.0
        %2558 = vmatprep.subr.mxu0 0.0
        %2559 = vmatpush2.msra.mxu0 0.0
        %2560 = vmatprep.subr.mxu0 0.0
        %2561 = vmatpush2.msra.mxu0 0.0
        %2562 = vmatprep.subr.mxu0 0.0
        %2563 = vmatpush2.msra.mxu0 0.0
        %2564 = vmatprep.subr.mxu0 0.0
        %2565 = vmatpush2.msra.mxu0 0.0
        %2566 = vmatprep.mubr.f32.mxu0 0.0
        %2567 = vmatmul.mubr.f32.gmra.mxu0 %v2500
        %v2568 = vpop.f32.mrf.mxu0
        %v2569 = vadd.f32 0.0, %v2568
        %v2570 = vpop.f32.mrf.mxu0
        %2571 = vdwg.mxu0
        %s2572 = scalar_lea.vmem %s667, 16
        %v2573 = vld [vmem:[%s2572] sm:$0xff]
        %v2575 = vsel %vm966, %v2496, 0
        %v2578 = vsel %vm966, %v2569, 0
        %2580 = vmatprep.subr.mxu0 0.0
        %2581 = vmatpush1.msra.mxu0 0.0
        %2582 = vmatprep.subr.mxu0 0.0
        %2583 = vmatpush1.msra.mxu0 0.0
        %2584 = vmatprep.subr.mxu0 0.0
        %2585 = vmatpush1.msra.mxu0 0.0
        %2586 = vmatprep.subr.mxu0 0.0
        %2587 = vmatpush1.msra.mxu0 0.0
        %2588 = vmatprep.subr.mxu0 0.0
        %2589 = vmatpush1.msra.mxu0 0.0
        %2590 = vmatprep.subr.mxu0 0.0
        %2591 = vmatpush1.msra.mxu0 0.0
        %2592 = vmatprep.subr.mxu0 0.0
        %2593 = vmatpush1.msra.mxu0 0.0
        %2594 = vmatprep.subr.mxu0 0.0
        %2595 = vmatpush1.msra.mxu0 0.0
        %2596 = vmatprep.subr.mxu0 0.0
        %2597 = vmatpush1.msra.mxu0 0.0
        %2598 = vmatprep.subr.mxu0 0.0
        %2599 = vmatpush1.msra.mxu0 0.0
        %2600 = vmatprep.subr.mxu0 0.0
        %2601 = vmatpush1.msra.mxu0 0.0
        %2602 = vmatprep.subr.mxu0 0.0
        %2603 = vmatpush1.msra.mxu0 0.0
        %2604 = vmatprep.subr.mxu0 0.0
        %2605 = vmatpush1.msra.mxu0 0.0
        %2606 = vmatprep.subr.mxu0 0.0
        %2607 = vmatpush1.msra.mxu0 0.0
        %2608 = vmatprep.subr.mxu0 0.0
        %2609 = vmatpush1.msra.mxu0 0.0
        %2610 = vmatprep.subr.mxu0 0.0
        %2611 = vmatpush1.msra.mxu0 %v2573
        %2612 = vmatprep.subr.mxu0 0.0
        %2613 = vmatpush2.msra.mxu0 0.0
        %2614 = vmatprep.subr.mxu0 0.0
        %2615 = vmatpush2.msra.mxu0 0.0
        %2616 = vmatprep.subr.mxu0 0.0
        %2617 = vmatpush2.msra.mxu0 0.0
        %2618 = vmatprep.subr.mxu0 0.0
        %2619 = vmatpush2.msra.mxu0 0.0
        %2620 = vmatprep.subr.mxu0 0.0
        %2621 = vmatpush2.msra.mxu0 0.0
        %2622 = vmatprep.subr.mxu0 0.0
        %2623 = vmatpush2.msra.mxu0 0.0
        %2624 = vmatprep.subr.mxu0 0.0
        %2625 = vmatpush2.msra.mxu0 0.0
        %2626 = vmatprep.subr.mxu0 0.0
        %2627 = vmatpush2.msra.mxu0 0.0
        %2628 = vmatprep.subr.mxu0 0.0
        %2629 = vmatpush2.msra.mxu0 0.0
        %2630 = vmatprep.subr.mxu0 0.0
        %2631 = vmatpush2.msra.mxu0 0.0
        %2632 = vmatprep.subr.mxu0 0.0
        %2633 = vmatpush2.msra.mxu0 0.0
        %2634 = vmatprep.subr.mxu0 0.0
        %2635 = vmatpush2.msra.mxu0 0.0
        %2636 = vmatprep.subr.mxu0 0.0
        %2637 = vmatpush2.msra.mxu0 0.0
        %2638 = vmatprep.subr.mxu0 0.0
        %2639 = vmatpush2.msra.mxu0 0.0
        %2640 = vmatprep.subr.mxu0 0.0
        %2641 = vmatpush2.msra.mxu0 0.0
        %2642 = vmatprep.subr.mxu0 0.0
        %2643 = vmatpush2.msra.mxu0 0.0
        %2644 = vmatprep.mubr.f32.mxu0 0.0
        %2645 = vmatmul.mubr.f32.gmra.mxu0 %v2575
        %v2646 = vpop.f32.mrf.mxu0
        %v2647 = vadd.f32 0.0, %v2646
        %v2648 = vpop.f32.mrf.mxu0
        %2649 = vmatprep.mubr.f32.mxu0 0.0
        %2650 = vmatmul.mubr.f32.gmra.mxu0 %v2578
        %v2651 = vpop.f32.mrf.mxu0
        %v2652 = vadd.f32 0.0, %v2651
        %v2653 = vpop.f32.mrf.mxu0
        %2654 = vdwg.mxu0
        %v2655 = vadd.f32 %v2004, %v2647
        %v2656 = vadd.f32 %v2009, %v2652
        %s2657 = scalar_lea.vmem %s652, 96
        %v2658 = vld [vmem:[%s2657] sm:$0xff]
        %v2659 = vld [vmem:[%s2657 + $0x8] sm:$0xff]
        %v2660 = vld [vmem:[%s2657 + $0x10] sm:$0xff]
        %v2661 = vld [vmem:[%s2657 + $0x18] sm:$0xff]
        %2662 = vmatprep.subr.mxu0 0.0
        %2663 = vmatpush1.msra.mxu0 0.0
        %2664 = vmatprep.subr.mxu0 0.0
        %2665 = vmatpush1.msra.mxu0 0.0
        %2666 = vmatprep.subr.mxu0 0.0
        %2667 = vmatpush1.msra.mxu0 0.0
        %2668 = vmatprep.subr.mxu0 0.0
        %2669 = vmatpush1.msra.mxu0 0.0
        %2670 = vmatprep.subr.mxu0 0.0
        %2671 = vmatpush1.msra.mxu0 0.0
        %2672 = vmatprep.subr.mxu0 0.0
        %2673 = vmatpush1.msra.mxu0 0.0
        %2674 = vmatprep.subr.mxu0 0.0
        %2675 = vmatpush1.msra.mxu0 0.0
        %2676 = vmatprep.subr.mxu0 0.0
        %2677 = vmatpush1.msra.mxu0 0.0
        %2678 = vmatprep.subr.mxu0 0.0
        %2679 = vmatpush1.msra.mxu0 0.0
        %2680 = vmatprep.subr.mxu0 0.0
        %2681 = vmatpush1.msra.mxu0 0.0
        %2682 = vmatprep.subr.mxu0 0.0
        %2683 = vmatpush1.msra.mxu0 0.0
        %2684 = vmatprep.subr.mxu0 0.0
        %2685 = vmatpush1.msra.mxu0 0.0
        %2686 = vmatprep.subr.mxu0 0.0
        %2687 = vmatpush1.msra.mxu0 %v2661
        %2688 = vmatprep.subr.mxu0 0.0
        %2689 = vmatpush1.msra.mxu0 %v2660
        %2690 = vmatprep.subr.mxu0 0.0
        %2691 = vmatpush1.msra.mxu0 %v2659
        %2692 = vmatprep.subr.mxu0 0.0
        %2693 = vmatpush1.msra.mxu0 %v2658
        %2694 = vmatprep.subr.mxu0 0.0
        %2695 = vmatpush2.msra.mxu0 0.0
        %2696 = vmatprep.subr.mxu0 0.0
        %2697 = vmatpush2.msra.mxu0 0.0
        %2698 = vmatprep.subr.mxu0 0.0
        %2699 = vmatpush2.msra.mxu0 0.0
        %2700 = vmatprep.subr.mxu0 0.0
        %2701 = vmatpush2.msra.mxu0 0.0
        %2702 = vmatprep.subr.mxu0 0.0
        %2703 = vmatpush2.msra.mxu0 0.0
        %2704 = vmatprep.subr.mxu0 0.0
        %2705 = vmatpush2.msra.mxu0 0.0
        %2706 = vmatprep.subr.mxu0 0.0
        %2707 = vmatpush2.msra.mxu0 0.0
        %2708 = vmatprep.subr.mxu0 0.0
        %2709 = vmatpush2.msra.mxu0 0.0
        %2710 = vmatprep.subr.mxu0 0.0
        %2711 = vmatpush2.msra.mxu0 0.0
        %2712 = vmatprep.subr.mxu0 0.0
        %2713 = vmatpush2.msra.mxu0 0.0
        %2714 = vmatprep.subr.mxu0 0.0
        %2715 = vmatpush2.msra.mxu0 0.0
        %2716 = vmatprep.subr.mxu0 0.0
        %2717 = vmatpush2.msra.mxu0 0.0
        %2718 = vmatprep.subr.mxu0 0.0
        %2719 = vmatpush2.msra.mxu0 0.0
        %2720 = vmatprep.subr.mxu0 0.0
        %2721 = vmatpush2.msra.mxu0 0.0
        %2722 = vmatprep.subr.mxu0 0.0
        %2723 = vmatpush2.msra.mxu0 0.0
        %2724 = vmatprep.subr.mxu0 0.0
        %2725 = vmatpush2.msra.mxu0 0.0
        %2726 = vmatprep.mubr.f32.mxu0 0.0
        %2727 = vmatmul.mubr.f32.gmra.mxu0 %v716
        %v2728 = vpop.f32.mrf.mxu0
        %v2729 = vadd.f32 0.0, %v2728
        %v2730 = vpop.f32.mrf.mxu0
        %2731 = vmatprep.mubr.f32.mxu0 0.0
        %2732 = vmatmul.mubr.f32.gmra.mxu0 %v719
        %v2733 = vpop.f32.mrf.mxu0
        %v2734 = vadd.f32 0.0, %v2733
        %v2735 = vpop.f32.mrf.mxu0
        %2736 = vdwg.mxu0
        %s2737 = scalar_lea.vmem %s657, 96
        %v2738 = vld [vmem:[%s2737] sm:$0xff]
        %v2739 = vld [vmem:[%s2737 + $0x8] sm:$0xff]
        %v2740 = vld [vmem:[%s2737 + $0x10] sm:$0xff]
        %v2741 = vld [vmem:[%s2737 + $0x18] sm:$0xff]
        %2742 = vmatprep.subr.mxu0 0.0
        %2743 = vmatpush1.msra.mxu0 0.0
        %2744 = vmatprep.subr.mxu0 0.0
        %2745 = vmatpush1.msra.mxu0 0.0
        %2746 = vmatprep.subr.mxu0 0.0
        %2747 = vmatpush1.msra.mxu0 0.0
        %2748 = vmatprep.subr.mxu0 0.0
        %2749 = vmatpush1.msra.mxu0 0.0
        %2750 = vmatprep.subr.mxu0 0.0
        %2751 = vmatpush1.msra.mxu0 0.0
        %2752 = vmatprep.subr.mxu0 0.0
        %2753 = vmatpush1.msra.mxu0 0.0
        %2754 = vmatprep.subr.mxu0 0.0
        %2755 = vmatpush1.msra.mxu0 0.0
        %2756 = vmatprep.subr.mxu0 0.0
        %2757 = vmatpush1.msra.mxu0 0.0
        %2758 = vmatprep.subr.mxu0 0.0
        %2759 = vmatpush1.msra.mxu0 0.0
        %2760 = vmatprep.subr.mxu0 0.0
        %2761 = vmatpush1.msra.mxu0 0.0
        %2762 = vmatprep.subr.mxu0 0.0
        %2763 = vmatpush1.msra.mxu0 0.0
        %2764 = vmatprep.subr.mxu0 0.0
        %2765 = vmatpush1.msra.mxu0 0.0
        %2766 = vmatprep.subr.mxu0 0.0
        %2767 = vmatpush1.msra.mxu0 %v2741
        %2768 = vmatprep.subr.mxu0 0.0
        %2769 = vmatpush1.msra.mxu0 %v2740
        %2770 = vmatprep.subr.mxu0 0.0
        %2771 = vmatpush1.msra.mxu0 %v2739
        %2772 = vmatprep.subr.mxu0 0.0
        %2773 = vmatpush1.msra.mxu0 %v2738
        %2774 = vmatprep.subr.mxu0 0.0
        %2775 = vmatpush2.msra.mxu0 0.0
        %2776 = vmatprep.subr.mxu0 0.0
        %2777 = vmatpush2.msra.mxu0 0.0
        %2778 = vmatprep.subr.mxu0 0.0
        %2779 = vmatpush2.msra.mxu0 0.0
        %2780 = vmatprep.subr.mxu0 0.0
        %2781 = vmatpush2.msra.mxu0 0.0
        %2782 = vmatprep.subr.mxu0 0.0
        %2783 = vmatpush2.msra.mxu0 0.0
        %2784 = vmatprep.subr.mxu0 0.0
        %2785 = vmatpush2.msra.mxu0 0.0
        %2786 = vmatprep.subr.mxu0 0.0
        %2787 = vmatpush2.msra.mxu0 0.0
        %2788 = vmatprep.subr.mxu0 0.0
        %2789 = vmatpush2.msra.mxu0 0.0
        %2790 = vmatprep.subr.mxu0 0.0
        %2791 = vmatpush2.msra.mxu0 0.0
        %2792 = vmatprep.subr.mxu0 0.0
        %2793 = vmatpush2.msra.mxu0 0.0
        %2794 = vmatprep.subr.mxu0 0.0
        %2795 = vmatpush2.msra.mxu0 0.0
        %2796 = vmatprep.subr.mxu0 0.0
        %2797 = vmatpush2.msra.mxu0 0.0
        %2798 = vmatprep.subr.mxu0 0.0
        %2799 = vmatpush2.msra.mxu0 0.0
        %2800 = vmatprep.subr.mxu0 0.0
        %2801 = vmatpush2.msra.mxu0 0.0
        %2802 = vmatprep.subr.mxu0 0.0
        %2803 = vmatpush2.msra.mxu0 0.0
        %2804 = vmatprep.subr.mxu0 0.0
        %2805 = vmatpush2.msra.mxu0 0.0
        %2806 = vmatprep.mubr.f32.mxu0 0.0
        %2807 = vmatmul.mubr.f32.gmra.mxu0 %v716
        %v2808 = vpop.f32.mrf.mxu0
        %v2809 = vadd.f32 0.0, %v2808
        %v2810 = vpop.f32.mrf.mxu0
        %2811 = vmatprep.mubr.f32.mxu0 0.0
        %2812 = vmatmul.mubr.f32.gmra.mxu0 %v719
        %v2813 = vpop.f32.mrf.mxu0
        %v2814 = vadd.f32 0.0, %v2813
        %v2815 = vpop.f32.mrf.mxu0
        %2816 = vdwg.mxu0
        %s2817 = scalar_lea.vmem %s662, 96
        %v2818 = vld [vmem:[%s2817] sm:$0xff]
        %v2819 = vld [vmem:[%s2817 + $0x8] sm:$0xff]
        %v2820 = vld [vmem:[%s2817 + $0x10] sm:$0xff]
        %v2821 = vld [vmem:[%s2817 + $0x18] sm:$0xff]
        %2822 = vmatprep.subr.mxu0 0.0
        %2823 = vmatpush1.msra.mxu0 0.0
        %2824 = vmatprep.subr.mxu0 0.0
        %2825 = vmatpush1.msra.mxu0 0.0
        %2826 = vmatprep.subr.mxu0 0.0
        %2827 = vmatpush1.msra.mxu0 0.0
        %2828 = vmatprep.subr.mxu0 0.0
        %2829 = vmatpush1.msra.mxu0 0.0
        %2830 = vmatprep.subr.mxu0 0.0
        %2831 = vmatpush1.msra.mxu0 0.0
        %2832 = vmatprep.subr.mxu0 0.0
        %2833 = vmatpush1.msra.mxu0 0.0
        %2834 = vmatprep.subr.mxu0 0.0
        %2835 = vmatpush1.msra.mxu0 0.0
        %2836 = vmatprep.subr.mxu0 0.0
        %2837 = vmatpush1.msra.mxu0 0.0
        %2838 = vmatprep.subr.mxu0 0.0
        %2839 = vmatpush1.msra.mxu0 0.0
        %2840 = vmatprep.subr.mxu0 0.0
        %2841 = vmatpush1.msra.mxu0 0.0
        %2842 = vmatprep.subr.mxu0 0.0
        %2843 = vmatpush1.msra.mxu0 0.0
        %2844 = vmatprep.subr.mxu0 0.0
        %2845 = vmatpush1.msra.mxu0 0.0
        %2846 = vmatprep.subr.mxu0 0.0
        %2847 = vmatpush1.msra.mxu0 %v2821
        %2848 = vmatprep.subr.mxu0 0.0
        %2849 = vmatpush1.msra.mxu0 %v2820
        %2850 = vmatprep.subr.mxu0 0.0
        %2851 = vmatpush1.msra.mxu0 %v2819
        %2852 = vmatprep.subr.mxu0 0.0
        %2853 = vmatpush1.msra.mxu0 %v2818
        %2854 = vmatprep.subr.mxu0 0.0
        %2855 = vmatpush2.msra.mxu0 0.0
        %2856 = vmatprep.subr.mxu0 0.0
        %2857 = vmatpush2.msra.mxu0 0.0
        %2858 = vmatprep.subr.mxu0 0.0
        %2859 = vmatpush2.msra.mxu0 0.0
        %2860 = vmatprep.subr.mxu0 0.0
        %2861 = vmatpush2.msra.mxu0 0.0
        %2862 = vmatprep.subr.mxu0 0.0
        %2863 = vmatpush2.msra.mxu0 0.0
        %2864 = vmatprep.subr.mxu0 0.0
        %2865 = vmatpush2.msra.mxu0 0.0
        %2866 = vmatprep.subr.mxu0 0.0
        %2867 = vmatpush2.msra.mxu0 0.0
        %2868 = vmatprep.subr.mxu0 0.0
        %2869 = vmatpush2.msra.mxu0 0.0
        %2870 = vmatprep.subr.mxu0 0.0
        %2871 = vmatpush2.msra.mxu0 0.0
        %2872 = vmatprep.subr.mxu0 0.0
        %2873 = vmatpush2.msra.mxu0 0.0
        %2874 = vmatprep.subr.mxu0 0.0
        %2875 = vmatpush2.msra.mxu0 0.0
        %2876 = vmatprep.subr.mxu0 0.0
        %2877 = vmatpush2.msra.mxu0 0.0
        %2878 = vmatprep.subr.mxu0 0.0
        %2879 = vmatpush2.msra.mxu0 0.0
        %2880 = vmatprep.subr.mxu0 0.0
        %2881 = vmatpush2.msra.mxu0 0.0
        %2882 = vmatprep.subr.mxu0 0.0
        %2883 = vmatpush2.msra.mxu0 0.0
        %2884 = vmatprep.subr.mxu0 0.0
        %2885 = vmatpush2.msra.mxu0 0.0
        %2886 = vmatprep.mubr.f32.mxu0 0.0
        %2887 = vmatmul.mubr.f32.gmra.mxu0 %v716
        %v2888 = vpop.f32.mrf.mxu0
        %v2889 = vadd.f32 0.0, %v2888
        %v2890 = vpop.f32.mrf.mxu0
        %2891 = vmatprep.mubr.f32.mxu0 0.0
        %2892 = vmatmul.mubr.f32.gmra.mxu0 %v719
        %v2893 = vpop.f32.mrf.mxu0
        %v2894 = vadd.f32 0.0, %v2893
        %v2895 = vpop.f32.mrf.mxu0
        %2896 = vdwg.mxu0
        %v2898 = vsel %vm966, %v2729, 0
        %v2901 = vsel %vm966, %v2809, 0
        %2903 = vmatprep.subr.mxu0 0.0
        %2904 = vmatpush1.xpose.msra.mxu0 0.0
        %2905 = vmatprep.subr.mxu0 0.0
        %2906 = vmatpush1.xpose.msra.mxu0 0.0
        %2907 = vmatprep.subr.mxu0 0.0
        %2908 = vmatpush1.xpose.msra.mxu0 0.0
        %2909 = vmatprep.subr.mxu0 0.0
        %2910 = vmatpush1.xpose.msra.mxu0 0.0
        %2911 = vmatprep.subr.mxu0 0.0
        %2912 = vmatpush1.xpose.msra.mxu0 0.0
        %2913 = vmatprep.subr.mxu0 0.0
        %2914 = vmatpush1.xpose.msra.mxu0 0.0
        %2915 = vmatprep.subr.mxu0 0.0
        %2916 = vmatpush1.xpose.msra.mxu0 0.0
        %2917 = vmatprep.subr.mxu0 0.0
        %2918 = vmatpush1.xpose.msra.mxu0 0.0
        %2919 = vmatprep.subr.mxu0 0.0
        %2920 = vmatpush1.xpose.msra.mxu0 0.0
        %2921 = vmatprep.subr.mxu0 0.0
        %2922 = vmatpush1.xpose.msra.mxu0 0.0
        %2923 = vmatprep.subr.mxu0 0.0
        %2924 = vmatpush1.xpose.msra.mxu0 0.0
        %2925 = vmatprep.subr.mxu0 0.0
        %2926 = vmatpush1.xpose.msra.mxu0 0.0
        %2927 = vmatprep.subr.mxu0 0.0
        %2928 = vmatpush1.xpose.msra.mxu0 0.0
        %2929 = vmatprep.subr.mxu0 0.0
        %2930 = vmatpush1.xpose.msra.mxu0 0.0
        %2931 = vmatprep.subr.mxu0 0.0
        %2932 = vmatpush1.xpose.msra.mxu0 0.0
        %2933 = vmatprep.subr.mxu0 0.0
        %2934 = vmatpush1.xpose.msra.mxu0 %v2901
        %2935 = vmatprep.subr.mxu0 0.0
        %2936 = vmatpush2.xpose.msra.mxu0 0.0
        %2937 = vmatprep.subr.mxu0 0.0
        %2938 = vmatpush2.xpose.msra.mxu0 0.0
        %2939 = vmatprep.subr.mxu0 0.0
        %2940 = vmatpush2.xpose.msra.mxu0 0.0
        %2941 = vmatprep.subr.mxu0 0.0
        %2942 = vmatpush2.xpose.msra.mxu0 0.0
        %2943 = vmatprep.subr.mxu0 0.0
        %2944 = vmatpush2.xpose.msra.mxu0 0.0
        %2945 = vmatprep.subr.mxu0 0.0
        %2946 = vmatpush2.xpose.msra.mxu0 0.0
        %2947 = vmatprep.subr.mxu0 0.0
        %2948 = vmatpush2.xpose.msra.mxu0 0.0
        %2949 = vmatprep.subr.mxu0 0.0
        %2950 = vmatpush2.xpose.msra.mxu0 0.0
        %2951 = vmatprep.subr.mxu0 0.0
        %2952 = vmatpush2.xpose.msra.mxu0 0.0
        %2953 = vmatprep.subr.mxu0 0.0
        %2954 = vmatpush2.xpose.msra.mxu0 0.0
        %2955 = vmatprep.subr.mxu0 0.0
        %2956 = vmatpush2.xpose.msra.mxu0 0.0
        %2957 = vmatprep.subr.mxu0 0.0
        %2958 = vmatpush2.xpose.msra.mxu0 0.0
        %2959 = vmatprep.subr.mxu0 0.0
        %2960 = vmatpush2.xpose.msra.mxu0 0.0
        %2961 = vmatprep.subr.mxu0 0.0
        %2962 = vmatpush2.xpose.msra.mxu0 0.0
        %2963 = vmatprep.subr.mxu0 0.0
        %2964 = vmatpush2.xpose.msra.mxu0 0.0
        %2965 = vmatprep.subr.mxu0 0.0
        %2966 = vmatpush2.xpose.msra.mxu0 0.0
        %2967 = vmatprep.mubr.f32.mxu0 0.0
        %2968 = vmatmul.mubr.f32.gmra.mxu0 %v2898
        %v2969 = vpop.f32.mrf.mxu0
        %v2970 = vadd.f32 %v959, %v2969
        %v2971 = vpop.f32.mrf.mxu0
        %2972 = vdwg.mxu0
        %v2974 = vsel %vm966, %v2734, 0
        %v2977 = vsel %vm966, %v2814, 0
        %2979 = vmatprep.subr.mxu0 0.0
        %2980 = vmatpush1.xpose.msra.mxu0 0.0
        %2981 = vmatprep.subr.mxu0 0.0
        %2982 = vmatpush1.xpose.msra.mxu0 0.0
        %2983 = vmatprep.subr.mxu0 0.0
        %2984 = vmatpush1.xpose.msra.mxu0 0.0
        %2985 = vmatprep.subr.mxu0 0.0
        %2986 = vmatpush1.xpose.msra.mxu0 0.0
        %2987 = vmatprep.subr.mxu0 0.0
        %2988 = vmatpush1.xpose.msra.mxu0 0.0
        %2989 = vmatprep.subr.mxu0 0.0
        %2990 = vmatpush1.xpose.msra.mxu0 0.0
        %2991 = vmatprep.subr.mxu0 0.0
        %2992 = vmatpush1.xpose.msra.mxu0 0.0
        %2993 = vmatprep.subr.mxu0 0.0
        %2994 = vmatpush1.xpose.msra.mxu0 0.0
        %2995 = vmatprep.subr.mxu0 0.0
        %2996 = vmatpush1.xpose.msra.mxu0 0.0
        %2997 = vmatprep.subr.mxu0 0.0
        %2998 = vmatpush1.xpose.msra.mxu0 0.0
        %2999 = vmatprep.subr.mxu0 0.0
        %3000 = vmatpush1.xpose.msra.mxu0 0.0
        %3001 = vmatprep.subr.mxu0 0.0
        %3002 = vmatpush1.xpose.msra.mxu0 0.0
        %3003 = vmatprep.subr.mxu0 0.0
        %3004 = vmatpush1.xpose.msra.mxu0 0.0
        %3005 = vmatprep.subr.mxu0 0.0
        %3006 = vmatpush1.xpose.msra.mxu0 0.0
        %3007 = vmatprep.subr.mxu0 0.0
        %3008 = vmatpush1.xpose.msra.mxu0 0.0
        %3009 = vmatprep.subr.mxu0 0.0
        %3010 = vmatpush1.xpose.msra.mxu0 %v2977
        %3011 = vmatprep.subr.mxu0 0.0
        %3012 = vmatpush2.xpose.msra.mxu0 0.0
        %3013 = vmatprep.subr.mxu0 0.0
        %3014 = vmatpush2.xpose.msra.mxu0 0.0
        %3015 = vmatprep.subr.mxu0 0.0
        %3016 = vmatpush2.xpose.msra.mxu0 0.0
        %3017 = vmatprep.subr.mxu0 0.0
        %3018 = vmatpush2.xpose.msra.mxu0 0.0
        %3019 = vmatprep.subr.mxu0 0.0
        %3020 = vmatpush2.xpose.msra.mxu0 0.0
        %3021 = vmatprep.subr.mxu0 0.0
        %3022 = vmatpush2.xpose.msra.mxu0 0.0
        %3023 = vmatprep.subr.mxu0 0.0
        %3024 = vmatpush2.xpose.msra.mxu0 0.0
        %3025 = vmatprep.subr.mxu0 0.0
        %3026 = vmatpush2.xpose.msra.mxu0 0.0
        %3027 = vmatprep.subr.mxu0 0.0
        %3028 = vmatpush2.xpose.msra.mxu0 0.0
        %3029 = vmatprep.subr.mxu0 0.0
        %3030 = vmatpush2.xpose.msra.mxu0 0.0
        %3031 = vmatprep.subr.mxu0 0.0
        %3032 = vmatpush2.xpose.msra.mxu0 0.0
        %3033 = vmatprep.subr.mxu0 0.0
        %3034 = vmatpush2.xpose.msra.mxu0 0.0
        %3035 = vmatprep.subr.mxu0 0.0
        %3036 = vmatpush2.xpose.msra.mxu0 0.0
        %3037 = vmatprep.subr.mxu0 0.0
        %3038 = vmatpush2.xpose.msra.mxu0 0.0
        %3039 = vmatprep.subr.mxu0 0.0
        %3040 = vmatpush2.xpose.msra.mxu0 0.0
        %3041 = vmatprep.subr.mxu0 0.0
        %3042 = vmatpush2.xpose.msra.mxu0 0.0
        %3043 = vmatprep.mubr.f32.mxu0 0.0
        %3044 = vmatmul.mubr.f32.gmra.mxu0 %v2974
        %v3045 = vpop.f32.mrf.mxu0
        %v3046 = vadd.f32 %v963, %v3045
        %v3047 = vpop.f32.mrf.mxu0
        %3048 = vdwg.mxu0
        %v3049 = vsel %vm966, %v2970, -inf
        %3050 = vmax.xlane.f32.xlu0 %v3049
        %v3051 = vpop.xlane.xlu0 %3050
        %v3052 = vsel %vm966, %v3046, -inf
        %3053 = vmax.xlane.f32.xlu0 %v3052
        %v3054 = vpop.xlane.xlu0 %3053
        %v3055 = vsub.f32 %v2970, %v3051
        %v3056 = vsub.f32 %v3046, %v3054
        %v3057 = vmul.f32 %v3055, 1.442695
        %v3058 = vpow.pop %v3057
        %v3059 = vmul.f32 %v3056, 1.442695
        %v3060 = vpow.pop %v3059
        %v3061 = vsel %vm966, %v3058, 0.0
        %3062 = vadd.xlane.f32.xlu0 %v3061
        %v3063 = vpop.xlane.xlu0 %3062
        %v3064 = vsel %vm966, %v3060, 0.0
        %3065 = vadd.xlane.f32.xlu0 %v3064
        %v3066 = vpop.xlane.xlu0 %3065
        %v3067 = vrcp.pop %v3063
        %v3068 = vrcp.pop %v3066
        %v3069 = vmul.f32 %v3058, %v3067
        %v3070 = vmul.f32 %v3060, %v3068
        %v3072 = vsel %vm966, %v3069, 0
        %3074 = vmatprep.subr.mxu0 0.0
        %3075 = vmatpush1.msra.mxu0 0.0
        %3076 = vmatprep.subr.mxu0 0.0
        %3077 = vmatpush1.msra.mxu0 0.0
        %3078 = vmatprep.subr.mxu0 0.0
        %3079 = vmatpush1.msra.mxu0 0.0
        %3080 = vmatprep.subr.mxu0 0.0
        %3081 = vmatpush1.msra.mxu0 0.0
        %3082 = vmatprep.subr.mxu0 0.0
        %3083 = vmatpush1.msra.mxu0 0.0
        %3084 = vmatprep.subr.mxu0 0.0
        %3085 = vmatpush1.msra.mxu0 0.0
        %3086 = vmatprep.subr.mxu0 0.0
        %3087 = vmatpush1.msra.mxu0 0.0
        %3088 = vmatprep.subr.mxu0 0.0
        %3089 = vmatpush1.msra.mxu0 0.0
        %3090 = vmatprep.subr.mxu0 0.0
        %3091 = vmatpush1.msra.mxu0 0.0
        %3092 = vmatprep.subr.mxu0 0.0
        %3093 = vmatpush1.msra.mxu0 0.0
        %3094 = vmatprep.subr.mxu0 0.0
        %3095 = vmatpush1.msra.mxu0 0.0
        %3096 = vmatprep.subr.mxu0 0.0
        %3097 = vmatpush1.msra.mxu0 0.0
        %3098 = vmatprep.subr.mxu0 0.0
        %3099 = vmatpush1.msra.mxu0 0.0
        %3100 = vmatprep.subr.mxu0 0.0
        %3101 = vmatpush1.msra.mxu0 0.0
        %3102 = vmatprep.subr.mxu0 0.0
        %3103 = vmatpush1.msra.mxu0 0.0
        %3104 = vmatprep.subr.mxu0 0.0
        %3105 = vmatpush1.msra.mxu0 %v2889
        %3106 = vmatprep.subr.mxu0 0.0
        %3107 = vmatpush2.msra.mxu0 0.0
        %3108 = vmatprep.subr.mxu0 0.0
        %3109 = vmatpush2.msra.mxu0 0.0
        %3110 = vmatprep.subr.mxu0 0.0
        %3111 = vmatpush2.msra.mxu0 0.0
        %3112 = vmatprep.subr.mxu0 0.0
        %3113 = vmatpush2.msra.mxu0 0.0
        %3114 = vmatprep.subr.mxu0 0.0
        %3115 = vmatpush2.msra.mxu0 0.0
        %3116 = vmatprep.subr.mxu0 0.0
        %3117 = vmatpush2.msra.mxu0 0.0
        %3118 = vmatprep.subr.mxu0 0.0
        %3119 = vmatpush2.msra.mxu0 0.0
        %3120 = vmatprep.subr.mxu0 0.0
        %3121 = vmatpush2.msra.mxu0 0.0
        %3122 = vmatprep.subr.mxu0 0.0
        %3123 = vmatpush2.msra.mxu0 0.0
        %3124 = vmatprep.subr.mxu0 0.0
        %3125 = vmatpush2.msra.mxu0 0.0
        %3126 = vmatprep.subr.mxu0 0.0
        %3127 = vmatpush2.msra.mxu0 0.0
        %3128 = vmatprep.subr.mxu0 0.0
        %3129 = vmatpush2.msra.mxu0 0.0
        %3130 = vmatprep.subr.mxu0 0.0
        %3131 = vmatpush2.msra.mxu0 0.0
        %3132 = vmatprep.subr.mxu0 0.0
        %3133 = vmatpush2.msra.mxu0 0.0
        %3134 = vmatprep.subr.mxu0 0.0
        %3135 = vmatpush2.msra.mxu0 0.0
        %3136 = vmatprep.subr.mxu0 0.0
        %3137 = vmatpush2.msra.mxu0 0.0
        %3138 = vmatprep.mubr.f32.mxu0 0.0
        %3139 = vmatmul.mubr.f32.gmra.mxu0 %v3072
        %v3140 = vpop.f32.mrf.mxu0
        %v3141 = vadd.f32 0.0, %v3140
        %v3142 = vpop.f32.mrf.mxu0
        %3143 = vdwg.mxu0
        %v3145 = vsel %vm966, %v3070, 0
        %3147 = vmatprep.subr.mxu0 0.0
        %3148 = vmatpush1.msra.mxu0 0.0
        %3149 = vmatprep.subr.mxu0 0.0
        %3150 = vmatpush1.msra.mxu0 0.0
        %3151 = vmatprep.subr.mxu0 0.0
        %3152 = vmatpush1.msra.mxu0 0.0
        %3153 = vmatprep.subr.mxu0 0.0
        %3154 = vmatpush1.msra.mxu0 0.0
        %3155 = vmatprep.subr.mxu0 0.0
        %3156 = vmatpush1.msra.mxu0 0.0
        %3157 = vmatprep.subr.mxu0 0.0
        %3158 = vmatpush1.msra.mxu0 0.0
        %3159 = vmatprep.subr.mxu0 0.0
        %3160 = vmatpush1.msra.mxu0 0.0
        %3161 = vmatprep.subr.mxu0 0.0
        %3162 = vmatpush1.msra.mxu0 0.0
        %3163 = vmatprep.subr.mxu0 0.0
        %3164 = vmatpush1.msra.mxu0 0.0
        %3165 = vmatprep.subr.mxu0 0.0
        %3166 = vmatpush1.msra.mxu0 0.0
        %3167 = vmatprep.subr.mxu0 0.0
        %3168 = vmatpush1.msra.mxu0 0.0
        %3169 = vmatprep.subr.mxu0 0.0
        %3170 = vmatpush1.msra.mxu0 0.0
        %3171 = vmatprep.subr.mxu0 0.0
        %3172 = vmatpush1.msra.mxu0 0.0
        %3173 = vmatprep.subr.mxu0 0.0
        %3174 = vmatpush1.msra.mxu0 0.0
        %3175 = vmatprep.subr.mxu0 0.0
        %3176 = vmatpush1.msra.mxu0 0.0
        %3177 = vmatprep.subr.mxu0 0.0
        %3178 = vmatpush1.msra.mxu0 %v2894
        %3179 = vmatprep.subr.mxu0 0.0
        %3180 = vmatpush2.msra.mxu0 0.0
        %3181 = vmatprep.subr.mxu0 0.0
        %3182 = vmatpush2.msra.mxu0 0.0
        %3183 = vmatprep.subr.mxu0 0.0
        %3184 = vmatpush2.msra.mxu0 0.0
        %3185 = vmatprep.subr.mxu0 0.0
        %3186 = vmatpush2.msra.mxu0 0.0
        %3187 = vmatprep.subr.mxu0 0.0
        %3188 = vmatpush2.msra.mxu0 0.0
        %3189 = vmatprep.subr.mxu0 0.0
        %3190 = vmatpush2.msra.mxu0 0.0
        %3191 = vmatprep.subr.mxu0 0.0
        %3192 = vmatpush2.msra.mxu0 0.0
        %3193 = vmatprep.subr.mxu0 0.0
        %3194 = vmatpush2.msra.mxu0 0.0
        %3195 = vmatprep.subr.mxu0 0.0
        %3196 = vmatpush2.msra.mxu0 0.0
        %3197 = vmatprep.subr.mxu0 0.0
        %3198 = vmatpush2.msra.mxu0 0.0
        %3199 = vmatprep.subr.mxu0 0.0
        %3200 = vmatpush2.msra.mxu0 0.0
        %3201 = vmatprep.subr.mxu0 0.0
        %3202 = vmatpush2.msra.mxu0 0.0
        %3203 = vmatprep.subr.mxu0 0.0
        %3204 = vmatpush2.msra.mxu0 0.0
        %3205 = vmatprep.subr.mxu0 0.0
        %3206 = vmatpush2.msra.mxu0 0.0
        %3207 = vmatprep.subr.mxu0 0.0
        %3208 = vmatpush2.msra.mxu0 0.0
        %3209 = vmatprep.subr.mxu0 0.0
        %3210 = vmatpush2.msra.mxu0 0.0
        %3211 = vmatprep.mubr.f32.mxu0 0.0
        %3212 = vmatmul.mubr.f32.gmra.mxu0 %v3145
        %v3213 = vpop.f32.mrf.mxu0
        %v3214 = vadd.f32 0.0, %v3213
        %v3215 = vpop.f32.mrf.mxu0
        %3216 = vdwg.mxu0
        %s3217 = scalar_lea.vmem %s667, 24
        %v3218 = vld [vmem:[%s3217] sm:$0xff]
        %v3220 = vsel %vm966, %v3141, 0
        %v3223 = vsel %vm966, %v3214, 0
        %3225 = vmatprep.subr.mxu0 0.0
        %3226 = vmatpush1.msra.mxu0 0.0
        %3227 = vmatprep.subr.mxu0 0.0
        %3228 = vmatpush1.msra.mxu0 0.0
        %3229 = vmatprep.subr.mxu0 0.0
        %3230 = vmatpush1.msra.mxu0 0.0
        %3231 = vmatprep.subr.mxu0 0.0
        %3232 = vmatpush1.msra.mxu0 0.0
        %3233 = vmatprep.subr.mxu0 0.0
        %3234 = vmatpush1.msra.mxu0 0.0
        %3235 = vmatprep.subr.mxu0 0.0
        %3236 = vmatpush1.msra.mxu0 0.0
        %3237 = vmatprep.subr.mxu0 0.0
        %3238 = vmatpush1.msra.mxu0 0.0
        %3239 = vmatprep.subr.mxu0 0.0
        %3240 = vmatpush1.msra.mxu0 0.0
        %3241 = vmatprep.subr.mxu0 0.0
        %3242 = vmatpush1.msra.mxu0 0.0
        %3243 = vmatprep.subr.mxu0 0.0
        %3244 = vmatpush1.msra.mxu0 0.0
        %3245 = vmatprep.subr.mxu0 0.0
        %3246 = vmatpush1.msra.mxu0 0.0
        %3247 = vmatprep.subr.mxu0 0.0
        %3248 = vmatpush1.msra.mxu0 0.0
        %3249 = vmatprep.subr.mxu0 0.0
        %3250 = vmatpush1.msra.mxu0 0.0
        %3251 = vmatprep.subr.mxu0 0.0
        %3252 = vmatpush1.msra.mxu0 0.0
        %3253 = vmatprep.subr.mxu0 0.0
        %3254 = vmatpush1.msra.mxu0 0.0
        %3255 = vmatprep.subr.mxu0 0.0
        %3256 = vmatpush1.msra.mxu0 %v3218
        %3257 = vmatprep.subr.mxu0 0.0
        %3258 = vmatpush2.msra.mxu0 0.0
        %3259 = vmatprep.subr.mxu0 0.0
        %3260 = vmatpush2.msra.mxu0 0.0
        %3261 = vmatprep.subr.mxu0 0.0
        %3262 = vmatpush2.msra.mxu0 0.0
        %3263 = vmatprep.subr.mxu0 0.0
        %3264 = vmatpush2.msra.mxu0 0.0
        %3265 = vmatprep.subr.mxu0 0.0
        %3266 = vmatpush2.msra.mxu0 0.0
        %3267 = vmatprep.subr.mxu0 0.0
        %3268 = vmatpush2.msra.mxu0 0.0
        %3269 = vmatprep.subr.mxu0 0.0
        %3270 = vmatpush2.msra.mxu0 0.0
        %3271 = vmatprep.subr.mxu0 0.0
        %3272 = vmatpush2.msra.mxu0 0.0
        %3273 = vmatprep.subr.mxu0 0.0
        %3274 = vmatpush2.msra.mxu0 0.0
        %3275 = vmatprep.subr.mxu0 0.0
        %3276 = vmatpush2.msra.mxu0 0.0
        %3277 = vmatprep.subr.mxu0 0.0
        %3278 = vmatpush2.msra.mxu0 0.0
        %3279 = vmatprep.subr.mxu0 0.0
        %3280 = vmatpush2.msra.mxu0 0.0
        %3281 = vmatprep.subr.mxu0 0.0
        %3282 = vmatpush2.msra.mxu0 0.0
        %3283 = vmatprep.subr.mxu0 0.0
        %3284 = vmatpush2.msra.mxu0 0.0
        %3285 = vmatprep.subr.mxu0 0.0
        %3286 = vmatpush2.msra.mxu0 0.0
        %3287 = vmatprep.subr.mxu0 0.0
        %3288 = vmatpush2.msra.mxu0 0.0
        %3289 = vmatprep.mubr.f32.mxu0 0.0
        %3290 = vmatmul.mubr.f32.gmra.mxu0 %v3220
        %v3291 = vpop.f32.mrf.mxu0
        %v3292 = vadd.f32 0.0, %v3291
        %v3293 = vpop.f32.mrf.mxu0
        %3294 = vmatprep.mubr.f32.mxu0 0.0
        %3295 = vmatmul.mubr.f32.gmra.mxu0 %v3223
        %v3296 = vpop.f32.mrf.mxu0
        %v3297 = vadd.f32 0.0, %v3296
        %v3298 = vpop.f32.mrf.mxu0
        %3299 = vdwg.mxu0
        %v3300 = vadd.f32 %v2655, %v3292
        %v3301 = vadd.f32 %v2656, %v3297
        %v3302 = vadd.f32 %v3300, %v706
        %v3303 = vadd.f32 %v3301, %v707
        %v3304 = vsel %vm714, %v3302, 0.0
        %3305 = vadd.xlane.f32.xlu0 %v3304
        %v3306 = vpop.xlane.xlu0 %3305
        %v3307 = vsel %vm714, %v3303, 0.0
        %3308 = vadd.xlane.f32.xlu0 %v3307
        %v3309 = vpop.xlane.xlu0 %3308
        %v3310 = vrcp.pop 32.0
        %v3311 = vmul.f32 %v3306, %v3310
        %v3312 = vmul.f32 %v3309, %v3310
        %v3313 = vsub.f32 %v3302, %v3311
        %v3314 = vsub.f32 %v3303, %v3312
        %v3315 = vmul.f32 %v3313, %v3313
        %v3316 = vmul.f32 %v3314, %v3314
        %v3317 = vsel %vm714, %v3315, 0.0
        %3318 = vadd.xlane.f32.xlu0 %v3317
        %v3319 = vpop.xlane.xlu0 %3318
        %v3320 = vsel %vm714, %v3316, 0.0
        %3321 = vadd.xlane.f32.xlu0 %v3320
        %v3322 = vpop.xlane.xlu0 %3321
        %v3323 = vmul.f32 %v3319, %v3310
        %v3324 = vmul.f32 %v3322, %v3310
        %v3325 = vadd.f32 %v3323, 1e-06
        %v3326 = vadd.f32 %v3324, 1e-06
        %v3327 = vrsqrt.pop %v3325
        %v3328 = vrsqrt.pop %v3326
        %v3329 = vmul.f32 %v3313, %v3327
        %v3330 = vmul.f32 %v3314, %v3328
        %v3331 = vld [vmem:[%s670] sm:$0x1]
        %v3333 = vlaneseq
        %v3334 = vshrl.u32 %v3333, 7
        %v3335 = vsub.s32 0, %v3334
        %v3336 = vrot.slane %v3331, %v3335
        %v3338 = vmul.f32 %v3329, %v3336
        %v3339 = vmul.f32 %v3330, %v3336
        %v3340 = vld [vmem:[%s673] sm:$0x1]
        %v3342 = vlaneseq
        %v3343 = vshrl.u32 %v3342, 7
        %v3344 = vsub.s32 0, %v3343
        %v3345 = vrot.slane %v3340, %v3344
        %v3347 = vadd.f32 %v3338, %v3345
        %v3348 = vadd.f32 %v3339, %v3345
        %v3349 = vld [vmem:[%s678] sm:$0xff]
        %v3350 = vld [vmem:[%s678 + $0x8] sm:$0xff]
        %v3351 = vld [vmem:[%s678 + $0x10] sm:$0xff]
        %v3352 = vld [vmem:[%s678 + $0x18] sm:$0xff]
        %v3353 = vld [vmem:[%s681] sm:$0x1]
        %v3355 = vlaneseq
        %v3356 = vshrl.u32 %v3355, 7
        %v3357 = vsub.s32 0, %v3356
        %v3358 = vrot.slane %v3353, %v3357
        %v3361 = vsel %vm714, %v3347, 0
        %v3364 = vsel %vm714, %v3348, 0
        %3366 = vmatprep.subr.mxu0 0.0
        %3367 = vmatpush1.msra.mxu0 0.0
        %3368 = vmatprep.subr.mxu0 0.0
        %3369 = vmatpush1.msra.mxu0 0.0
        %3370 = vmatprep.subr.mxu0 0.0
        %3371 = vmatpush1.msra.mxu0 0.0
        %3372 = vmatprep.subr.mxu0 0.0
        %3373 = vmatpush1.msra.mxu0 0.0
        %3374 = vmatprep.subr.mxu0 0.0
        %3375 = vmatpush1.msra.mxu0 0.0
        %3376 = vmatprep.subr.mxu0 0.0
        %3377 = vmatpush1.msra.mxu0 0.0
        %3378 = vmatprep.subr.mxu0 0.0
        %3379 = vmatpush1.msra.mxu0 0.0
        %3380 = vmatprep.subr.mxu0 0.0
        %3381 = vmatpush1.msra.mxu0 0.0
        %3382 = vmatprep.subr.mxu0 0.0
        %3383 = vmatpush1.msra.mxu0 0.0
        %3384 = vmatprep.subr.mxu0 0.0
        %3385 = vmatpush1.msra.mxu0 0.0
        %3386 = vmatprep.subr.mxu0 0.0
        %3387 = vmatpush1.msra.mxu0 0.0
        %3388 = vmatprep.subr.mxu0 0.0
        %3389 = vmatpush1.msra.mxu0 0.0
        %3390 = vmatprep.subr.mxu0 0.0
        %3391 = vmatpush1.msra.mxu0 %v3352
        %3392 = vmatprep.subr.mxu0 0.0
        %3393 = vmatpush1.msra.mxu0 %v3351
        %3394 = vmatprep.subr.mxu0 0.0
        %3395 = vmatpush1.msra.mxu0 %v3350
        %3396 = vmatprep.subr.mxu0 0.0
        %3397 = vmatpush1.msra.mxu0 %v3349
        %3398 = vmatprep.subr.mxu0 0.0
        %3399 = vmatpush2.msra.mxu0 0.0
        %3400 = vmatprep.subr.mxu0 0.0
        %3401 = vmatpush2.msra.mxu0 0.0
        %3402 = vmatprep.subr.mxu0 0.0
        %3403 = vmatpush2.msra.mxu0 0.0
        %3404 = vmatprep.subr.mxu0 0.0
        %3405 = vmatpush2.msra.mxu0 0.0
        %3406 = vmatprep.subr.mxu0 0.0
        %3407 = vmatpush2.msra.mxu0 0.0
        %3408 = vmatprep.subr.mxu0 0.0
        %3409 = vmatpush2.msra.mxu0 0.0
        %3410 = vmatprep.subr.mxu0 0.0
        %3411 = vmatpush2.msra.mxu0 0.0
        %3412 = vmatprep.subr.mxu0 0.0
        %3413 = vmatpush2.msra.mxu0 0.0
        %3414 = vmatprep.subr.mxu0 0.0
        %3415 = vmatpush2.msra.mxu0 0.0
        %3416 = vmatprep.subr.mxu0 0.0
        %3417 = vmatpush2.msra.mxu0 0.0
        %3418 = vmatprep.subr.mxu0 0.0
        %3419 = vmatpush2.msra.mxu0 0.0
        %3420 = vmatprep.subr.mxu0 0.0
        %3421 = vmatpush2.msra.mxu0 0.0
        %3422 = vmatprep.subr.mxu0 0.0
        %3423 = vmatpush2.msra.mxu0 0.0
        %3424 = vmatprep.subr.mxu0 0.0
        %3425 = vmatpush2.msra.mxu0 0.0
        %3426 = vmatprep.subr.mxu0 0.0
        %3427 = vmatpush2.msra.mxu0 0.0
        %3428 = vmatprep.subr.mxu0 0.0
        %3429 = vmatpush2.msra.mxu0 0.0
        %3430 = vmatprep.mubr.f32.mxu0 0.0
        %3431 = vmatmul.mubr.f32.gmra.mxu0 %v3361
        %v3432 = vpop.f32.mrf.mxu0
        %v3433 = vadd.f32 %v3358, %v3432
        %v3434 = vpop.f32.mrf.mxu0
        %3435 = vmatprep.mubr.f32.mxu0 0.0
        %3436 = vmatmul.mubr.f32.gmra.mxu0 %v3364
        %v3437 = vpop.f32.mrf.mxu0
        %v3438 = vadd.f32 %v3358, %v3437
        %v3439 = vpop.f32.mrf.mxu0
        %3440 = vdwg.mxu0
        %v3441 = vmax.f32 %v3433, 0.0
        %v3442 = vmax.f32 %v3438, 0.0
        %v3443 = vld [vmem:[%s686] sm:$0xff]
        %v3444 = vld [vmem:[%s686 + $0x8] sm:$0xff]
        %v3445 = vld [vmem:[%s686 + $0x10] sm:$0xff]
        %v3446 = vld [vmem:[%s686 + $0x18] sm:$0xff]
        %v3447 = vld [vmem:[%s686 + $0x20] sm:$0xff]
        %v3448 = vld [vmem:[%s686 + $0x28] sm:$0xff]
        %v3449 = vld [vmem:[%s686 + $0x30] sm:$0xff]
        %v3450 = vld [vmem:[%s686 + $0x38] sm:$0xff]
        %v3451 = vld [vmem:[%s689] sm:$0x1]
        %v3453 = vlaneseq
        %v3454 = vshrl.u32 %v3453, 7
        %v3455 = vsub.s32 0, %v3454
        %v3456 = vrot.slane %v3451, %v3455
        %vm3458 = vcmask 523264
        %v3460 = vsel %vm3458, %v3441, 0
        %v3463 = vsel %vm3458, %v3442, 0
        %3465 = vmatprep.subr.mxu0 0.0
        %3466 = vmatpush1.msra.mxu0 0.0
        %3467 = vmatprep.subr.mxu0 0.0
        %3468 = vmatpush1.msra.mxu0 0.0
        %3469 = vmatprep.subr.mxu0 0.0
        %3470 = vmatpush1.msra.mxu0 0.0
        %3471 = vmatprep.subr.mxu0 0.0
        %3472 = vmatpush1.msra.mxu0 0.0
        %3473 = vmatprep.subr.mxu0 0.0
        %3474 = vmatpush1.msra.mxu0 0.0
        %3475 = vmatprep.subr.mxu0 0.0
        %3476 = vmatpush1.msra.mxu0 0.0
        %3477 = vmatprep.subr.mxu0 0.0
        %3478 = vmatpush1.msra.mxu0 0.0
        %3479 = vmatprep.subr.mxu0 0.0
        %3480 = vmatpush1.msra.mxu0 0.0
        %3481 = vmatprep.subr.mxu0 0.0
        %3482 = vmatpush1.msra.mxu0 %v3450
        %3483 = vmatprep.subr.mxu0 0.0
        %3484 = vmatpush1.msra.mxu0 %v3449
        %3485 = vmatprep.subr.mxu0 0.0
        %3486 = vmatpush1.msra.mxu0 %v3448
        %3487 = vmatprep.subr.mxu0 0.0
        %3488 = vmatpush1.msra.mxu0 %v3447
        %3489 = vmatprep.subr.mxu0 0.0
        %3490 = vmatpush1.msra.mxu0 %v3446
        %3491 = vmatprep.subr.mxu0 0.0
        %3492 = vmatpush1.msra.mxu0 %v3445
        %3493 = vmatprep.subr.mxu0 0.0
        %3494 = vmatpush1.msra.mxu0 %v3444
        %3495 = vmatprep.subr.mxu0 0.0
        %3496 = vmatpush1.msra.mxu0 %v3443
        %3497 = vmatprep.subr.mxu0 0.0
        %3498 = vmatpush2.msra.mxu0 0.0
        %3499 = vmatprep.subr.mxu0 0.0
        %3500 = vmatpush2.msra.mxu0 0.0
        %3501 = vmatprep.subr.mxu0 0.0
        %3502 = vmatpush2.msra.mxu0 0.0
        %3503 = vmatprep.subr.mxu0 0.0
        %3504 = vmatpush2.msra.mxu0 0.0
        %3505 = vmatprep.subr.mxu0 0.0
        %3506 = vmatpush2.msra.mxu0 0.0
        %3507 = vmatprep.subr.mxu0 0.0
        %3508 = vmatpush2.msra.mxu0 0.0
        %3509 = vmatprep.subr.mxu0 0.0
        %3510 = vmatpush2.msra.mxu0 0.0
        %3511 = vmatprep.subr.mxu0 0.0
        %3512 = vmatpush2.msra.mxu0 0.0
        %3513 = vmatprep.subr.mxu0 0.0
        %3514 = vmatpush2.msra.mxu0 0.0
        %3515 = vmatprep.subr.mxu0 0.0
        %3516 = vmatpush2.msra.mxu0 0.0
        %3517 = vmatprep.subr.mxu0 0.0
        %3518 = vmatpush2.msra.mxu0 0.0
        %3519 = vmatprep.subr.mxu0 0.0
        %3520 = vmatpush2.msra.mxu0 0.0
        %3521 = vmatprep.subr.mxu0 0.0
        %3522 = vmatpush2.msra.mxu0 0.0
        %3523 = vmatprep.subr.mxu0 0.0
        %3524 = vmatpush2.msra.mxu0 0.0
        %3525 = vmatprep.subr.mxu0 0.0
        %3526 = vmatpush2.msra.mxu0 0.0
        %3527 = vmatprep.subr.mxu0 0.0
        %3528 = vmatpush2.msra.mxu0 0.0
        %3529 = vmatprep.mubr.f32.mxu0 0.0
        %3530 = vmatmul.mubr.f32.gmra.mxu0 %v3460
        %v3531 = vpop.f32.mrf.mxu0
        %v3532 = vadd.f32 %v3456, %v3531
        %v3533 = vpop.f32.mrf.mxu0
        %3534 = vmatprep.mubr.f32.mxu0 0.0
        %3535 = vmatmul.mubr.f32.gmra.mxu0 %v3463
        %v3536 = vpop.f32.mrf.mxu0
        %v3537 = vadd.f32 %v3456, %v3536
        %v3538 = vpop.f32.mrf.mxu0
        %3539 = vdwg.mxu0
        %v3540 = vadd.f32 %v3532, %v3347
        %v3541 = vadd.f32 %v3537, %v3348
        %v3542 = vsel %vm714, %v3540, 0.0
        %3543 = vadd.xlane.f32.xlu0 %v3542
        %v3544 = vpop.xlane.xlu0 %3543
        %v3545 = vsel %vm714, %v3541, 0.0
        %3546 = vadd.xlane.f32.xlu0 %v3545
        %v3547 = vpop.xlane.xlu0 %3546
        %v3548 = vmul.f32 %v3544, %v3310
        %v3549 = vmul.f32 %v3547, %v3310
        %v3550 = vsub.f32 %v3540, %v3548
        %v3551 = vsub.f32 %v3541, %v3549
        %v3552 = vmul.f32 %v3550, %v3550
        %v3553 = vmul.f32 %v3551, %v3551
        %v3554 = vsel %vm714, %v3552, 0.0
        %3555 = vadd.xlane.f32.xlu0 %v3554
        %v3556 = vpop.xlane.xlu0 %3555
        %v3557 = vsel %vm714, %v3553, 0.0
        %3558 = vadd.xlane.f32.xlu0 %v3557
        %v3559 = vpop.xlane.xlu0 %3558
        %v3560 = vmul.f32 %v3556, %v3310
        %v3561 = vmul.f32 %v3559, %v3310
        %v3562 = vadd.f32 %v3560, 1e-06
        %v3563 = vadd.f32 %v3561, 1e-06
        %v3564 = vrsqrt.pop %v3562
        %v3565 = vrsqrt.pop %v3563
        %v3566 = vmul.f32 %v3550, %v3564
        %v3567 = vmul.f32 %v3551, %v3565
        %v3568 = vld [vmem:[%s692] sm:$0x1]
        %v3570 = vlaneseq
        %v3571 = vshrl.u32 %v3570, 7
        %v3572 = vsub.s32 0, %v3571
        %v3573 = vrot.slane %v3568, %v3572
        %v3575 = vmul.f32 %v3566, %v3573
        %v3576 = vmul.f32 %v3567, %v3573
        %v3577 = vld [vmem:[%s695] sm:$0x1]
        %v3579 = vlaneseq
        %v3580 = vshrl.u32 %v3579, 7
        %v3581 = vsub.s32 0, %v3580
        %v3582 = vrot.slane %v3577, %v3581
        %v3584 = vadd.f32 %v3575, %v3582
        %v3585 = vadd.f32 %v3576, %v3582
        %3586 = vst.msk [vmem:[#allocation2] sm:$0xff] %vm714, %v3584
        %3587 = vst.msk [vmem:[#allocation2 + $0x8] sm:$0xff] %vm714, %v3585
        %p3588 = scmp.eq.s32.totalorder %s31, 1
        // Predicated region
        $region81: #{tpu_custom_call.1} parent=75 // pred_check
          %p3589 = pneg %p3588
        $region82: #{tpu_custom_call.1} parent=75 // pred_check_branch
          %3591 = sbr.rel (%p3589) target = $region84
        $region83: #{tpu_custom_call.1} parent=75 // pred_region
          %3592 = vst.msk [vmem:[#allocation3] sm:$0xff] %vm714, %v3584
          %3593 = vst.msk [vmem:[#allocation3 + $0x8] sm:$0xff] %vm714, %v3585
        $region84: #{tpu_custom_call.1} parent=75 // pred_fallthru
          _
        // Predicated region
        $region85: #{tpu_custom_call.1} parent=75 // pred_check
          %p3594 = pneg %p420
        $region86: #{tpu_custom_call.1} parent=75 // pred_check_branch
          %3596 = sbr.rel (%p3594) target = $region88
        $region87: #{tpu_custom_call.1} parent=75 // pred_region
          %s3597 = smul.u32 2, %s30
          %s3599 = ssub.s32 256, 256
          %3600 = vsyncadd [#allocation4], %s3599
          %s3601 = smul.addr %s3597, 128
          %s3602 = scalar_lea.hbm %s14, %s3601
          %s3603 = sshll.u32 [#allocation3], 4
          %s3604 = int_to_ptr.vmem [resolvable:$true] %s3603
          %3609 = dma.vmem_to_hbm [thread:$0]  %s3604, 256, %s3602, [#allocation4], 128, 128, 8
        $region88: #{tpu_custom_call.1} parent=75 // pred_fallthru
          _
        // Predicated region
        $region89: #{tpu_custom_call.1} parent=75 // pred_check
          %p3610 = pneg %p420
        $region90: #{tpu_custom_call.1} parent=75 // pred_check_branch
          %3612 = sbr.rel (%p3610) target = $region92
        $region91: #{tpu_custom_call.1} parent=75 // pred_region
          %3613 = dma.done [#allocation4], 256
        $region92: #{tpu_custom_call.1} parent=75 // pred_fallthru
          _
      $region76: #{tpu_custom_call.1} parent=5 // pred_fallthru
        _
      %p3614 = scmp.le.s32.totalorder 2, %s21
      // Predicated region
      $region93: #{tpu_custom_call.1} parent=5 // pred_check
        %p3615 = pneg %p3614
      $region94: #{tpu_custom_call.1} parent=5 // pred_check_branch
        %3617 = sbr.rel (%p3615) target = $region96
      $region95: #{tpu_custom_call.1} parent=5 // pred_region
        %s3618 = ssub.s32 %s21, 2
      $region96: #{tpu_custom_call.1} parent=5 // pred_fallthru
        _
    $region6: #{tpu_custom_call.1} parent=1 // loop_footer
      %s25 = sadd.s32 1, %s21
    $region7: #{tpu_custom_call.1} parent=1 // loop_footer_branch
      %20 = sbr.rel target = $region3
    $region8: #{tpu_custom_call.1} parent=1 // loop_exit
      _
    %3619 = vsyncpa [#allocation4], 1
    %s3620 = scalar_lea.sflag [#allocation4], 1
    %3621 = vsyncpa %s3620, 1

</llo_original>
